<compile_context>
chip_gen: v5e
topology: v5e:2x2
jax: 0.10.0
libtpu: 0.0.40
codegen_flags: <defaults>
</compile_context>

<pallas_src>
import functools

import numpy as np
import jax
import jax.numpy as jnp
from jax.experimental import pallas as pl
from jax.experimental.pallas import tpu as pltpu

D_IN = 600
D_H = 512
_SUB = 8          # f32 sublane granularity for the x / output refs


def _round_up(x, m):
    return (x + m - 1) // m * m


def _tensorcores_per_chip():
    """Best-effort TensorCores-per-chip query (v7x -> 2, v5e/v6e -> 1)."""
    try:
        kind = jax.devices()[0].device_kind.lower()
    except Exception:
        return 1
    return 2 if "v7" in kind else 1


def _pick_batch_tile(batch, block_b, num_cores):
    """Choose (batch_tile, n_grid_steps).

    * tile is a multiple of 8 (f32 sublane packing of the x / out refs),
    * grid length is a multiple of num_cores on multi-TC chips (v7x) when the
      batch is large enough to split; single-TC chips are never force-split,
    * tile sized to the batch (not clamped to block_b then rounded up), so
      padded-row waste stays below one sublane group per grid step.
    """
    bp = _round_up(max(batch, 1), _SUB)
    n_steps = pl.cdiv(bp, block_b)
    if num_cores > 1 and bp >= num_cores * 128 and n_steps % num_cores:
        n_steps = pl.cdiv(n_steps, num_cores) * num_cores
    tb = _round_up(pl.cdiv(bp, n_steps), _SUB)
    n_steps = pl.cdiv(bp, tb)
    return tb, n_steps


def _mlp_kernel(x_ref, w1_ref, b1_ref, w2_ref, b2_ref, w3_ref, b3_ref,
                w4_ref, b4_ref, o_ref):
    # Layer 1: raw f32 activation block -> bf16 on the VPU (fused; no wrapper
    # pad/cast pass), matmul against unpadded (600, 512) bf16 w1, f32 acc.
    x = x_ref[...].astype(jnp.bfloat16)
    h = jnp.dot(x, w1_ref[...], preferred_element_type=jnp.float32)
    h = jnp.maximum(h + b1_ref[...], 0.0)
    # Layers 2-4: bf16 operands on the MXU, f32 accumulation, f32 bias+ReLU.
    h = jnp.dot(h.astype(jnp.bfloat16), w2_ref[...],
                preferred_element_type=jnp.float32)
    h = jnp.maximum(h + b2_ref[...], 0.0)
    h = jnp.dot(h.astype(jnp.bfloat16), w3_ref[...],
                preferred_element_type=jnp.float32)
    h = jnp.maximum(h + b3_ref[...], 0.0)
    h = jnp.dot(h.astype(jnp.bfloat16), w4_ref[...],
                preferred_element_type=jnp.float32)
    h = jnp.maximum(h + b4_ref[...], 0.0)
    o_ref[...] = h.astype(o_ref.dtype)


@functools.partial(jax.jit, static_argnames=("block_b", "out_dtype"))
def language_module_forward(x, params, block_b=512, out_dtype=jnp.float32):
    """x: (B, 600) float32.  params: dict from init_params (bf16 weights)."""
    B = x.shape[0]
    assert x.shape[1] == D_IN, x.shape

    num_cores = _tensorcores_per_chip()
    tb, n_steps = _pick_batch_tile(B, block_b, num_cores)

    w1, b1 = params["w1"], params["b1"]
    w2, b2 = params["w2"], params["b2"]
    w3, b3 = params["w3"], params["b3"]
    w4, b4 = params["w4"], params["b4"]

    def const_spec(shape):
        # Constant index_map: block is DMA'd once and stays resident in VMEM
        # across the whole batch grid (no per-step re-DMA).
        return pl.BlockSpec(shape, lambda i: (0, 0))

    weight_elems = D_IN * D_H + 3 * D_H * D_H
    flops = 2 * n_steps * tb * weight_elems
    bytes_accessed = (B * D_IN * 4                       # f32 input
                      + weight_elems * 2                 # bf16 weights
                      + 4 * D_H * 4                      # f32 biases
                      + B * D_H * np.dtype(out_dtype).itemsize)

    out = pl.pallas_call(
        _mlp_kernel,
        out_shape=jax.ShapeDtypeStruct((B, D_H), out_dtype),
        grid_spec=pltpu.PrefetchScalarGridSpec(
            num_scalar_prefetch=0,
            grid=(n_steps,),
            in_specs=[
                pl.BlockSpec((tb, D_IN), lambda i: (i, 0)),      # x tile (f32)
                const_spec((D_IN, D_H)), const_spec((1, D_H)),   # w1, b1
                const_spec((D_H, D_H)), const_spec((1, D_H)),    # w2, b2
                const_spec((D_H, D_H)), const_spec((1, D_H)),    # w3, b3
                const_spec((D_H, D_H)), const_spec((1, D_H)),    # w4, b4
            ],
            out_specs=pl.BlockSpec((tb, D_H), lambda i: (i, 0)),
        ),
        compiler_params=pltpu.CompilerParams(
            dimension_semantics=("parallel",),
            vmem_limit_bytes=48 * 1024 * 1024),
        cost_estimate=pl.CostEstimate(
            flops=flops, transcendentals=0, bytes_accessed=bytes_accessed),
    )(x, w1, b1, w2, b2, w3, b3, w4, b4)

    return out


def init_params(key):
    """Deterministic init matching nn.Linear.  Weights stored pre-transposed
    (in, out) and pre-cast to bf16 once; biases stay f32 (the bias-add happens
    in f32 after the matmul)."""
    ks = jax.random.split(key, 8)

    def linear(kw, kb, fan_in, fan_out):
        bound = 1.0 / jnp.sqrt(fan_in)
        # PyTorch weight is (out, in); we store its transpose (in, out).
        w = jax.random.uniform(kw, (fan_in, fan_out), jnp.float32, -bound, bound)
        b = jax.random.uniform(kb, (1, fan_out), jnp.float32, -bound, bound)
        return w.astype(jnp.bfloat16), b

    w1, b1 = linear(ks[0], ks[1], D_IN, D_H)
    w2, b2 = linear(ks[2], ks[3], D_H, D_H)
    w3, b3 = linear(ks[4], ks[5], D_H, D_H)
    w4, b4 = linear(ks[6], ks[7], D_H, D_H)
    return dict(w1=w1, b1=b1, w2=w2, b2=b2, w3=w3, b3=b3, w4=w4, b4=b4)


def reference_forward(x, p):
    """Pure-JAX reference with the same mixed precision as the kernel."""
    h = x.astype(jnp.bfloat16)
    h = jnp.maximum(
        jnp.dot(h, p["w1"], preferred_element_type=jnp.float32) + p["b1"], 0.0)
    h = jnp.maximum(
        jnp.dot(h.astype(jnp.bfloat16), p["w2"],
                preferred_element_type=jnp.float32) + p["b2"], 0.0)
    h = jnp.maximum(
        jnp.dot(h.astype(jnp.bfloat16), p["w3"],
                preferred_element_type=jnp.float32) + p["b3"], 0.0)
    h = jnp.maximum(
        jnp.dot(h.astype(jnp.bfloat16), p["w4"],
                preferred_element_type=jnp.float32) + p["b4"], 0.0)
    return h


if __name__ == "__main__":
    key = jax.random.PRNGKey(0)
    k_x, k_p, k_x2 = jax.random.split(key, 3)
    params = init_params(k_p)

    # Small batch (clean full tile).
    B = 8
    x = jax.random.normal(k_x, (B, D_IN), dtype=jnp.float32)
    out = jax.block_until_ready(language_module_forward(x, params))
    ref = reference_forward(x, params)
    assert out.shape == (B, D_H), out.shape
    assert bool(jnp.allclose(out, ref, atol=2e-2, rtol=2e-2)), "mismatch (B=8)"

    # Batch that is not a sublane multiple (exercises the masked partial block).
    B2 = 20
    x2 = jax.random.normal(k_x2, (B2, D_IN), dtype=jnp.float32)
    out2 = jax.block_until_ready(language_module_forward(x2, params))
    ref2 = reference_forward(x2, params)
    assert out2.shape == (B2, D_H), out2.shape
    assert bool(jnp.allclose(out2, ref2, atol=2e-2, rtol=2e-2)), "mismatch (B=20)"

    print("KERNEL_OK")
</pallas_src>

<mosaic_0001>
module attributes {stable_mosaic.version = 11 : i64} {
  func.func @_mlp_kernel(%arg0: i32, %arg1: memref<8x600xf32, #tpu.memory_space<vmem>>, %arg2: memref<600x512xbf16, #tpu.memory_space<vmem>>, %arg3: memref<1x512xf32, #tpu.memory_space<vmem>>, %arg4: memref<512x512xbf16, #tpu.memory_space<vmem>>, %arg5: memref<1x512xf32, #tpu.memory_space<vmem>>, %arg6: memref<512x512xbf16, #tpu.memory_space<vmem>>, %arg7: memref<1x512xf32, #tpu.memory_space<vmem>>, %arg8: memref<512x512xbf16, #tpu.memory_space<vmem>>, %arg9: memref<1x512xf32, #tpu.memory_space<vmem>>, %arg10: memref<8x512xf32, #tpu.memory_space<vmem>>) attributes {dimension_semantics = [#tpu.dimension_semantics<parallel>], iteration_bounds = array<i64: 1>, scalar_prefetch = 0 : i64, scratch_operands = 0 : i64, tpu.core_type = #tpu.core_type<tc>, window_params = [{transform_indices = @transform_0, window_bounds = array<i64: 8, 600>}, {pipeline_mode = #tpu.pipeline_mode<synchronous>, transform_indices = @transform_1, window_bounds = array<i64: 600, 512>}, {pipeline_mode = #tpu.pipeline_mode<synchronous>, transform_indices = @transform_2, window_bounds = array<i64: 1, 512>}, {pipeline_mode = #tpu.pipeline_mode<synchronous>, transform_indices = @transform_3, window_bounds = array<i64: 512, 512>}, {pipeline_mode = #tpu.pipeline_mode<synchronous>, transform_indices = @transform_4, window_bounds = array<i64: 1, 512>}, {pipeline_mode = #tpu.pipeline_mode<synchronous>, transform_indices = @transform_5, window_bounds = array<i64: 512, 512>}, {pipeline_mode = #tpu.pipeline_mode<synchronous>, transform_indices = @transform_6, window_bounds = array<i64: 1, 512>}, {pipeline_mode = #tpu.pipeline_mode<synchronous>, transform_indices = @transform_7, window_bounds = array<i64: 512, 512>}, {pipeline_mode = #tpu.pipeline_mode<synchronous>, transform_indices = @transform_8, window_bounds = array<i64: 1, 512>}, {transform_indices = @transform_9, window_bounds = array<i64: 8, 512>}]} {
    %c0 = arith.constant 0 : index
    %c0_0 = arith.constant 0 : index
    %0 = vector.load %arg1[%c0, %c0_0] : memref<8x600xf32, #tpu.memory_space<vmem>>, vector<8x600xf32>
    %1 = arith.truncf %0 : vector<8x600xf32> to vector<8x600xbf16>
    %c0_1 = arith.constant 0 : index
    %c0_2 = arith.constant 0 : index
    %2 = vector.load %arg2[%c0_1, %c0_2] : memref<600x512xbf16, #tpu.memory_space<vmem>>, vector<600x512xbf16>
    %cst = arith.constant dense<0.000000e+00> : vector<8x512xf32>
    %3 = tpu.matmul %1, %2, %cst {dimension_numbers = #tpu.dot_dimension_numbers<[1], [0], [0], [1], [0, 0, 1, 1], [], []>} : vector<8x600xbf16>, vector<600x512xbf16>, vector<8x512xf32> -> vector<8x512xf32>
    %c0_3 = arith.constant 0 : index
    %c0_4 = arith.constant 0 : index
    %4 = vector.load %arg3[%c0_3, %c0_4] : memref<1x512xf32, #tpu.memory_space<vmem>>, vector<1x512xf32>
    %5 = vector.broadcast %4 : vector<1x512xf32> to vector<8x512xf32>
    %6 = arith.addf %3, %5 : vector<8x512xf32>
    %cst_5 = arith.constant 0.000000e+00 : f32
    %7 = vector.broadcast %cst_5 : f32 to vector<8x512xf32>
    %8 = arith.maximumf %6, %7 : vector<8x512xf32>
    %9 = arith.truncf %8 : vector<8x512xf32> to vector<8x512xbf16>
    %c0_6 = arith.constant 0 : index
    %c0_7 = arith.constant 0 : index
    %10 = vector.load %arg4[%c0_6, %c0_7] : memref<512x512xbf16, #tpu.memory_space<vmem>>, vector<512x512xbf16>
    %cst_8 = arith.constant dense<0.000000e+00> : vector<8x512xf32>
    %11 = tpu.matmul %9, %10, %cst_8 {dimension_numbers = #tpu.dot_dimension_numbers<[1], [0], [0], [1], [0, 0, 1, 1], [], []>} : vector<8x512xbf16>, vector<512x512xbf16>, vector<8x512xf32> -> vector<8x512xf32>
    %c0_9 = arith.constant 0 : index
    %c0_10 = arith.constant 0 : index
    %12 = vector.load %arg5[%c0_9, %c0_10] : memref<1x512xf32, #tpu.memory_space<vmem>>, vector<1x512xf32>
    %13 = vector.broadcast %12 : vector<1x512xf32> to vector<8x512xf32>
    %14 = arith.addf %11, %13 : vector<8x512xf32>
    %cst_11 = arith.constant 0.000000e+00 : f32
    %15 = vector.broadcast %cst_11 : f32 to vector<8x512xf32>
    %16 = arith.maximumf %14, %15 : vector<8x512xf32>
    %17 = arith.truncf %16 : vector<8x512xf32> to vector<8x512xbf16>
    %c0_12 = arith.constant 0 : index
    %c0_13 = arith.constant 0 : index
    %18 = vector.load %arg6[%c0_12, %c0_13] : memref<512x512xbf16, #tpu.memory_space<vmem>>, vector<512x512xbf16>
    %cst_14 = arith.constant dense<0.000000e+00> : vector<8x512xf32>
    %19 = tpu.matmul %17, %18, %cst_14 {dimension_numbers = #tpu.dot_dimension_numbers<[1], [0], [0], [1], [0, 0, 1, 1], [], []>} : vector<8x512xbf16>, vector<512x512xbf16>, vector<8x512xf32> -> vector<8x512xf32>
    %c0_15 = arith.constant 0 : index
    %c0_16 = arith.constant 0 : index
    %20 = vector.load %arg7[%c0_15, %c0_16] : memref<1x512xf32, #tpu.memory_space<vmem>>, vector<1x512xf32>
    %21 = vector.broadcast %20 : vector<1x512xf32> to vector<8x512xf32>
    %22 = arith.addf %19, %21 : vector<8x512xf32>
    %cst_17 = arith.constant 0.000000e+00 : f32
    %23 = vector.broadcast %cst_17 : f32 to vector<8x512xf32>
    %24 = arith.maximumf %22, %23 : vector<8x512xf32>
    %25 = arith.truncf %24 : vector<8x512xf32> to vector<8x512xbf16>
    %c0_18 = arith.constant 0 : index
    %c0_19 = arith.constant 0 : index
    %26 = vector.load %arg8[%c0_18, %c0_19] : memref<512x512xbf16, #tpu.memory_space<vmem>>, vector<512x512xbf16>
    %cst_20 = arith.constant dense<0.000000e+00> : vector<8x512xf32>
    %27 = tpu.matmul %25, %26, %cst_20 {dimension_numbers = #tpu.dot_dimension_numbers<[1], [0], [0], [1], [0, 0, 1, 1], [], []>} : vector<8x512xbf16>, vector<512x512xbf16>, vector<8x512xf32> -> vector<8x512xf32>
    %c0_21 = arith.constant 0 : index
    %c0_22 = arith.constant 0 : index
    %28 = vector.load %arg9[%c0_21, %c0_22] : memref<1x512xf32, #tpu.memory_space<vmem>>, vector<1x512xf32>
    %29 = vector.broadcast %28 : vector<1x512xf32> to vector<8x512xf32>
    %30 = arith.addf %27, %29 : vector<8x512xf32>
    %cst_23 = arith.constant 0.000000e+00 : f32
    %31 = vector.broadcast %cst_23 : f32 to vector<8x512xf32>
    %32 = arith.maximumf %30, %31 : vector<8x512xf32>
    %c0_24 = arith.constant 0 : index
    %c0_25 = arith.constant 0 : index
    %33 = vector.load %arg10[%c0_24, %c0_25] : memref<8x512xf32, #tpu.memory_space<vmem>>, vector<8x512xf32>
    tpu.vector_store %arg10[%c0_24, %c0_25], %32 {strides = array<i32>} : memref<8x512xf32, #tpu.memory_space<vmem>>, vector<8x512xf32>,
    return
  }
  func.func @transform_0(%arg0: i32) -> (i32, i32) {
    %c0_i32 = arith.constant 0 : i32
    %c0_i32_0 = arith.constant 0 : i32
    return %arg0, %c0_i32 : i32, i32
  }
  func.func @transform_1(%arg0: i32) -> (i32, i32) {
    %c0_i32 = arith.constant 0 : i32
    %c0_i32_0 = arith.constant 0 : i32
    %c0_i32_1 = arith.constant 0 : i32
    return %c0_i32, %c0_i32_0 : i32, i32
  }
  func.func @transform_2(%arg0: i32) -> (i32, i32) {
    %c0_i32 = arith.constant 0 : i32
    %c0_i32_0 = arith.constant 0 : i32
    %c0_i32_1 = arith.constant 0 : i32
    return %c0_i32, %c0_i32_0 : i32, i32
  }
  func.func @transform_3(%arg0: i32) -> (i32, i32) {
    %c0_i32 = arith.constant 0 : i32
    %c0_i32_0 = arith.constant 0 : i32
    %c0_i32_1 = arith.constant 0 : i32
    return %c0_i32, %c0_i32_0 : i32, i32
  }
  func.func @transform_4(%arg0: i32) -> (i32, i32) {
    %c0_i32 = arith.constant 0 : i32
    %c0_i32_0 = arith.constant 0 : i32
    %c0_i32_1 = arith.constant 0 : i32
    return %c0_i32, %c0_i32_0 : i32, i32
  }
  func.func @transform_5(%arg0: i32) -> (i32, i32) {
    %c0_i32 = arith.constant 0 : i32
    %c0_i32_0 = arith.constant 0 : i32
    %c0_i32_1 = arith.constant 0 : i32
    return %c0_i32, %c0_i32_0 : i32, i32
  }
  func.func @transform_6(%arg0: i32) -> (i32, i32) {
    %c0_i32 = arith.constant 0 : i32
    %c0_i32_0 = arith.constant 0 : i32
    %c0_i32_1 = arith.constant 0 : i32
    return %c0_i32, %c0_i32_0 : i32, i32
  }
  func.func @transform_7(%arg0: i32) -> (i32, i32) {
    %c0_i32 = arith.constant 0 : i32
    %c0_i32_0 = arith.constant 0 : i32
    %c0_i32_1 = arith.constant 0 : i32
    return %c0_i32, %c0_i32_0 : i32, i32
  }
  func.func @transform_8(%arg0: i32) -> (i32, i32) {
    %c0_i32 = arith.constant 0 : i32
    %c0_i32_0 = arith.constant 0 : i32
    %c0_i32_1 = arith.constant 0 : i32
    return %c0_i32, %c0_i32_0 : i32, i32
  }
  func.func @transform_9(%arg0: i32) -> (i32, i32) {
    %c0_i32 = arith.constant 0 : i32
    %c0_i32_0 = arith.constant 0 : i32
    return %arg0, %c0_i32 : i32, i32
  }
}

</mosaic_0001>

<llo_original>
// kernel: language_module_forward.1
$region0: #{language_module_forward.1}
  #allocation0 [shape = 'u32[]', space=smem, size = 0x4, offset = 0x4, fixed_abs, tag = 'smem constant byte address 0x4 - core index']
  #allocation1 [shape = 'u32[72,128]{1,0:T(1,128)}', space=vmem, size = 0x9000, scoped, tag = 'internal scratch']
  %s0 = inlined_call_operand.hbm [shape: f32[8,600], index: 0, kind: input, shape index: {}]
  %s1 = inlined_call_operand.hbm [shape: bf16[600,512], index: 1, kind: input, shape index: {}]
  %s2 = inlined_call_operand.hbm [shape: f32[1,512], index: 2, kind: input, shape index: {}]
  %s3 = inlined_call_operand.hbm [shape: bf16[512,512], index: 3, kind: input, shape index: {}]
  %s4 = inlined_call_operand.hbm [shape: f32[1,512], index: 4, kind: input, shape index: {}]
  %s5 = inlined_call_operand.hbm [shape: bf16[512,512], index: 5, kind: input, shape index: {}]
  %s6 = inlined_call_operand.hbm [shape: f32[1,512], index: 6, kind: input, shape index: {}]
  %s7 = inlined_call_operand.hbm [shape: bf16[512,512], index: 7, kind: input, shape index: {}]
  %s8 = inlined_call_operand.hbm [shape: f32[1,512], index: 8, kind: input, shape index: {}]
  %s9 = inlined_call_operand.hbm [shape: f32[8,512], index: 9, kind: output, shape index: {}]
  %s10 = sld [smem:[#allocation0]]
  $region82: #{language_module_forward.1} parent=0
    _
  %s12 = ssub.s32 1, %s10
  %s13 = scalar_select 0, %s12, %s10
  $region1: #{language_module_forward.1} parent=0
    #allocation2 [shape = 'u8[20480]{0}', space=vmem, size = 0x5000, scoped, tag = 'input window, operand 0, single buffered']
    #allocation3 [shape = 's32[1]{0}', space=sflag, size = 0x4, scoped, tag = 'scoped memory for language_module_forward.1']
    #allocation4 [shape = 's32[1]{0}', space=sflag, size = 0x4, scoped, tag = 'scoped memory for language_module_forward.1']
    #allocation5 [shape = 'u8[614400]{0}', space=vmem, size = 0x96000, scoped, tag = 'input window, operand 1, single buffered']
    #allocation6 [shape = 's32[1]{0}', space=sflag, size = 0x4, scoped, tag = 'scoped memory for language_module_forward.1']
    #allocation7 [shape = 'u8[2048]{0}', space=vmem, size = 0x800, scoped, tag = 'input window, operand 2, single buffered']
    #allocation8 [shape = 'u8[524288]{0}', space=vmem, size = 0x80000, scoped, tag = 'input window, operand 3, single buffered']
    #allocation9 [shape = 's32[1]{0}', space=sflag, size = 0x4, scoped, tag = 'scoped memory for language_module_forward.1']
    #allocation10 [shape = 'u8[2048]{0}', space=vmem, size = 0x800, scoped, tag = 'input window, operand 4, single buffered']
    #allocation11 [shape = 'u8[524288]{0}', space=vmem, size = 0x80000, scoped, tag = 'input window, operand 5, single buffered']
    #allocation12 [shape = 's32[1]{0}', space=sflag, size = 0x4, scoped, tag = 'scoped memory for language_module_forward.1']
    #allocation13 [shape = 'u8[2048]{0}', space=vmem, size = 0x800, scoped, tag = 'input window, operand 6, single buffered']
    #allocation14 [shape = 'u8[524288]{0}', space=vmem, size = 0x80000, scoped, tag = 'input window, operand 7, single buffered']
    #allocation15 [shape = 's32[1]{0}', space=sflag, size = 0x4, scoped, tag = 'scoped memory for language_module_forward.1']
    #allocation16 [shape = 'u8[2048]{0}', space=vmem, size = 0x800, scoped, tag = 'input window, operand 8, single buffered']
    #allocation17 [shape = 'u8[16384]{0}', space=vmem, size = 0x4000, scoped, tag = 'output window, operand 0, single buffered']
    %14 = vsyncpa [#allocation3], 0
    %15 = vsyncpa [#allocation6], 0
    %16 = vsyncpa [#allocation9], 0
    %17 = vsyncpa [#allocation12], 0
    %18 = vsyncpa [#allocation15], 0
    %19 = vsyncpa [#allocation4], 0
    // Predicated region
    $region2: #{language_module_forward.1} parent=1 // pred_check
      _
    $region3: #{language_module_forward.1} parent=1 // pred_check_branch
      %21 = sbr.rel (0) target = $region5
    $region4: #{language_module_forward.1} parent=1 // pred_region
      %23 = vsyncadd [#allocation3], 0
      %s25 = sshll.u32 %s0, 4
      %s26 = int_to_ptr.hbm [resolvable:$true] %s25
      %s27 = sshll.u32 [#allocation2], 4
      %s28 = int_to_ptr.vmem [resolvable:$true] %s27
      %30 = dma.hbm_to_vmem [thread:$0]  %s26, 640, %s28, [#allocation3]
    $region5: #{language_module_forward.1} parent=1 // pred_fallthru
      _
    // Predicated region
    $region6: #{language_module_forward.1} parent=1 // pred_check
      _
    $region7: #{language_module_forward.1} parent=1 // pred_check_branch
      %32 = sbr.rel (0) target = $region9
    $region8: #{language_module_forward.1} parent=1 // pred_region
      %34 = vsyncadd [#allocation6], 0
      %s35 = sshll.u32 %s1, 4
      %s36 = int_to_ptr.hbm [resolvable:$true] %s35
      %s37 = sshll.u32 [#allocation5], 4
      %s38 = int_to_ptr.vmem [resolvable:$true] %s37
      %43 = dma.hbm_to_vmem [thread:$0]  %s36, 19200, %s38, [#allocation6], 256, 256, 16
    $region9: #{language_module_forward.1} parent=1 // pred_fallthru
      _
    // Predicated region
    $region10: #{language_module_forward.1} parent=1 // pred_check
      _
    $region11: #{language_module_forward.1} parent=1 // pred_check_branch
      %45 = sbr.rel (0) target = $region13
    $region12: #{language_module_forward.1} parent=1 // pred_region
      %47 = vsyncadd [#allocation6], 0
      %s49 = sshll.u32 %s2, 4
      %s50 = int_to_ptr.hbm [resolvable:$true] %s49
      %s51 = sshll.u32 [#allocation7], 4
      %s52 = int_to_ptr.vmem [resolvable:$true] %s51
      %54 = dma.hbm_to_vmem [thread:$0]  %s50, 64, %s52, [#allocation6]
    $region13: #{language_module_forward.1} parent=1 // pred_fallthru
      _
    // Predicated region
    $region14: #{language_module_forward.1} parent=1 // pred_check
      _
    $region15: #{language_module_forward.1} parent=1 // pred_check_branch
      %56 = sbr.rel (0) target = $region17
    $region16: #{language_module_forward.1} parent=1 // pred_region
      %58 = vsyncadd [#allocation9], 0
      %s59 = sshll.u32 %s3, 4
      %s60 = int_to_ptr.hbm [resolvable:$true] %s59
      %s61 = sshll.u32 [#allocation8], 4
      %s62 = int_to_ptr.vmem [resolvable:$true] %s61
      %67 = dma.hbm_to_vmem [thread:$0]  %s60, 16384, %s62, [#allocation9], 256, 256, 16
    $region17: #{language_module_forward.1} parent=1 // pred_fallthru
      _
    // Predicated region
    $region18: #{language_module_forward.1} parent=1 // pred_check
      _
    $region19: #{language_module_forward.1} parent=1 // pred_check_branch
      %69 = sbr.rel (0) target = $region21
    $region20: #{language_module_forward.1} parent=1 // pred_region
      %71 = vsyncadd [#allocation9], 0
      %s73 = sshll.u32 %s4, 4
      %s74 = int_to_ptr.hbm [resolvable:$true] %s73
      %s75 = sshll.u32 [#allocation10], 4
      %s76 = int_to_ptr.vmem [resolvable:$true] %s75
      %78 = dma.hbm_to_vmem [thread:$0]  %s74, 64, %s76, [#allocation9]
    $region21: #{language_module_forward.1} parent=1 // pred_fallthru
      _
    // Predicated region
    $region22: #{language_module_forward.1} parent=1 // pred_check
      _
    $region23: #{language_module_forward.1} parent=1 // pred_check_branch
      %80 = sbr.rel (0) target = $region25
    $region24: #{language_module_forward.1} parent=1 // pred_region
      %82 = vsyncadd [#allocation12], 0
      %s83 = sshll.u32 %s5, 4
      %s84 = int_to_ptr.hbm [resolvable:$true] %s83
      %s85 = sshll.u32 [#allocation11], 4
      %s86 = int_to_ptr.vmem [resolvable:$true] %s85
      %91 = dma.hbm_to_vmem [thread:$0]  %s84, 16384, %s86, [#allocation12], 256, 256, 16
    $region25: #{language_module_forward.1} parent=1 // pred_fallthru
      _
    // Predicated region
    $region26: #{language_module_forward.1} parent=1 // pred_check
      _
    $region27: #{language_module_forward.1} parent=1 // pred_check_branch
      %93 = sbr.rel (0) target = $region29
    $region28: #{language_module_forward.1} parent=1 // pred_region
      %95 = vsyncadd [#allocation12], 0
      %s97 = sshll.u32 %s6, 4
      %s98 = int_to_ptr.hbm [resolvable:$true] %s97
      %s99 = sshll.u32 [#allocation13], 4
      %s100 = int_to_ptr.vmem [resolvable:$true] %s99
      %102 = dma.hbm_to_vmem [thread:$0]  %s98, 64, %s100, [#allocation12]
    $region29: #{language_module_forward.1} parent=1 // pred_fallthru
      _
    // Predicated region
    $region30: #{language_module_forward.1} parent=1 // pred_check
      _
    $region31: #{language_module_forward.1} parent=1 // pred_check_branch
      %104 = sbr.rel (0) target = $region33
    $region32: #{language_module_forward.1} parent=1 // pred_region
      %106 = vsyncadd [#allocation15], 0
      %s107 = sshll.u32 %s7, 4
      %s108 = int_to_ptr.hbm [resolvable:$true] %s107
      %s109 = sshll.u32 [#allocation14], 4
      %s110 = int_to_ptr.vmem [resolvable:$true] %s109
      %115 = dma.hbm_to_vmem [thread:$0]  %s108, 16384, %s110, [#allocation15], 256, 256, 16
    $region33: #{language_module_forward.1} parent=1 // pred_fallthru
      _
    // Predicated region
    $region34: #{language_module_forward.1} parent=1 // pred_check
      _
    $region35: #{language_module_forward.1} parent=1 // pred_check_branch
      %117 = sbr.rel (0) target = $region37
    $region36: #{language_module_forward.1} parent=1 // pred_region
      %119 = vsyncadd [#allocation15], 0
      %s121 = sshll.u32 %s8, 4
      %s122 = int_to_ptr.hbm [resolvable:$true] %s121
      %s123 = sshll.u32 [#allocation16], 4
      %s124 = int_to_ptr.vmem [resolvable:$true] %s123
      %126 = dma.hbm_to_vmem [thread:$0]  %s122, 64, %s124, [#allocation15]
    $region37: #{language_module_forward.1} parent=1 // pred_fallthru
      _
    // Predicated region
    $region38: #{language_module_forward.1} parent=1 // pred_check
      _
    $region39: #{language_module_forward.1} parent=1 // pred_check_branch
      %128 = sbr.rel (0) target = $region41
    $region40: #{language_module_forward.1} parent=1 // pred_region
      %130 = dma.done [#allocation3], 640
    $region41: #{language_module_forward.1} parent=1 // pred_fallthru
      _
    // Predicated region
    $region42: #{language_module_forward.1} parent=1 // pred_check
      _
    $region43: #{language_module_forward.1} parent=1 // pred_check_branch
      %132 = sbr.rel (0) target = $region45
    $region44: #{language_module_forward.1} parent=1 // pred_region
      %134 = dma.done [#allocation6], 19200
    $region45: #{language_module_forward.1} parent=1 // pred_fallthru
      _
    // Predicated region
    $region46: #{language_module_forward.1} parent=1 // pred_check
      _
    $region47: #{language_module_forward.1} parent=1 // pred_check_branch
      %136 = sbr.rel (0) target = $region49
    $region48: #{language_module_forward.1} parent=1 // pred_region
      %138 = dma.done [#allocation6], 64
    $region49: #{language_module_forward.1} parent=1 // pred_fallthru
      _
    // Predicated region
    $region50: #{language_module_forward.1} parent=1 // pred_check
      _
    $region51: #{language_module_forward.1} parent=1 // pred_check_branch
      %140 = sbr.rel (0) target = $region53
    $region52: #{language_module_forward.1} parent=1 // pred_region
      %142 = dma.done [#allocation9], 16384
    $region53: #{language_module_forward.1} parent=1 // pred_fallthru
      _
    // Predicated region
    $region54: #{language_module_forward.1} parent=1 // pred_check
      _
    $region55: #{language_module_forward.1} parent=1 // pred_check_branch
      %144 = sbr.rel (0) target = $region57
    $region56: #{language_module_forward.1} parent=1 // pred_region
      %146 = dma.done [#allocation9], 64
    $region57: #{language_module_forward.1} parent=1 // pred_fallthru
      _
    // Predicated region
    $region58: #{language_module_forward.1} parent=1 // pred_check
      _
    $region59: #{language_module_forward.1} parent=1 // pred_check_branch
      %148 = sbr.rel (0) target = $region61
    $region60: #{language_module_forward.1} parent=1 // pred_region
      %150 = dma.done [#allocation12], 16384
    $region61: #{language_module_forward.1} parent=1 // pred_fallthru
      _
    // Predicated region
    $region62: #{language_module_forward.1} parent=1 // pred_check
      _
    $region63: #{language_module_forward.1} parent=1 // pred_check_branch
      %152 = sbr.rel (0) target = $region65
    $region64: #{language_module_forward.1} parent=1 // pred_region
      %154 = dma.done [#allocation12], 64
    $region65: #{language_module_forward.1} parent=1 // pred_fallthru
      _
    // Predicated region
    $region66: #{language_module_forward.1} parent=1 // pred_check
      _
    $region67: #{language_module_forward.1} parent=1 // pred_check_branch
      %156 = sbr.rel (0) target = $region69
    $region68: #{language_module_forward.1} parent=1 // pred_region
      %158 = dma.done [#allocation15], 16384
    $region69: #{language_module_forward.1} parent=1 // pred_fallthru
      _
    // Predicated region
    $region70: #{language_module_forward.1} parent=1 // pred_check
      _
    $region71: #{language_module_forward.1} parent=1 // pred_check_branch
      %160 = sbr.rel (0) target = $region73
    $region72: #{language_module_forward.1} parent=1 // pred_region
      %162 = dma.done [#allocation15], 64
    $region73: #{language_module_forward.1} parent=1 // pred_fallthru
      _
    %v164 = vld [vmem:[#allocation2] sm:$0xff]
    %v165 = vld [vmem:[#allocation2 + $0x8] sm:$0xff]
    %v166 = vld [vmem:[#allocation2 + $0x10] sm:$0xff]
    %v167 = vld [vmem:[#allocation2 + $0x18] sm:$0xff]
    %v168 = vld [vmem:[#allocation2 + $0x20] sm:$0xff]
    %v169 = vpack.c.bf16 %v164, %v164
    %v170 = vpack.c.bf16 %v165, %v165
    %v171 = vpack.c.bf16 %v166, %v166
    %v172 = vpack.c.bf16 %v167, %v167
    %v173 = vpack.c.bf16 %v168, %v168
    %v174 = vld [vmem:[#allocation5] sm:$0xff]
    %v175 = vld [vmem:[#allocation5 + $0x8] sm:$0xff]
    %v176 = vld [vmem:[#allocation5 + $0x10] sm:$0xff]
    %v177 = vld [vmem:[#allocation5 + $0x18] sm:$0xff]
    %v178 = vld [vmem:[#allocation5 + $0x20] sm:$0xff]
    %v179 = vld [vmem:[#allocation5 + $0x28] sm:$0xff]
    %v180 = vld [vmem:[#allocation5 + $0x30] sm:$0xff]
    %v181 = vld [vmem:[#allocation5 + $0x38] sm:$0xff]
    %v182 = vld [vmem:[#allocation5 + $0x40] sm:$0xff]
    %v183 = vld [vmem:[#allocation5 + $0x48] sm:$0xff]
    %v184 = vld [vmem:[#allocation5 + $0x50] sm:$0xff]
    %v185 = vld [vmem:[#allocation5 + $0x58] sm:$0xff]
    %v186 = vld [vmem:[#allocation5 + $0x60] sm:$0xff]
    %v187 = vld [vmem:[#allocation5 + $0x68] sm:$0xff]
    %v188 = vld [vmem:[#allocation5 + $0x70] sm:$0xff]
    %v189 = vld [vmem:[#allocation5 + $0x78] sm:$0xff]
    %v190 = vld [vmem:[#allocation5 + $0x80] sm:$0xff]
    %v191 = vld [vmem:[#allocation5 + $0x88] sm:$0xff]
    %v192 = vld [vmem:[#allocation5 + $0x90] sm:$0xff]
    %v193 = vld [vmem:[#allocation5 + $0x98] sm:$0xff]
    %v194 = vld [vmem:[#allocation5 + $0xa0] sm:$0xff]
    %v195 = vld [vmem:[#allocation5 + $0xa8] sm:$0xff]
    %v196 = vld [vmem:[#allocation5 + $0xb0] sm:$0xff]
    %v197 = vld [vmem:[#allocation5 + $0xb8] sm:$0xff]
    %v198 = vld [vmem:[#allocation5 + $0xc0] sm:$0xff]
    %v199 = vld [vmem:[#allocation5 + $0xc8] sm:$0xff]
    %v200 = vld [vmem:[#allocation5 + $0xd0] sm:$0xff]
    %v201 = vld [vmem:[#allocation5 + $0xd8] sm:$0xff]
    %v202 = vld [vmem:[#allocation5 + $0xe0] sm:$0xff]
    %v203 = vld [vmem:[#allocation5 + $0xe8] sm:$0xff]
    %v204 = vld [vmem:[#allocation5 + $0xf0] sm:$0xff]
    %v205 = vld [vmem:[#allocation5 + $0xf8] sm:$0xff]
    %v206 = vld [vmem:[#allocation5 + $0x100] sm:$0xff]
    %v207 = vld [vmem:[#allocation5 + $0x108] sm:$0xff]
    %v208 = vld [vmem:[#allocation5 + $0x110] sm:$0xff]
    %v209 = vld [vmem:[#allocation5 + $0x118] sm:$0xff]
    %v210 = vld [vmem:[#allocation5 + $0x120] sm:$0xff]
    %v211 = vld [vmem:[#allocation5 + $0x128] sm:$0xff]
    %v212 = vld [vmem:[#allocation5 + $0x130] sm:$0xff]
    %v213 = vld [vmem:[#allocation5 + $0x138] sm:$0xff]
    %v214 = vld [vmem:[#allocation5 + $0x140] sm:$0xff]
    %v215 = vld [vmem:[#allocation5 + $0x148] sm:$0xff]
    %v216 = vld [vmem:[#allocation5 + $0x150] sm:$0xff]
    %v217 = vld [vmem:[#allocation5 + $0x158] sm:$0xff]
    %v218 = vld [vmem:[#allocation5 + $0x160] sm:$0xff]
    %v219 = vld [vmem:[#allocation5 + $0x168] sm:$0xff]
    %v220 = vld [vmem:[#allocation5 + $0x170] sm:$0xff]
    %v221 = vld [vmem:[#allocation5 + $0x178] sm:$0xff]
    %v222 = vld [vmem:[#allocation5 + $0x180] sm:$0xff]
    %v223 = vld [vmem:[#allocation5 + $0x188] sm:$0xff]
    %v224 = vld [vmem:[#allocation5 + $0x190] sm:$0xff]
    %v225 = vld [vmem:[#allocation5 + $0x198] sm:$0xff]
    %v226 = vld [vmem:[#allocation5 + $0x1a0] sm:$0xff]
    %v227 = vld [vmem:[#allocation5 + $0x1a8] sm:$0xff]
    %v228 = vld [vmem:[#allocation5 + $0x1b0] sm:$0xff]
    %v229 = vld [vmem:[#allocation5 + $0x1b8] sm:$0xff]
    %v230 = vld [vmem:[#allocation5 + $0x1c0] sm:$0xff]
    %v231 = vld [vmem:[#allocation5 + $0x1c8] sm:$0xff]
    %v232 = vld [vmem:[#allocation5 + $0x1d0] sm:$0xff]
    %v233 = vld [vmem:[#allocation5 + $0x1d8] sm:$0xff]
    %v234 = vld [vmem:[#allocation5 + $0x1e0] sm:$0xff]
    %v235 = vld [vmem:[#allocation5 + $0x1e8] sm:$0xff]
    %v236 = vld [vmem:[#allocation5 + $0x1f0] sm:$0xff]
    %v237 = vld [vmem:[#allocation5 + $0x1f8] sm:$0xff]
    %v238 = vld [vmem:[#allocation5 + $0x200] sm:$0xff]
    %v239 = vld [vmem:[#allocation5 + $0x208] sm:$0xff]
    %v240 = vld [vmem:[#allocation5 + $0x210] sm:$0xff]
    %v241 = vld [vmem:[#allocation5 + $0x218] sm:$0xff]
    %v242 = vld [vmem:[#allocation5 + $0x220] sm:$0xff]
    %v243 = vld [vmem:[#allocation5 + $0x228] sm:$0xff]
    %v244 = vld [vmem:[#allocation5 + $0x230] sm:$0xff]
    %v245 = vld [vmem:[#allocation5 + $0x238] sm:$0xff]
    %v246 = vld [vmem:[#allocation5 + $0x240] sm:$0xff]
    %v247 = vld [vmem:[#allocation5 + $0x248] sm:$0xff]
    %v248 = vld [vmem:[#allocation5 + $0x250] sm:$0xff]
    %v249 = vld [vmem:[#allocation5 + $0x258] sm:$0xff]
    %v250 = vld [vmem:[#allocation5 + $0x260] sm:$0xff]
    %v251 = vld [vmem:[#allocation5 + $0x268] sm:$0xff]
    %v252 = vld [vmem:[#allocation5 + $0x270] sm:$0xff]
    %v253 = vld [vmem:[#allocation5 + $0x278] sm:$0xff]
    %v254 = vld [vmem:[#allocation5 + $0x280] sm:$0xff]
    %v255 = vld [vmem:[#allocation5 + $0x288] sm:$0xff]
    %v256 = vld [vmem:[#allocation5 + $0x290] sm:$0xff]
    %v257 = vld [vmem:[#allocation5 + $0x298] sm:$0xff]
    %v258 = vld [vmem:[#allocation5 + $0x2a0] sm:$0xff]
    %v259 = vld [vmem:[#allocation5 + $0x2a8] sm:$0xff]
    %v260 = vld [vmem:[#allocation5 + $0x2b0] sm:$0xff]
    %v261 = vld [vmem:[#allocation5 + $0x2b8] sm:$0xff]
    %v262 = vld [vmem:[#allocation5 + $0x2c0] sm:$0xff]
    %v263 = vld [vmem:[#allocation5 + $0x2c8] sm:$0xff]
    %v264 = vld [vmem:[#allocation5 + $0x2d0] sm:$0xff]
    %v265 = vld [vmem:[#allocation5 + $0x2d8] sm:$0xff]
    %v266 = vld [vmem:[#allocation5 + $0x2e0] sm:$0xff]
    %v267 = vld [vmem:[#allocation5 + $0x2e8] sm:$0xff]
    %v268 = vld [vmem:[#allocation5 + $0x2f0] sm:$0xff]
    %v269 = vld [vmem:[#allocation5 + $0x2f8] sm:$0xff]
    %v270 = vld [vmem:[#allocation5 + $0x300] sm:$0xff]
    %v271 = vld [vmem:[#allocation5 + $0x308] sm:$0xff]
    %v272 = vld [vmem:[#allocation5 + $0x310] sm:$0xff]
    %v273 = vld [vmem:[#allocation5 + $0x318] sm:$0xff]
    %v274 = vld [vmem:[#allocation5 + $0x320] sm:$0xff]
    %v275 = vld [vmem:[#allocation5 + $0x328] sm:$0xff]
    %v276 = vld [vmem:[#allocation5 + $0x330] sm:$0xff]
    %v277 = vld [vmem:[#allocation5 + $0x338] sm:$0xff]
    %v278 = vld [vmem:[#allocation5 + $0x340] sm:$0xff]
    %v279 = vld [vmem:[#allocation5 + $0x348] sm:$0xff]
    %v280 = vld [vmem:[#allocation5 + $0x350] sm:$0xff]
    %v281 = vld [vmem:[#allocation5 + $0x358] sm:$0xff]
    %v282 = vld [vmem:[#allocation5 + $0x360] sm:$0xff]
    %v283 = vld [vmem:[#allocation5 + $0x368] sm:$0xff]
    %v284 = vld [vmem:[#allocation5 + $0x370] sm:$0xff]
    %v285 = vld [vmem:[#allocation5 + $0x378] sm:$0xff]
    %v286 = vld [vmem:[#allocation5 + $0x380] sm:$0xff]
    %v287 = vld [vmem:[#allocation5 + $0x388] sm:$0xff]
    %v288 = vld [vmem:[#allocation5 + $0x390] sm:$0xff]
    %v289 = vld [vmem:[#allocation5 + $0x398] sm:$0xff]
    %v290 = vld [vmem:[#allocation5 + $0x3a0] sm:$0xff]
    %v291 = vld [vmem:[#allocation5 + $0x3a8] sm:$0xff]
    %v292 = vld [vmem:[#allocation5 + $0x3b0] sm:$0xff]
    %v293 = vld [vmem:[#allocation5 + $0x3b8] sm:$0xff]
    %v294 = vld [vmem:[#allocation5 + $0x3c0] sm:$0xff]
    %v295 = vld [vmem:[#allocation5 + $0x3c8] sm:$0xff]
    %v296 = vld [vmem:[#allocation5 + $0x3d0] sm:$0xff]
    %v297 = vld [vmem:[#allocation5 + $0x3d8] sm:$0xff]
    %v298 = vld [vmem:[#allocation5 + $0x3e0] sm:$0xff]
    %v299 = vld [vmem:[#allocation5 + $0x3e8] sm:$0xff]
    %v300 = vld [vmem:[#allocation5 + $0x3f0] sm:$0xff]
    %v301 = vld [vmem:[#allocation5 + $0x3f8] sm:$0xff]
    %v302 = vld [vmem:[#allocation5 + $0x400] sm:$0xff]
    %v303 = vld [vmem:[#allocation5 + $0x408] sm:$0xff]
    %v304 = vld [vmem:[#allocation5 + $0x410] sm:$0xff]
    %v305 = vld [vmem:[#allocation5 + $0x418] sm:$0xff]
    %v306 = vld [vmem:[#allocation5 + $0x420] sm:$0xff]
    %v307 = vld [vmem:[#allocation5 + $0x428] sm:$0xff]
    %v308 = vld [vmem:[#allocation5 + $0x430] sm:$0xff]
    %v309 = vld [vmem:[#allocation5 + $0x438] sm:$0xff]
    %v310 = vld [vmem:[#allocation5 + $0x440] sm:$0xff]
    %v311 = vld [vmem:[#allocation5 + $0x448] sm:$0xff]
    %v312 = vld [vmem:[#allocation5 + $0x450] sm:$0xff]
    %v313 = vld [vmem:[#allocation5 + $0x458] sm:$0xff]
    %v314 = vld [vmem:[#allocation5 + $0x460] sm:$0xff]
    %v315 = vld [vmem:[#allocation5 + $0x468] sm:$0xff]
    %v316 = vld [vmem:[#allocation5 + $0x470] sm:$0xff]
    %v317 = vld [vmem:[#allocation5 + $0x478] sm:$0xff]
    %v318 = vld [vmem:[#allocation5 + $0x480] sm:$0xff]
    %v319 = vld [vmem:[#allocation5 + $0x488] sm:$0xff]
    %v320 = vld [vmem:[#allocation5 + $0x490] sm:$0xff]
    %v321 = vld [vmem:[#allocation5 + $0x498] sm:$0xff]
    %v322 = vld [vmem:[#allocation5 + $0x4a0] sm:$0xff]
    %v323 = vld [vmem:[#allocation5 + $0x4a8] sm:$0xff]
    %v324 = vld [vmem:[#allocation7] sm:$0xf]
    %v326 = vperm.slane %v324, 0
    %v327 = vperm.slane %v324, 1
    %v328 = vperm.slane %v324, 2
    %v329 = vperm.slane %v324, 3
    %v484 = vunpack.c.l.b16 %v174
    %v485 = vunpack.c.h.b16 %v174
    %v486 = vunpack.c.l.b16 %v175
    %v487 = vunpack.c.h.b16 %v175
    %v488 = vunpack.c.l.b16 %v176
    %v489 = vunpack.c.h.b16 %v176
    %v490 = vunpack.c.l.b16 %v177
    %v491 = vunpack.c.h.b16 %v177
    %v492 = vunpack.c.l.b16 %v178
    %v493 = vunpack.c.h.b16 %v178
    %v494 = vunpack.c.l.b16 %v179
    %v495 = vunpack.c.h.b16 %v179
    %v496 = vunpack.c.l.b16 %v180
    %v497 = vunpack.c.h.b16 %v180
    %v498 = vunpack.c.l.b16 %v181
    %v499 = vunpack.c.h.b16 %v181
    %v500 = vunpack.c.l.b16 %v182
    %v501 = vunpack.c.h.b16 %v182
    %v502 = vunpack.c.l.b16 %v183
    %v503 = vunpack.c.h.b16 %v183
    %v504 = vunpack.c.l.b16 %v184
    %v505 = vunpack.c.h.b16 %v184
    %v506 = vunpack.c.l.b16 %v185
    %v507 = vunpack.c.h.b16 %v185
    %v508 = vunpack.c.l.b16 %v186
    %v509 = vunpack.c.h.b16 %v186
    %v510 = vunpack.c.l.b16 %v187
    %v511 = vunpack.c.h.b16 %v187
    %v512 = vunpack.c.l.b16 %v188
    %v513 = vunpack.c.h.b16 %v188
    %v514 = vunpack.c.l.b16 %v189
    %v515 = vunpack.c.h.b16 %v189
    %v516 = vunpack.c.l.b16 %v190
    %v517 = vunpack.c.h.b16 %v190
    %v518 = vunpack.c.l.b16 %v191
    %v519 = vunpack.c.h.b16 %v191
    %v520 = vunpack.c.l.b16 %v192
    %v521 = vunpack.c.h.b16 %v192
    %v522 = vunpack.c.l.b16 %v193
    %v523 = vunpack.c.h.b16 %v193
    %v524 = vunpack.c.l.b16 %v194
    %v525 = vunpack.c.h.b16 %v194
    %v526 = vunpack.c.l.b16 %v195
    %v527 = vunpack.c.h.b16 %v195
    %v528 = vunpack.c.l.b16 %v196
    %v529 = vunpack.c.h.b16 %v196
    %v530 = vunpack.c.l.b16 %v197
    %v531 = vunpack.c.h.b16 %v197
    %v532 = vunpack.c.l.b16 %v198
    %v533 = vunpack.c.h.b16 %v198
    %v534 = vunpack.c.l.b16 %v199
    %v535 = vunpack.c.h.b16 %v199
    %v536 = vunpack.c.l.b16 %v200
    %v537 = vunpack.c.h.b16 %v200
    %v538 = vunpack.c.l.b16 %v201
    %v539 = vunpack.c.h.b16 %v201
    %v540 = vunpack.c.l.b16 %v202
    %v541 = vunpack.c.h.b16 %v202
    %v542 = vunpack.c.l.b16 %v203
    %v543 = vunpack.c.h.b16 %v203
    %v544 = vunpack.c.l.b16 %v204
    %v545 = vunpack.c.h.b16 %v204
    %v546 = vunpack.c.l.b16 %v205
    %v547 = vunpack.c.h.b16 %v205
    %v548 = vunpack.c.l.b16 %v206
    %v549 = vunpack.c.h.b16 %v206
    %v550 = vunpack.c.l.b16 %v207
    %v551 = vunpack.c.h.b16 %v207
    %v552 = vunpack.c.l.b16 %v208
    %v553 = vunpack.c.h.b16 %v208
    %v554 = vunpack.c.l.b16 %v209
    %v555 = vunpack.c.h.b16 %v209
    %v556 = vunpack.c.l.b16 %v210
    %v557 = vunpack.c.h.b16 %v210
    %v558 = vunpack.c.l.b16 %v211
    %v559 = vunpack.c.h.b16 %v211
    %v560 = vunpack.c.l.b16 %v212
    %v561 = vunpack.c.h.b16 %v212
    %v562 = vunpack.c.l.b16 %v213
    %v563 = vunpack.c.h.b16 %v213
    %v564 = vunpack.c.l.b16 %v214
    %v565 = vunpack.c.h.b16 %v214
    %v566 = vunpack.c.l.b16 %v215
    %v567 = vunpack.c.h.b16 %v215
    %v568 = vunpack.c.l.b16 %v216
    %v569 = vunpack.c.h.b16 %v216
    %v570 = vunpack.c.l.b16 %v217
    %v571 = vunpack.c.h.b16 %v217
    %v572 = vunpack.c.l.b16 %v218
    %v573 = vunpack.c.h.b16 %v218
    %v574 = vunpack.c.l.b16 %v219
    %v575 = vunpack.c.h.b16 %v219
    %v576 = vunpack.c.l.b16 %v220
    %v577 = vunpack.c.h.b16 %v220
    %v578 = vunpack.c.l.b16 %v221
    %v579 = vunpack.c.h.b16 %v221
    %v580 = vunpack.c.l.b16 %v222
    %v581 = vunpack.c.h.b16 %v222
    %v582 = vunpack.c.l.b16 %v223
    %v583 = vunpack.c.h.b16 %v223
    %v584 = vunpack.c.l.b16 %v224
    %v585 = vunpack.c.h.b16 %v224
    %v586 = vunpack.c.l.b16 %v225
    %v587 = vunpack.c.h.b16 %v225
    %v588 = vunpack.c.l.b16 %v226
    %v589 = vunpack.c.h.b16 %v226
    %v590 = vunpack.c.l.b16 %v227
    %v591 = vunpack.c.h.b16 %v227
    %v592 = vunpack.c.l.b16 %v228
    %v593 = vunpack.c.h.b16 %v228
    %v594 = vunpack.c.l.b16 %v229
    %v595 = vunpack.c.h.b16 %v229
    %v596 = vunpack.c.l.b16 %v230
    %v597 = vunpack.c.h.b16 %v230
    %v598 = vunpack.c.l.b16 %v231
    %v599 = vunpack.c.h.b16 %v231
    %v600 = vunpack.c.l.b16 %v232
    %v601 = vunpack.c.h.b16 %v232
    %v602 = vunpack.c.l.b16 %v233
    %v603 = vunpack.c.h.b16 %v233
    %v604 = vunpack.c.l.b16 %v234
    %v605 = vunpack.c.h.b16 %v234
    %v606 = vunpack.c.l.b16 %v235
    %v607 = vunpack.c.h.b16 %v235
    %v608 = vunpack.c.l.b16 %v236
    %v609 = vunpack.c.h.b16 %v236
    %v610 = vunpack.c.l.b16 %v237
    %v611 = vunpack.c.h.b16 %v237
    %v612 = vunpack.c.l.b16 %v238
    %v613 = vunpack.c.h.b16 %v238
    %v614 = vunpack.c.l.b16 %v239
    %v615 = vunpack.c.h.b16 %v239
    %v616 = vunpack.c.l.b16 %v240
    %v617 = vunpack.c.h.b16 %v240
    %v618 = vunpack.c.l.b16 %v241
    %v619 = vunpack.c.h.b16 %v241
    %v620 = vunpack.c.l.b16 %v242
    %v621 = vunpack.c.h.b16 %v242
    %v622 = vunpack.c.l.b16 %v243
    %v623 = vunpack.c.h.b16 %v243
    %v624 = vunpack.c.l.b16 %v244
    %v625 = vunpack.c.h.b16 %v244
    %v626 = vunpack.c.l.b16 %v245
    %v627 = vunpack.c.h.b16 %v245
    %v628 = vunpack.c.l.b16 %v246
    %v629 = vunpack.c.h.b16 %v246
    %v630 = vunpack.c.l.b16 %v247
    %v631 = vunpack.c.h.b16 %v247
    %v632 = vunpack.c.l.b16 %v248
    %v633 = vunpack.c.h.b16 %v248
    %v634 = vunpack.c.l.b16 %v249
    %v635 = vunpack.c.h.b16 %v249
    %v636 = vunpack.c.l.b16 %v250
    %v637 = vunpack.c.h.b16 %v250
    %v638 = vunpack.c.l.b16 %v251
    %v639 = vunpack.c.h.b16 %v251
    %v640 = vunpack.c.l.b16 %v252
    %v641 = vunpack.c.h.b16 %v252
    %v642 = vunpack.c.l.b16 %v253
    %v643 = vunpack.c.h.b16 %v253
    %v644 = vunpack.c.l.b16 %v254
    %v645 = vunpack.c.h.b16 %v254
    %v646 = vunpack.c.l.b16 %v255
    %v647 = vunpack.c.h.b16 %v255
    %v648 = vunpack.c.l.b16 %v256
    %v649 = vunpack.c.h.b16 %v256
    %v650 = vunpack.c.l.b16 %v257
    %v651 = vunpack.c.h.b16 %v257
    %v652 = vunpack.c.l.b16 %v258
    %v653 = vunpack.c.h.b16 %v258
    %v654 = vunpack.c.l.b16 %v259
    %v655 = vunpack.c.h.b16 %v259
    %v656 = vunpack.c.l.b16 %v260
    %v657 = vunpack.c.h.b16 %v260
    %v658 = vunpack.c.l.b16 %v261
    %v659 = vunpack.c.h.b16 %v261
    %v660 = vunpack.c.l.b16 %v262
    %v661 = vunpack.c.h.b16 %v262
    %v662 = vunpack.c.l.b16 %v263
    %v663 = vunpack.c.h.b16 %v263
    %v664 = vunpack.c.l.b16 %v264
    %v665 = vunpack.c.h.b16 %v264
    %v666 = vunpack.c.l.b16 %v265
    %v667 = vunpack.c.h.b16 %v265
    %v668 = vunpack.c.l.b16 %v266
    %v669 = vunpack.c.h.b16 %v266
    %v670 = vunpack.c.l.b16 %v267
    %v671 = vunpack.c.h.b16 %v267
    %v672 = vunpack.c.l.b16 %v268
    %v673 = vunpack.c.h.b16 %v268
    %v674 = vunpack.c.l.b16 %v269
    %v675 = vunpack.c.h.b16 %v269
    %v676 = vunpack.c.l.b16 %v270
    %v677 = vunpack.c.h.b16 %v270
    %v678 = vunpack.c.l.b16 %v271
    %v679 = vunpack.c.h.b16 %v271
    %v680 = vunpack.c.l.b16 %v272
    %v681 = vunpack.c.h.b16 %v272
    %v682 = vunpack.c.l.b16 %v273
    %v683 = vunpack.c.h.b16 %v273
    %v684 = vunpack.c.l.b16 %v274
    %v685 = vunpack.c.h.b16 %v274
    %v686 = vunpack.c.l.b16 %v275
    %v687 = vunpack.c.h.b16 %v275
    %v688 = vunpack.c.l.b16 %v276
    %v689 = vunpack.c.h.b16 %v276
    %v690 = vunpack.c.l.b16 %v277
    %v691 = vunpack.c.h.b16 %v277
    %v692 = vunpack.c.l.b16 %v278
    %v693 = vunpack.c.h.b16 %v278
    %v694 = vunpack.c.l.b16 %v279
    %v695 = vunpack.c.h.b16 %v279
    %v696 = vunpack.c.l.b16 %v280
    %v697 = vunpack.c.h.b16 %v280
    %v698 = vunpack.c.l.b16 %v281
    %v699 = vunpack.c.h.b16 %v281
    %v700 = vunpack.c.l.b16 %v282
    %v701 = vunpack.c.h.b16 %v282
    %v702 = vunpack.c.l.b16 %v283
    %v703 = vunpack.c.h.b16 %v283
    %v704 = vunpack.c.l.b16 %v284
    %v705 = vunpack.c.h.b16 %v284
    %v706 = vunpack.c.l.b16 %v285
    %v707 = vunpack.c.h.b16 %v285
    %v708 = vunpack.c.l.b16 %v286
    %v709 = vunpack.c.h.b16 %v286
    %v710 = vunpack.c.l.b16 %v287
    %v711 = vunpack.c.h.b16 %v287
    %v712 = vunpack.c.l.b16 %v288
    %v713 = vunpack.c.h.b16 %v288
    %v714 = vunpack.c.l.b16 %v289
    %v715 = vunpack.c.h.b16 %v289
    %v716 = vunpack.c.l.b16 %v290
    %v717 = vunpack.c.h.b16 %v290
    %v718 = vunpack.c.l.b16 %v291
    %v719 = vunpack.c.h.b16 %v291
    %v720 = vunpack.c.l.b16 %v292
    %v721 = vunpack.c.h.b16 %v292
    %v722 = vunpack.c.l.b16 %v293
    %v723 = vunpack.c.h.b16 %v293
    %v724 = vunpack.c.l.b16 %v294
    %v725 = vunpack.c.h.b16 %v294
    %v726 = vunpack.c.l.b16 %v295
    %v727 = vunpack.c.h.b16 %v295
    %v728 = vunpack.c.l.b16 %v296
    %v729 = vunpack.c.h.b16 %v296
    %v730 = vunpack.c.l.b16 %v297
    %v731 = vunpack.c.h.b16 %v297
    %v732 = vunpack.c.l.b16 %v298
    %v733 = vunpack.c.h.b16 %v298
    %v734 = vunpack.c.l.b16 %v299
    %v735 = vunpack.c.h.b16 %v299
    %v736 = vunpack.c.l.b16 %v300
    %v737 = vunpack.c.h.b16 %v300
    %v738 = vunpack.c.l.b16 %v301
    %v739 = vunpack.c.h.b16 %v301
    %v740 = vunpack.c.l.b16 %v302
    %v741 = vunpack.c.h.b16 %v302
    %v742 = vunpack.c.l.b16 %v303
    %v743 = vunpack.c.h.b16 %v303
    %v744 = vunpack.c.l.b16 %v304
    %v745 = vunpack.c.h.b16 %v304
    %v746 = vunpack.c.l.b16 %v305
    %v747 = vunpack.c.h.b16 %v305
    %v748 = vunpack.c.l.b16 %v306
    %v749 = vunpack.c.h.b16 %v306
    %v750 = vunpack.c.l.b16 %v307
    %v751 = vunpack.c.h.b16 %v307
    %v752 = vunpack.c.l.b16 %v308
    %v753 = vunpack.c.h.b16 %v308
    %v754 = vunpack.c.l.b16 %v309
    %v755 = vunpack.c.h.b16 %v309
    %v756 = vunpack.c.l.b16 %v310
    %v757 = vunpack.c.h.b16 %v310
    %v758 = vunpack.c.l.b16 %v311
    %v759 = vunpack.c.h.b16 %v311
    %v760 = vunpack.c.l.b16 %v312
    %v761 = vunpack.c.h.b16 %v312
    %v762 = vunpack.c.l.b16 %v313
    %v763 = vunpack.c.h.b16 %v313
    %v764 = vunpack.c.l.b16 %v314
    %v765 = vunpack.c.h.b16 %v314
    %v766 = vunpack.c.l.b16 %v315
    %v767 = vunpack.c.h.b16 %v315
    %v768 = vunpack.c.l.b16 %v316
    %v769 = vunpack.c.h.b16 %v316
    %v770 = vunpack.c.l.b16 %v317
    %v771 = vunpack.c.h.b16 %v317
    %v772 = vunpack.c.l.b16 %v318
    %v773 = vunpack.c.h.b16 %v318
    %v774 = vunpack.c.l.b16 %v319
    %v775 = vunpack.c.h.b16 %v319
    %v776 = vunpack.c.l.b16 %v320
    %v777 = vunpack.c.h.b16 %v320
    %v778 = vunpack.c.l.b16 %v321
    %v779 = vunpack.c.h.b16 %v321
    %v780 = vunpack.c.l.b16 %v322
    %v781 = vunpack.c.h.b16 %v322
    %v782 = vunpack.c.l.b16 %v323
    %v783 = vunpack.c.h.b16 %v323
    %v784 = vpack.c.b16 %v488, %v484
    %v785 = vpack.c.b16 %v489, %v485
    %v786 = vpack.c.b16 %v490, %v486
    %v787 = vpack.c.b16 %v491, %v487
    %v788 = vpack.c.b16 %v496, %v492
    %v789 = vpack.c.b16 %v497, %v493
    %v790 = vpack.c.b16 %v498, %v494
    %v791 = vpack.c.b16 %v499, %v495
    %v792 = vpack.c.b16 %v504, %v500
    %v793 = vpack.c.b16 %v505, %v501
    %v794 = vpack.c.b16 %v506, %v502
    %v795 = vpack.c.b16 %v507, %v503
    %v796 = vpack.c.b16 %v512, %v508
    %v797 = vpack.c.b16 %v513, %v509
    %v798 = vpack.c.b16 %v514, %v510
    %v799 = vpack.c.b16 %v515, %v511
    %v800 = vpack.c.b16 %v520, %v516
    %v801 = vpack.c.b16 %v521, %v517
    %v802 = vpack.c.b16 %v522, %v518
    %v803 = vpack.c.b16 %v523, %v519
    %v804 = vpack.c.b16 %v528, %v524
    %v805 = vpack.c.b16 %v529, %v525
    %v806 = vpack.c.b16 %v530, %v526
    %v807 = vpack.c.b16 %v531, %v527
    %v808 = vpack.c.b16 %v536, %v532
    %v809 = vpack.c.b16 %v537, %v533
    %v810 = vpack.c.b16 %v538, %v534
    %v811 = vpack.c.b16 %v539, %v535
    %v812 = vpack.c.b16 %v544, %v540
    %v813 = vpack.c.b16 %v545, %v541
    %v814 = vpack.c.b16 %v546, %v542
    %v815 = vpack.c.b16 %v547, %v543
    %v816 = vpack.c.b16 %v552, %v548
    %v817 = vpack.c.b16 %v553, %v549
    %v818 = vpack.c.b16 %v554, %v550
    %v819 = vpack.c.b16 %v555, %v551
    %v820 = vpack.c.b16 %v560, %v556
    %v821 = vpack.c.b16 %v561, %v557
    %v822 = vpack.c.b16 %v562, %v558
    %v823 = vpack.c.b16 %v563, %v559
    %v824 = vpack.c.b16 %v568, %v564
    %v825 = vpack.c.b16 %v569, %v565
    %v826 = vpack.c.b16 %v570, %v566
    %v827 = vpack.c.b16 %v571, %v567
    %v828 = vpack.c.b16 %v576, %v572
    %v829 = vpack.c.b16 %v577, %v573
    %v830 = vpack.c.b16 %v578, %v574
    %v831 = vpack.c.b16 %v579, %v575
    %v832 = vpack.c.b16 %v584, %v580
    %v833 = vpack.c.b16 %v585, %v581
    %v834 = vpack.c.b16 %v586, %v582
    %v835 = vpack.c.b16 %v587, %v583
    %v836 = vpack.c.b16 %v592, %v588
    %v837 = vpack.c.b16 %v593, %v589
    %v838 = vpack.c.b16 %v594, %v590
    %v839 = vpack.c.b16 %v595, %v591
    %v840 = vpack.c.b16 %v600, %v596
    %v841 = vpack.c.b16 %v601, %v597
    %v842 = vpack.c.b16 %v602, %v598
    %v843 = vpack.c.b16 %v603, %v599
    %v844 = vpack.c.b16 %v608, %v604
    %v845 = vpack.c.b16 %v609, %v605
    %v846 = vpack.c.b16 %v610, %v606
    %v847 = vpack.c.b16 %v611, %v607
    %v848 = vpack.c.b16 %v616, %v612
    %v849 = vpack.c.b16 %v617, %v613
    %v850 = vpack.c.b16 %v618, %v614
    %v851 = vpack.c.b16 %v619, %v615
    %v852 = vpack.c.b16 %v624, %v620
    %v853 = vpack.c.b16 %v625, %v621
    %v854 = vpack.c.b16 %v626, %v622
    %v855 = vpack.c.b16 %v627, %v623
    %v856 = vpack.c.b16 %v632, %v628
    %v857 = vpack.c.b16 %v633, %v629
    %v858 = vpack.c.b16 %v634, %v630
    %v859 = vpack.c.b16 %v635, %v631
    %v860 = vpack.c.b16 %v640, %v636
    %v861 = vpack.c.b16 %v641, %v637
    %v862 = vpack.c.b16 %v642, %v638
    %v863 = vpack.c.b16 %v643, %v639
    %v864 = vpack.c.b16 %v648, %v644
    %v865 = vpack.c.b16 %v649, %v645
    %v866 = vpack.c.b16 %v650, %v646
    %v867 = vpack.c.b16 %v651, %v647
    %v868 = vpack.c.b16 %v656, %v652
    %v869 = vpack.c.b16 %v657, %v653
    %v870 = vpack.c.b16 %v658, %v654
    %v871 = vpack.c.b16 %v659, %v655
    %v872 = vpack.c.b16 %v664, %v660
    %v873 = vpack.c.b16 %v665, %v661
    %v874 = vpack.c.b16 %v666, %v662
    %v875 = vpack.c.b16 %v667, %v663
    %v876 = vpack.c.b16 %v672, %v668
    %v877 = vpack.c.b16 %v673, %v669
    %v878 = vpack.c.b16 %v674, %v670
    %v879 = vpack.c.b16 %v675, %v671
    %v880 = vpack.c.b16 %v680, %v676
    %v881 = vpack.c.b16 %v681, %v677
    %v882 = vpack.c.b16 %v682, %v678
    %v883 = vpack.c.b16 %v683, %v679
    %v884 = vpack.c.b16 %v688, %v684
    %v885 = vpack.c.b16 %v689, %v685
    %v886 = vpack.c.b16 %v690, %v686
    %v887 = vpack.c.b16 %v691, %v687
    %v888 = vpack.c.b16 %v696, %v692
    %v889 = vpack.c.b16 %v697, %v693
    %v890 = vpack.c.b16 %v698, %v694
    %v891 = vpack.c.b16 %v699, %v695
    %v892 = vpack.c.b16 %v704, %v700
    %v893 = vpack.c.b16 %v705, %v701
    %v894 = vpack.c.b16 %v706, %v702
    %v895 = vpack.c.b16 %v707, %v703
    %v896 = vpack.c.b16 %v712, %v708
    %v897 = vpack.c.b16 %v713, %v709
    %v898 = vpack.c.b16 %v714, %v710
    %v899 = vpack.c.b16 %v715, %v711
    %v900 = vpack.c.b16 %v720, %v716
    %v901 = vpack.c.b16 %v721, %v717
    %v902 = vpack.c.b16 %v722, %v718
    %v903 = vpack.c.b16 %v723, %v719
    %v904 = vpack.c.b16 %v728, %v724
    %v905 = vpack.c.b16 %v729, %v725
    %v906 = vpack.c.b16 %v730, %v726
    %v907 = vpack.c.b16 %v731, %v727
    %v908 = vpack.c.b16 %v736, %v732
    %v909 = vpack.c.b16 %v737, %v733
    %v910 = vpack.c.b16 %v738, %v734
    %v911 = vpack.c.b16 %v739, %v735
    %v912 = vpack.c.b16 %v744, %v740
    %v913 = vpack.c.b16 %v745, %v741
    %v914 = vpack.c.b16 %v746, %v742
    %v915 = vpack.c.b16 %v747, %v743
    %v916 = vpack.c.b16 %v752, %v748
    %v917 = vpack.c.b16 %v753, %v749
    %v918 = vpack.c.b16 %v754, %v750
    %v919 = vpack.c.b16 %v755, %v751
    %v920 = vpack.c.b16 %v760, %v756
    %v921 = vpack.c.b16 %v761, %v757
    %v922 = vpack.c.b16 %v762, %v758
    %v923 = vpack.c.b16 %v763, %v759
    %v924 = vpack.c.b16 %v768, %v764
    %v925 = vpack.c.b16 %v769, %v765
    %v926 = vpack.c.b16 %v770, %v766
    %v927 = vpack.c.b16 %v771, %v767
    %v928 = vpack.c.b16 %v776, %v772
    %v929 = vpack.c.b16 %v777, %v773
    %v930 = vpack.c.b16 %v778, %v774
    %v931 = vpack.c.b16 %v779, %v775
    %v932 = vpack.c.b16 %v780, %v780
    %v933 = vpack.c.b16 %v781, %v781
    %v934 = vpack.c.b16 %v782, %v782
    %v935 = vpack.c.b16 %v783, %v783
    %vm1084 = vcmask 719872
    %v1086 = vsel %vm1084, %v173, 0
    %vm1088 = vcmask 1043456
    %v1090 = vsel %vm1088, %v932, 0
    %v1093 = vsel %vm1088, %v933, 0
    %v1096 = vsel %vm1088, %v934, 0
    %v1099 = vsel %vm1088, %v935, 0
    %1101 = vmatpush.bf16.msra.mxu0 %v812
    %1102 = vmatpush.bf16.msra.mxu0 %v808
    %1103 = vmatpush.bf16.msra.mxu0 %v804
    %1104 = vmatpush.bf16.msra.mxu0 %v800
    %1105 = vmatpush.bf16.msra.mxu0 %v796
    %1106 = vmatpush.bf16.msra.mxu0 %v792
    %1107 = vmatpush.bf16.msra.mxu0 %v788
    %1108 = vmatpush.bf16.msra.mxu0 %v784
    %1109 = vmatmul.bf16.gmra.mxu0 %v169
    %v1110 = vpop.f32.mrf.mxu0
    %v1111 = vadd.f32 %v326, %v1110
    %v1112 = vpop.f32.mrf.mxu0
    %1113 = vdwg.mxu0
    %1114 = vmatpush.bf16.msra.mxu0 %v844
    %1115 = vmatpush.bf16.msra.mxu0 %v840
    %1116 = vmatpush.bf16.msra.mxu0 %v836
    %1117 = vmatpush.bf16.msra.mxu0 %v832
    %1118 = vmatpush.bf16.msra.mxu0 %v828
    %1119 = vmatpush.bf16.msra.mxu0 %v824
    %1120 = vmatpush.bf16.msra.mxu0 %v820
    %1121 = vmatpush.bf16.msra.mxu0 %v816
    %1122 = vmatmul.bf16.gmra.mxu0 %v170
    %v1123 = vpop.f32.mrf.mxu0
    %v1124 = vadd.f32 %v1111, %v1123
    %v1125 = vpop.f32.mrf.mxu0
    %1126 = vdwg.mxu0
    %1127 = vmatpush.bf16.msra.mxu0 %v876
    %1128 = vmatpush.bf16.msra.mxu0 %v872
    %1129 = vmatpush.bf16.msra.mxu0 %v868
    %1130 = vmatpush.bf16.msra.mxu0 %v864
    %1131 = vmatpush.bf16.msra.mxu0 %v860
    %1132 = vmatpush.bf16.msra.mxu0 %v856
    %1133 = vmatpush.bf16.msra.mxu0 %v852
    %1134 = vmatpush.bf16.msra.mxu0 %v848
    %1135 = vmatmul.bf16.gmra.mxu0 %v171
    %v1136 = vpop.f32.mrf.mxu0
    %v1137 = vadd.f32 %v1124, %v1136
    %v1138 = vpop.f32.mrf.mxu0
    %1139 = vdwg.mxu0
    %1140 = vmatpush.bf16.msra.mxu0 %v908
    %1141 = vmatpush.bf16.msra.mxu0 %v904
    %1142 = vmatpush.bf16.msra.mxu0 %v900
    %1143 = vmatpush.bf16.msra.mxu0 %v896
    %1144 = vmatpush.bf16.msra.mxu0 %v892
    %1145 = vmatpush.bf16.msra.mxu0 %v888
    %1146 = vmatpush.bf16.msra.mxu0 %v884
    %1147 = vmatpush.bf16.msra.mxu0 %v880
    %1148 = vmatmul.bf16.gmra.mxu0 %v172
    %v1149 = vpop.f32.mrf.mxu0
    %v1150 = vadd.f32 %v1137, %v1149
    %v1151 = vpop.f32.mrf.mxu0
    %1152 = vdwg.mxu0
    %1153 = vmatpush.bf16.msra.mxu0 0
    %1154 = vmatpush.bf16.msra.mxu0 0
    %1155 = vmatpush.bf16.msra.mxu0 %v1090
    %1156 = vmatpush.bf16.msra.mxu0 %v928
    %1157 = vmatpush.bf16.msra.mxu0 %v924
    %1158 = vmatpush.bf16.msra.mxu0 %v920
    %1159 = vmatpush.bf16.msra.mxu0 %v916
    %1160 = vmatpush.bf16.msra.mxu0 %v912
    %1161 = vmatmul.bf16.gmra.mxu0 %v1086
    %v1162 = vpop.f32.mrf.mxu0
    %v1163 = vadd.f32 %v1150, %v1162
    %v1164 = vpop.f32.mrf.mxu0
    %1165 = vdwg.mxu0
    %1166 = vmatpush.bf16.msra.mxu0 %v813
    %1167 = vmatpush.bf16.msra.mxu0 %v809
    %1168 = vmatpush.bf16.msra.mxu0 %v805
    %1169 = vmatpush.bf16.msra.mxu0 %v801
    %1170 = vmatpush.bf16.msra.mxu0 %v797
    %1171 = vmatpush.bf16.msra.mxu0 %v793
    %1172 = vmatpush.bf16.msra.mxu0 %v789
    %1173 = vmatpush.bf16.msra.mxu0 %v785
    %1174 = vmatmul.bf16.gmra.mxu0 %v169
    %v1175 = vpop.f32.mrf.mxu0
    %v1176 = vadd.f32 %v327, %v1175
    %v1177 = vpop.f32.mrf.mxu0
    %1178 = vdwg.mxu0
    %1179 = vmatpush.bf16.msra.mxu0 %v845
    %1180 = vmatpush.bf16.msra.mxu0 %v841
    %1181 = vmatpush.bf16.msra.mxu0 %v837
    %1182 = vmatpush.bf16.msra.mxu0 %v833
    %1183 = vmatpush.bf16.msra.mxu0 %v829
    %1184 = vmatpush.bf16.msra.mxu0 %v825
    %1185 = vmatpush.bf16.msra.mxu0 %v821
    %1186 = vmatpush.bf16.msra.mxu0 %v817
    %1187 = vmatmul.bf16.gmra.mxu0 %v170
    %v1188 = vpop.f32.mrf.mxu0
    %v1189 = vadd.f32 %v1176, %v1188
    %v1190 = vpop.f32.mrf.mxu0
    %1191 = vdwg.mxu0
    %1192 = vmatpush.bf16.msra.mxu0 %v877
    %1193 = vmatpush.bf16.msra.mxu0 %v873
    %1194 = vmatpush.bf16.msra.mxu0 %v869
    %1195 = vmatpush.bf16.msra.mxu0 %v865
    %1196 = vmatpush.bf16.msra.mxu0 %v861
    %1197 = vmatpush.bf16.msra.mxu0 %v857
    %1198 = vmatpush.bf16.msra.mxu0 %v853
    %1199 = vmatpush.bf16.msra.mxu0 %v849
    %1200 = vmatmul.bf16.gmra.mxu0 %v171
    %v1201 = vpop.f32.mrf.mxu0
    %v1202 = vadd.f32 %v1189, %v1201
    %v1203 = vpop.f32.mrf.mxu0
    %1204 = vdwg.mxu0
    %1205 = vmatpush.bf16.msra.mxu0 %v909
    %1206 = vmatpush.bf16.msra.mxu0 %v905
    %1207 = vmatpush.bf16.msra.mxu0 %v901
    %1208 = vmatpush.bf16.msra.mxu0 %v897
    %1209 = vmatpush.bf16.msra.mxu0 %v893
    %1210 = vmatpush.bf16.msra.mxu0 %v889
    %1211 = vmatpush.bf16.msra.mxu0 %v885
    %1212 = vmatpush.bf16.msra.mxu0 %v881
    %1213 = vmatmul.bf16.gmra.mxu0 %v172
    %v1214 = vpop.f32.mrf.mxu0
    %v1215 = vadd.f32 %v1202, %v1214
    %v1216 = vpop.f32.mrf.mxu0
    %1217 = vdwg.mxu0
    %1218 = vmatpush.bf16.msra.mxu0 0
    %1219 = vmatpush.bf16.msra.mxu0 0
    %1220 = vmatpush.bf16.msra.mxu0 %v1093
    %1221 = vmatpush.bf16.msra.mxu0 %v929
    %1222 = vmatpush.bf16.msra.mxu0 %v925
    %1223 = vmatpush.bf16.msra.mxu0 %v921
    %1224 = vmatpush.bf16.msra.mxu0 %v917
    %1225 = vmatpush.bf16.msra.mxu0 %v913
    %1226 = vmatmul.bf16.gmra.mxu0 %v1086
    %v1227 = vpop.f32.mrf.mxu0
    %v1228 = vadd.f32 %v1215, %v1227
    %v1229 = vpop.f32.mrf.mxu0
    %1230 = vdwg.mxu0
    %1231 = vmatpush.bf16.msra.mxu0 %v814
    %1232 = vmatpush.bf16.msra.mxu0 %v810
    %1233 = vmatpush.bf16.msra.mxu0 %v806
    %1234 = vmatpush.bf16.msra.mxu0 %v802
    %1235 = vmatpush.bf16.msra.mxu0 %v798
    %1236 = vmatpush.bf16.msra.mxu0 %v794
    %1237 = vmatpush.bf16.msra.mxu0 %v790
    %1238 = vmatpush.bf16.msra.mxu0 %v786
    %1239 = vmatmul.bf16.gmra.mxu0 %v169
    %v1240 = vpop.f32.mrf.mxu0
    %v1241 = vadd.f32 %v328, %v1240
    %v1242 = vpop.f32.mrf.mxu0
    %1243 = vdwg.mxu0
    %1244 = vmatpush.bf16.msra.mxu0 %v846
    %1245 = vmatpush.bf16.msra.mxu0 %v842
    %1246 = vmatpush.bf16.msra.mxu0 %v838
    %1247 = vmatpush.bf16.msra.mxu0 %v834
    %1248 = vmatpush.bf16.msra.mxu0 %v830
    %1249 = vmatpush.bf16.msra.mxu0 %v826
    %1250 = vmatpush.bf16.msra.mxu0 %v822
    %1251 = vmatpush.bf16.msra.mxu0 %v818
    %1252 = vmatmul.bf16.gmra.mxu0 %v170
    %v1253 = vpop.f32.mrf.mxu0
    %v1254 = vadd.f32 %v1241, %v1253
    %v1255 = vpop.f32.mrf.mxu0
    %1256 = vdwg.mxu0
    %1257 = vmatpush.bf16.msra.mxu0 %v878
    %1258 = vmatpush.bf16.msra.mxu0 %v874
    %1259 = vmatpush.bf16.msra.mxu0 %v870
    %1260 = vmatpush.bf16.msra.mxu0 %v866
    %1261 = vmatpush.bf16.msra.mxu0 %v862
    %1262 = vmatpush.bf16.msra.mxu0 %v858
    %1263 = vmatpush.bf16.msra.mxu0 %v854
    %1264 = vmatpush.bf16.msra.mxu0 %v850
    %1265 = vmatmul.bf16.gmra.mxu0 %v171
    %v1266 = vpop.f32.mrf.mxu0
    %v1267 = vadd.f32 %v1254, %v1266
    %v1268 = vpop.f32.mrf.mxu0
    %1269 = vdwg.mxu0
    %1270 = vmatpush.bf16.msra.mxu0 %v910
    %1271 = vmatpush.bf16.msra.mxu0 %v906
    %1272 = vmatpush.bf16.msra.mxu0 %v902
    %1273 = vmatpush.bf16.msra.mxu0 %v898
    %1274 = vmatpush.bf16.msra.mxu0 %v894
    %1275 = vmatpush.bf16.msra.mxu0 %v890
    %1276 = vmatpush.bf16.msra.mxu0 %v886
    %1277 = vmatpush.bf16.msra.mxu0 %v882
    %1278 = vmatmul.bf16.gmra.mxu0 %v172
    %v1279 = vpop.f32.mrf.mxu0
    %v1280 = vadd.f32 %v1267, %v1279
    %v1281 = vpop.f32.mrf.mxu0
    %1282 = vdwg.mxu0
    %1283 = vmatpush.bf16.msra.mxu0 0
    %1284 = vmatpush.bf16.msra.mxu0 0
    %1285 = vmatpush.bf16.msra.mxu0 %v1096
    %1286 = vmatpush.bf16.msra.mxu0 %v930
    %1287 = vmatpush.bf16.msra.mxu0 %v926
    %1288 = vmatpush.bf16.msra.mxu0 %v922
    %1289 = vmatpush.bf16.msra.mxu0 %v918
    %1290 = vmatpush.bf16.msra.mxu0 %v914
    %1291 = vmatmul.bf16.gmra.mxu0 %v1086
    %v1292 = vpop.f32.mrf.mxu0
    %v1293 = vadd.f32 %v1280, %v1292
    %v1294 = vpop.f32.mrf.mxu0
    %1295 = vdwg.mxu0
    %1296 = vmatpush.bf16.msra.mxu0 %v815
    %1297 = vmatpush.bf16.msra.mxu0 %v811
    %1298 = vmatpush.bf16.msra.mxu0 %v807
    %1299 = vmatpush.bf16.msra.mxu0 %v803
    %1300 = vmatpush.bf16.msra.mxu0 %v799
    %1301 = vmatpush.bf16.msra.mxu0 %v795
    %1302 = vmatpush.bf16.msra.mxu0 %v791
    %1303 = vmatpush.bf16.msra.mxu0 %v787
    %1304 = vmatmul.bf16.gmra.mxu0 %v169
    %v1305 = vpop.f32.mrf.mxu0
    %v1306 = vadd.f32 %v329, %v1305
    %v1307 = vpop.f32.mrf.mxu0
    %1308 = vdwg.mxu0
    %1309 = vmatpush.bf16.msra.mxu0 %v847
    %1310 = vmatpush.bf16.msra.mxu0 %v843
    %1311 = vmatpush.bf16.msra.mxu0 %v839
    %1312 = vmatpush.bf16.msra.mxu0 %v835
    %1313 = vmatpush.bf16.msra.mxu0 %v831
    %1314 = vmatpush.bf16.msra.mxu0 %v827
    %1315 = vmatpush.bf16.msra.mxu0 %v823
    %1316 = vmatpush.bf16.msra.mxu0 %v819
    %1317 = vmatmul.bf16.gmra.mxu0 %v170
    %v1318 = vpop.f32.mrf.mxu0
    %v1319 = vadd.f32 %v1306, %v1318
    %v1320 = vpop.f32.mrf.mxu0
    %1321 = vdwg.mxu0
    %1322 = vmatpush.bf16.msra.mxu0 %v879
    %1323 = vmatpush.bf16.msra.mxu0 %v875
    %1324 = vmatpush.bf16.msra.mxu0 %v871
    %1325 = vmatpush.bf16.msra.mxu0 %v867
    %1326 = vmatpush.bf16.msra.mxu0 %v863
    %1327 = vmatpush.bf16.msra.mxu0 %v859
    %1328 = vmatpush.bf16.msra.mxu0 %v855
    %1329 = vmatpush.bf16.msra.mxu0 %v851
    %1330 = vmatmul.bf16.gmra.mxu0 %v171
    %v1331 = vpop.f32.mrf.mxu0
    %v1332 = vadd.f32 %v1319, %v1331
    %v1333 = vpop.f32.mrf.mxu0
    %1334 = vdwg.mxu0
    %1335 = vmatpush.bf16.msra.mxu0 %v911
    %1336 = vmatpush.bf16.msra.mxu0 %v907
    %1337 = vmatpush.bf16.msra.mxu0 %v903
    %1338 = vmatpush.bf16.msra.mxu0 %v899
    %1339 = vmatpush.bf16.msra.mxu0 %v895
    %1340 = vmatpush.bf16.msra.mxu0 %v891
    %1341 = vmatpush.bf16.msra.mxu0 %v887
    %1342 = vmatpush.bf16.msra.mxu0 %v883
    %1343 = vmatmul.bf16.gmra.mxu0 %v172
    %v1344 = vpop.f32.mrf.mxu0
    %v1345 = vadd.f32 %v1332, %v1344
    %v1346 = vpop.f32.mrf.mxu0
    %1347 = vdwg.mxu0
    %1348 = vmatpush.bf16.msra.mxu0 0
    %1349 = vmatpush.bf16.msra.mxu0 0
    %1350 = vmatpush.bf16.msra.mxu0 %v1099
    %1351 = vmatpush.bf16.msra.mxu0 %v931
    %1352 = vmatpush.bf16.msra.mxu0 %v927
    %1353 = vmatpush.bf16.msra.mxu0 %v923
    %1354 = vmatpush.bf16.msra.mxu0 %v919
    %1355 = vmatpush.bf16.msra.mxu0 %v915
    %1356 = vmatmul.bf16.gmra.mxu0 %v1086
    %v1357 = vpop.f32.mrf.mxu0
    %v1358 = vadd.f32 %v1345, %v1357
    %v1359 = vpop.f32.mrf.mxu0
    %1360 = vdwg.mxu0
    %v1361 = vmax.f32 %v1163, 0.0
    %v1362 = vmax.f32 %v1228, 0.0
    %v1363 = vmax.f32 %v1293, 0.0
    %v1364 = vmax.f32 %v1358, 0.0
    %v1365 = vpack.c.bf16 %v1361, %v1361
    %v1366 = vpack.c.bf16 %v1362, %v1362
    %v1367 = vpack.c.bf16 %v1363, %v1363
    %v1368 = vpack.c.bf16 %v1364, %v1364
    %v1369 = vld [vmem:[#allocation8] sm:$0xff]
    %v1370 = vld [vmem:[#allocation8 + $0x8] sm:$0xff]
    %v1371 = vld [vmem:[#allocation8 + $0x10] sm:$0xff]
    %v1372 = vld [vmem:[#allocation8 + $0x18] sm:$0xff]
    %v1373 = vld [vmem:[#allocation8 + $0x20] sm:$0xff]
    %v1374 = vld [vmem:[#allocation8 + $0x28] sm:$0xff]
    %v1375 = vld [vmem:[#allocation8 + $0x30] sm:$0xff]
    %v1376 = vld [vmem:[#allocation8 + $0x38] sm:$0xff]
    %v1377 = vld [vmem:[#allocation8 + $0x40] sm:$0xff]
    %v1378 = vld [vmem:[#allocation8 + $0x48] sm:$0xff]
    %v1379 = vld [vmem:[#allocation8 + $0x50] sm:$0xff]
    %v1380 = vld [vmem:[#allocation8 + $0x58] sm:$0xff]
    %v1381 = vld [vmem:[#allocation8 + $0x60] sm:$0xff]
    %v1382 = vld [vmem:[#allocation8 + $0x68] sm:$0xff]
    %v1383 = vld [vmem:[#allocation8 + $0x70] sm:$0xff]
    %v1384 = vld [vmem:[#allocation8 + $0x78] sm:$0xff]
    %v1385 = vld [vmem:[#allocation8 + $0x80] sm:$0xff]
    %v1386 = vld [vmem:[#allocation8 + $0x88] sm:$0xff]
    %v1387 = vld [vmem:[#allocation8 + $0x90] sm:$0xff]
    %v1388 = vld [vmem:[#allocation8 + $0x98] sm:$0xff]
    %v1389 = vld [vmem:[#allocation8 + $0xa0] sm:$0xff]
    %v1390 = vld [vmem:[#allocation8 + $0xa8] sm:$0xff]
    %v1391 = vld [vmem:[#allocation8 + $0xb0] sm:$0xff]
    %v1392 = vld [vmem:[#allocation8 + $0xb8] sm:$0xff]
    %v1393 = vld [vmem:[#allocation8 + $0xc0] sm:$0xff]
    %v1394 = vld [vmem:[#allocation8 + $0xc8] sm:$0xff]
    %v1395 = vld [vmem:[#allocation8 + $0xd0] sm:$0xff]
    %v1396 = vld [vmem:[#allocation8 + $0xd8] sm:$0xff]
    %v1397 = vld [vmem:[#allocation8 + $0xe0] sm:$0xff]
    %v1398 = vld [vmem:[#allocation8 + $0xe8] sm:$0xff]
    %v1399 = vld [vmem:[#allocation8 + $0xf0] sm:$0xff]
    %v1400 = vld [vmem:[#allocation8 + $0xf8] sm:$0xff]
    %v1401 = vld [vmem:[#allocation8 + $0x100] sm:$0xff]
    %v1402 = vld [vmem:[#allocation8 + $0x108] sm:$0xff]
    %v1403 = vld [vmem:[#allocation8 + $0x110] sm:$0xff]
    %v1404 = vld [vmem:[#allocation8 + $0x118] sm:$0xff]
    %v1405 = vld [vmem:[#allocation8 + $0x120] sm:$0xff]
    %v1406 = vld [vmem:[#allocation8 + $0x128] sm:$0xff]
    %v1407 = vld [vmem:[#allocation8 + $0x130] sm:$0xff]
    %v1408 = vld [vmem:[#allocation8 + $0x138] sm:$0xff]
    %v1409 = vld [vmem:[#allocation8 + $0x140] sm:$0xff]
    %v1410 = vld [vmem:[#allocation8 + $0x148] sm:$0xff]
    %v1411 = vld [vmem:[#allocation8 + $0x150] sm:$0xff]
    %v1412 = vld [vmem:[#allocation8 + $0x158] sm:$0xff]
    %v1413 = vld [vmem:[#allocation8 + $0x160] sm:$0xff]
    %v1414 = vld [vmem:[#allocation8 + $0x168] sm:$0xff]
    %v1415 = vld [vmem:[#allocation8 + $0x170] sm:$0xff]
    %v1416 = vld [vmem:[#allocation8 + $0x178] sm:$0xff]
    %v1417 = vld [vmem:[#allocation8 + $0x180] sm:$0xff]
    %v1418 = vld [vmem:[#allocation8 + $0x188] sm:$0xff]
    %v1419 = vld [vmem:[#allocation8 + $0x190] sm:$0xff]
    %v1420 = vld [vmem:[#allocation8 + $0x198] sm:$0xff]
    %v1421 = vld [vmem:[#allocation8 + $0x1a0] sm:$0xff]
    %v1422 = vld [vmem:[#allocation8 + $0x1a8] sm:$0xff]
    %v1423 = vld [vmem:[#allocation8 + $0x1b0] sm:$0xff]
    %v1424 = vld [vmem:[#allocation8 + $0x1b8] sm:$0xff]
    %v1425 = vld [vmem:[#allocation8 + $0x1c0] sm:$0xff]
    %v1426 = vld [vmem:[#allocation8 + $0x1c8] sm:$0xff]
    %v1427 = vld [vmem:[#allocation8 + $0x1d0] sm:$0xff]
    %v1428 = vld [vmem:[#allocation8 + $0x1d8] sm:$0xff]
    %v1429 = vld [vmem:[#allocation8 + $0x1e0] sm:$0xff]
    %v1430 = vld [vmem:[#allocation8 + $0x1e8] sm:$0xff]
    %v1431 = vld [vmem:[#allocation8 + $0x1f0] sm:$0xff]
    %v1432 = vld [vmem:[#allocation8 + $0x1f8] sm:$0xff]
    %v1433 = vld [vmem:[#allocation8 + $0x200] sm:$0xff]
    %v1434 = vld [vmem:[#allocation8 + $0x208] sm:$0xff]
    %v1435 = vld [vmem:[#allocation8 + $0x210] sm:$0xff]
    %v1436 = vld [vmem:[#allocation8 + $0x218] sm:$0xff]
    %v1437 = vld [vmem:[#allocation8 + $0x220] sm:$0xff]
    %v1438 = vld [vmem:[#allocation8 + $0x228] sm:$0xff]
    %v1439 = vld [vmem:[#allocation8 + $0x230] sm:$0xff]
    %v1440 = vld [vmem:[#allocation8 + $0x238] sm:$0xff]
    %v1441 = vld [vmem:[#allocation8 + $0x240] sm:$0xff]
    %v1442 = vld [vmem:[#allocation8 + $0x248] sm:$0xff]
    %v1443 = vld [vmem:[#allocation8 + $0x250] sm:$0xff]
    %v1444 = vld [vmem:[#allocation8 + $0x258] sm:$0xff]
    %v1445 = vld [vmem:[#allocation8 + $0x260] sm:$0xff]
    %v1446 = vld [vmem:[#allocation8 + $0x268] sm:$0xff]
    %v1447 = vld [vmem:[#allocation8 + $0x270] sm:$0xff]
    %v1448 = vld [vmem:[#allocation8 + $0x278] sm:$0xff]
    %v1449 = vld [vmem:[#allocation8 + $0x280] sm:$0xff]
    %v1450 = vld [vmem:[#allocation8 + $0x288] sm:$0xff]
    %v1451 = vld [vmem:[#allocation8 + $0x290] sm:$0xff]
    %v1452 = vld [vmem:[#allocation8 + $0x298] sm:$0xff]
    %v1453 = vld [vmem:[#allocation8 + $0x2a0] sm:$0xff]
    %v1454 = vld [vmem:[#allocation8 + $0x2a8] sm:$0xff]
    %v1455 = vld [vmem:[#allocation8 + $0x2b0] sm:$0xff]
    %v1456 = vld [vmem:[#allocation8 + $0x2b8] sm:$0xff]
    %v1457 = vld [vmem:[#allocation8 + $0x2c0] sm:$0xff]
    %v1458 = vld [vmem:[#allocation8 + $0x2c8] sm:$0xff]
    %v1459 = vld [vmem:[#allocation8 + $0x2d0] sm:$0xff]
    %v1460 = vld [vmem:[#allocation8 + $0x2d8] sm:$0xff]
    %v1461 = vld [vmem:[#allocation8 + $0x2e0] sm:$0xff]
    %v1462 = vld [vmem:[#allocation8 + $0x2e8] sm:$0xff]
    %v1463 = vld [vmem:[#allocation8 + $0x2f0] sm:$0xff]
    %v1464 = vld [vmem:[#allocation8 + $0x2f8] sm:$0xff]
    %v1465 = vld [vmem:[#allocation8 + $0x300] sm:$0xff]
    %v1466 = vld [vmem:[#allocation8 + $0x308] sm:$0xff]
    %v1467 = vld [vmem:[#allocation8 + $0x310] sm:$0xff]
    %v1468 = vld [vmem:[#allocation8 + $0x318] sm:$0xff]
    %v1469 = vld [vmem:[#allocation8 + $0x320] sm:$0xff]
    %v1470 = vld [vmem:[#allocation8 + $0x328] sm:$0xff]
    %v1471 = vld [vmem:[#allocation8 + $0x330] sm:$0xff]
    %v1472 = vld [vmem:[#allocation8 + $0x338] sm:$0xff]
    %v1473 = vld [vmem:[#allocation8 + $0x340] sm:$0xff]
    %v1474 = vld [vmem:[#allocation8 + $0x348] sm:$0xff]
    %v1475 = vld [vmem:[#allocation8 + $0x350] sm:$0xff]
    %v1476 = vld [vmem:[#allocation8 + $0x358] sm:$0xff]
    %v1477 = vld [vmem:[#allocation8 + $0x360] sm:$0xff]
    %v1478 = vld [vmem:[#allocation8 + $0x368] sm:$0xff]
    %v1479 = vld [vmem:[#allocation8 + $0x370] sm:$0xff]
    %v1480 = vld [vmem:[#allocation8 + $0x378] sm:$0xff]
    %v1481 = vld [vmem:[#allocation8 + $0x380] sm:$0xff]
    %v1482 = vld [vmem:[#allocation8 + $0x388] sm:$0xff]
    %v1483 = vld [vmem:[#allocation8 + $0x390] sm:$0xff]
    %v1484 = vld [vmem:[#allocation8 + $0x398] sm:$0xff]
    %v1485 = vld [vmem:[#allocation8 + $0x3a0] sm:$0xff]
    %v1486 = vld [vmem:[#allocation8 + $0x3a8] sm:$0xff]
    %v1487 = vld [vmem:[#allocation8 + $0x3b0] sm:$0xff]
    %v1488 = vld [vmem:[#allocation8 + $0x3b8] sm:$0xff]
    %v1489 = vld [vmem:[#allocation8 + $0x3c0] sm:$0xff]
    %v1490 = vld [vmem:[#allocation8 + $0x3c8] sm:$0xff]
    %v1491 = vld [vmem:[#allocation8 + $0x3d0] sm:$0xff]
    %v1492 = vld [vmem:[#allocation8 + $0x3d8] sm:$0xff]
    %v1493 = vld [vmem:[#allocation8 + $0x3e0] sm:$0xff]
    %v1494 = vld [vmem:[#allocation8 + $0x3e8] sm:$0xff]
    %v1495 = vld [vmem:[#allocation8 + $0x3f0] sm:$0xff]
    %v1496 = vld [vmem:[#allocation8 + $0x3f8] sm:$0xff]
    %v1497 = vld [vmem:[#allocation10] sm:$0xf]
    %v1499 = vperm.slane %v1497, 0
    %v1500 = vperm.slane %v1497, 1
    %v1501 = vperm.slane %v1497, 2
    %v1502 = vperm.slane %v1497, 3
    %v1635 = vunpack.c.l.b16 %v1369
    %v1636 = vunpack.c.h.b16 %v1369
    %v1637 = vunpack.c.l.b16 %v1370
    %v1638 = vunpack.c.h.b16 %v1370
    %v1639 = vunpack.c.l.b16 %v1371
    %v1640 = vunpack.c.h.b16 %v1371
    %v1641 = vunpack.c.l.b16 %v1372
    %v1642 = vunpack.c.h.b16 %v1372
    %v1643 = vunpack.c.l.b16 %v1373
    %v1644 = vunpack.c.h.b16 %v1373
    %v1645 = vunpack.c.l.b16 %v1374
    %v1646 = vunpack.c.h.b16 %v1374
    %v1647 = vunpack.c.l.b16 %v1375
    %v1648 = vunpack.c.h.b16 %v1375
    %v1649 = vunpack.c.l.b16 %v1376
    %v1650 = vunpack.c.h.b16 %v1376
    %v1651 = vunpack.c.l.b16 %v1377
    %v1652 = vunpack.c.h.b16 %v1377
    %v1653 = vunpack.c.l.b16 %v1378
    %v1654 = vunpack.c.h.b16 %v1378
    %v1655 = vunpack.c.l.b16 %v1379
    %v1656 = vunpack.c.h.b16 %v1379
    %v1657 = vunpack.c.l.b16 %v1380
    %v1658 = vunpack.c.h.b16 %v1380
    %v1659 = vunpack.c.l.b16 %v1381
    %v1660 = vunpack.c.h.b16 %v1381
    %v1661 = vunpack.c.l.b16 %v1382
    %v1662 = vunpack.c.h.b16 %v1382
    %v1663 = vunpack.c.l.b16 %v1383
    %v1664 = vunpack.c.h.b16 %v1383
    %v1665 = vunpack.c.l.b16 %v1384
    %v1666 = vunpack.c.h.b16 %v1384
    %v1667 = vunpack.c.l.b16 %v1385
    %v1668 = vunpack.c.h.b16 %v1385
    %v1669 = vunpack.c.l.b16 %v1386
    %v1670 = vunpack.c.h.b16 %v1386
    %v1671 = vunpack.c.l.b16 %v1387
    %v1672 = vunpack.c.h.b16 %v1387
    %v1673 = vunpack.c.l.b16 %v1388
    %v1674 = vunpack.c.h.b16 %v1388
    %v1675 = vunpack.c.l.b16 %v1389
    %v1676 = vunpack.c.h.b16 %v1389
    %v1677 = vunpack.c.l.b16 %v1390
    %v1678 = vunpack.c.h.b16 %v1390
    %v1679 = vunpack.c.l.b16 %v1391
    %v1680 = vunpack.c.h.b16 %v1391
    %v1681 = vunpack.c.l.b16 %v1392
    %v1682 = vunpack.c.h.b16 %v1392
    %v1683 = vunpack.c.l.b16 %v1393
    %v1684 = vunpack.c.h.b16 %v1393
    %v1685 = vunpack.c.l.b16 %v1394
    %v1686 = vunpack.c.h.b16 %v1394
    %v1687 = vunpack.c.l.b16 %v1395
    %v1688 = vunpack.c.h.b16 %v1395
    %v1689 = vunpack.c.l.b16 %v1396
    %v1690 = vunpack.c.h.b16 %v1396
    %v1691 = vunpack.c.l.b16 %v1397
    %v1692 = vunpack.c.h.b16 %v1397
    %v1693 = vunpack.c.l.b16 %v1398
    %v1694 = vunpack.c.h.b16 %v1398
    %v1695 = vunpack.c.l.b16 %v1399
    %v1696 = vunpack.c.h.b16 %v1399
    %v1697 = vunpack.c.l.b16 %v1400
    %v1698 = vunpack.c.h.b16 %v1400
    %v1699 = vunpack.c.l.b16 %v1401
    %v1700 = vunpack.c.h.b16 %v1401
    %v1701 = vunpack.c.l.b16 %v1402
    %v1702 = vunpack.c.h.b16 %v1402
    %v1703 = vunpack.c.l.b16 %v1403
    %v1704 = vunpack.c.h.b16 %v1403
    %v1705 = vunpack.c.l.b16 %v1404
    %v1706 = vunpack.c.h.b16 %v1404
    %v1707 = vunpack.c.l.b16 %v1405
    %v1708 = vunpack.c.h.b16 %v1405
    %v1709 = vunpack.c.l.b16 %v1406
    %v1710 = vunpack.c.h.b16 %v1406
    %v1711 = vunpack.c.l.b16 %v1407
    %v1712 = vunpack.c.h.b16 %v1407
    %v1713 = vunpack.c.l.b16 %v1408
    %v1714 = vunpack.c.h.b16 %v1408
    %v1715 = vunpack.c.l.b16 %v1409
    %v1716 = vunpack.c.h.b16 %v1409
    %v1717 = vunpack.c.l.b16 %v1410
    %v1718 = vunpack.c.h.b16 %v1410
    %v1719 = vunpack.c.l.b16 %v1411
    %v1720 = vunpack.c.h.b16 %v1411
    %v1721 = vunpack.c.l.b16 %v1412
    %v1722 = vunpack.c.h.b16 %v1412
    %v1723 = vunpack.c.l.b16 %v1413
    %v1724 = vunpack.c.h.b16 %v1413
    %v1725 = vunpack.c.l.b16 %v1414
    %v1726 = vunpack.c.h.b16 %v1414
    %v1727 = vunpack.c.l.b16 %v1415
    %v1728 = vunpack.c.h.b16 %v1415
    %v1729 = vunpack.c.l.b16 %v1416
    %v1730 = vunpack.c.h.b16 %v1416
    %v1731 = vunpack.c.l.b16 %v1417
    %v1732 = vunpack.c.h.b16 %v1417
    %v1733 = vunpack.c.l.b16 %v1418
    %v1734 = vunpack.c.h.b16 %v1418
    %v1735 = vunpack.c.l.b16 %v1419
    %v1736 = vunpack.c.h.b16 %v1419
    %v1737 = vunpack.c.l.b16 %v1420
    %v1738 = vunpack.c.h.b16 %v1420
    %v1739 = vunpack.c.l.b16 %v1421
    %v1740 = vunpack.c.h.b16 %v1421
    %v1741 = vunpack.c.l.b16 %v1422
    %v1742 = vunpack.c.h.b16 %v1422
    %v1743 = vunpack.c.l.b16 %v1423
    %v1744 = vunpack.c.h.b16 %v1423
    %v1745 = vunpack.c.l.b16 %v1424
    %v1746 = vunpack.c.h.b16 %v1424
    %v1747 = vunpack.c.l.b16 %v1425
    %v1748 = vunpack.c.h.b16 %v1425
    %v1749 = vunpack.c.l.b16 %v1426
    %v1750 = vunpack.c.h.b16 %v1426
    %v1751 = vunpack.c.l.b16 %v1427
    %v1752 = vunpack.c.h.b16 %v1427
    %v1753 = vunpack.c.l.b16 %v1428
    %v1754 = vunpack.c.h.b16 %v1428
    %v1755 = vunpack.c.l.b16 %v1429
    %v1756 = vunpack.c.h.b16 %v1429
    %v1757 = vunpack.c.l.b16 %v1430
    %v1758 = vunpack.c.h.b16 %v1430
    %v1759 = vunpack.c.l.b16 %v1431
    %v1760 = vunpack.c.h.b16 %v1431
    %v1761 = vunpack.c.l.b16 %v1432
    %v1762 = vunpack.c.h.b16 %v1432
    %v1763 = vunpack.c.l.b16 %v1433
    %v1764 = vunpack.c.h.b16 %v1433
    %v1765 = vunpack.c.l.b16 %v1434
    %v1766 = vunpack.c.h.b16 %v1434
    %v1767 = vunpack.c.l.b16 %v1435
    %v1768 = vunpack.c.h.b16 %v1435
    %v1769 = vunpack.c.l.b16 %v1436
    %v1770 = vunpack.c.h.b16 %v1436
    %v1771 = vunpack.c.l.b16 %v1437
    %v1772 = vunpack.c.h.b16 %v1437
    %v1773 = vunpack.c.l.b16 %v1438
    %v1774 = vunpack.c.h.b16 %v1438
    %v1775 = vunpack.c.l.b16 %v1439
    %v1776 = vunpack.c.h.b16 %v1439
    %v1777 = vunpack.c.l.b16 %v1440
    %v1778 = vunpack.c.h.b16 %v1440
    %v1779 = vunpack.c.l.b16 %v1441
    %v1780 = vunpack.c.h.b16 %v1441
    %v1781 = vunpack.c.l.b16 %v1442
    %v1782 = vunpack.c.h.b16 %v1442
    %v1783 = vunpack.c.l.b16 %v1443
    %v1784 = vunpack.c.h.b16 %v1443
    %v1785 = vunpack.c.l.b16 %v1444
    %v1786 = vunpack.c.h.b16 %v1444
    %v1787 = vunpack.c.l.b16 %v1445
    %v1788 = vunpack.c.h.b16 %v1445
    %v1789 = vunpack.c.l.b16 %v1446
    %v1790 = vunpack.c.h.b16 %v1446
    %v1791 = vunpack.c.l.b16 %v1447
    %v1792 = vunpack.c.h.b16 %v1447
    %v1793 = vunpack.c.l.b16 %v1448
    %v1794 = vunpack.c.h.b16 %v1448
    %v1795 = vunpack.c.l.b16 %v1449
    %v1796 = vunpack.c.h.b16 %v1449
    %v1797 = vunpack.c.l.b16 %v1450
    %v1798 = vunpack.c.h.b16 %v1450
    %v1799 = vunpack.c.l.b16 %v1451
    %v1800 = vunpack.c.h.b16 %v1451
    %v1801 = vunpack.c.l.b16 %v1452
    %v1802 = vunpack.c.h.b16 %v1452
    %v1803 = vunpack.c.l.b16 %v1453
    %v1804 = vunpack.c.h.b16 %v1453
    %v1805 = vunpack.c.l.b16 %v1454
    %v1806 = vunpack.c.h.b16 %v1454
    %v1807 = vunpack.c.l.b16 %v1455
    %v1808 = vunpack.c.h.b16 %v1455
    %v1809 = vunpack.c.l.b16 %v1456
    %v1810 = vunpack.c.h.b16 %v1456
    %v1811 = vunpack.c.l.b16 %v1457
    %v1812 = vunpack.c.h.b16 %v1457
    %v1813 = vunpack.c.l.b16 %v1458
    %v1814 = vunpack.c.h.b16 %v1458
    %v1815 = vunpack.c.l.b16 %v1459
    %v1816 = vunpack.c.h.b16 %v1459
    %v1817 = vunpack.c.l.b16 %v1460
    %v1818 = vunpack.c.h.b16 %v1460
    %v1819 = vunpack.c.l.b16 %v1461
    %v1820 = vunpack.c.h.b16 %v1461
    %v1821 = vunpack.c.l.b16 %v1462
    %v1822 = vunpack.c.h.b16 %v1462
    %v1823 = vunpack.c.l.b16 %v1463
    %v1824 = vunpack.c.h.b16 %v1463
    %v1825 = vunpack.c.l.b16 %v1464
    %v1826 = vunpack.c.h.b16 %v1464
    %v1827 = vunpack.c.l.b16 %v1465
    %v1828 = vunpack.c.h.b16 %v1465
    %v1829 = vunpack.c.l.b16 %v1466
    %v1830 = vunpack.c.h.b16 %v1466
    %v1831 = vunpack.c.l.b16 %v1467
    %v1832 = vunpack.c.h.b16 %v1467
    %v1833 = vunpack.c.l.b16 %v1468
    %v1834 = vunpack.c.h.b16 %v1468
    %v1835 = vunpack.c.l.b16 %v1469
    %v1836 = vunpack.c.h.b16 %v1469
    %v1837 = vunpack.c.l.b16 %v1470
    %v1838 = vunpack.c.h.b16 %v1470
    %v1839 = vunpack.c.l.b16 %v1471
    %v1840 = vunpack.c.h.b16 %v1471
    %v1841 = vunpack.c.l.b16 %v1472
    %v1842 = vunpack.c.h.b16 %v1472
    %v1843 = vunpack.c.l.b16 %v1473
    %v1844 = vunpack.c.h.b16 %v1473
    %v1845 = vunpack.c.l.b16 %v1474
    %v1846 = vunpack.c.h.b16 %v1474
    %v1847 = vunpack.c.l.b16 %v1475
    %v1848 = vunpack.c.h.b16 %v1475
    %v1849 = vunpack.c.l.b16 %v1476
    %v1850 = vunpack.c.h.b16 %v1476
    %v1851 = vunpack.c.l.b16 %v1477
    %v1852 = vunpack.c.h.b16 %v1477
    %v1853 = vunpack.c.l.b16 %v1478
    %v1854 = vunpack.c.h.b16 %v1478
    %v1855 = vunpack.c.l.b16 %v1479
    %v1856 = vunpack.c.h.b16 %v1479
    %v1857 = vunpack.c.l.b16 %v1480
    %v1858 = vunpack.c.h.b16 %v1480
    %v1859 = vunpack.c.l.b16 %v1481
    %v1860 = vunpack.c.h.b16 %v1481
    %v1861 = vunpack.c.l.b16 %v1482
    %v1862 = vunpack.c.h.b16 %v1482
    %v1863 = vunpack.c.l.b16 %v1483
    %v1864 = vunpack.c.h.b16 %v1483
    %v1865 = vunpack.c.l.b16 %v1484
    %v1866 = vunpack.c.h.b16 %v1484
    %v1867 = vunpack.c.l.b16 %v1485
    %v1868 = vunpack.c.h.b16 %v1485
    %v1869 = vunpack.c.l.b16 %v1486
    %v1870 = vunpack.c.h.b16 %v1486
    %v1871 = vunpack.c.l.b16 %v1487
    %v1872 = vunpack.c.h.b16 %v1487
    %v1873 = vunpack.c.l.b16 %v1488
    %v1874 = vunpack.c.h.b16 %v1488
    %v1875 = vunpack.c.l.b16 %v1489
    %v1876 = vunpack.c.h.b16 %v1489
    %v1877 = vunpack.c.l.b16 %v1490
    %v1878 = vunpack.c.h.b16 %v1490
    %v1879 = vunpack.c.l.b16 %v1491
    %v1880 = vunpack.c.h.b16 %v1491
    %v1881 = vunpack.c.l.b16 %v1492
    %v1882 = vunpack.c.h.b16 %v1492
    %v1883 = vunpack.c.l.b16 %v1493
    %v1884 = vunpack.c.h.b16 %v1493
    %v1885 = vunpack.c.l.b16 %v1494
    %v1886 = vunpack.c.h.b16 %v1494
    %v1887 = vunpack.c.l.b16 %v1495
    %v1888 = vunpack.c.h.b16 %v1495
    %v1889 = vunpack.c.l.b16 %v1496
    %v1890 = vunpack.c.h.b16 %v1496
    %v1891 = vpack.c.b16 %v1639, %v1635
    %v1892 = vpack.c.b16 %v1640, %v1636
    %v1893 = vpack.c.b16 %v1641, %v1637
    %v1894 = vpack.c.b16 %v1642, %v1638
    %v1895 = vpack.c.b16 %v1647, %v1643
    %v1896 = vpack.c.b16 %v1648, %v1644
    %v1897 = vpack.c.b16 %v1649, %v1645
    %v1898 = vpack.c.b16 %v1650, %v1646
    %v1899 = vpack.c.b16 %v1655, %v1651
    %v1900 = vpack.c.b16 %v1656, %v1652
    %v1901 = vpack.c.b16 %v1657, %v1653
    %v1902 = vpack.c.b16 %v1658, %v1654
    %v1903 = vpack.c.b16 %v1663, %v1659
    %v1904 = vpack.c.b16 %v1664, %v1660
    %v1905 = vpack.c.b16 %v1665, %v1661
    %v1906 = vpack.c.b16 %v1666, %v1662
    %v1907 = vpack.c.b16 %v1671, %v1667
    %v1908 = vpack.c.b16 %v1672, %v1668
    %v1909 = vpack.c.b16 %v1673, %v1669
    %v1910 = vpack.c.b16 %v1674, %v1670
    %v1911 = vpack.c.b16 %v1679, %v1675
    %v1912 = vpack.c.b16 %v1680, %v1676
    %v1913 = vpack.c.b16 %v1681, %v1677
    %v1914 = vpack.c.b16 %v1682, %v1678
    %v1915 = vpack.c.b16 %v1687, %v1683
    %v1916 = vpack.c.b16 %v1688, %v1684
    %v1917 = vpack.c.b16 %v1689, %v1685
    %v1918 = vpack.c.b16 %v1690, %v1686
    %v1919 = vpack.c.b16 %v1695, %v1691
    %v1920 = vpack.c.b16 %v1696, %v1692
    %v1921 = vpack.c.b16 %v1697, %v1693
    %v1922 = vpack.c.b16 %v1698, %v1694
    %v1923 = vpack.c.b16 %v1703, %v1699
    %v1924 = vpack.c.b16 %v1704, %v1700
    %v1925 = vpack.c.b16 %v1705, %v1701
    %v1926 = vpack.c.b16 %v1706, %v1702
    %v1927 = vpack.c.b16 %v1711, %v1707
    %v1928 = vpack.c.b16 %v1712, %v1708
    %v1929 = vpack.c.b16 %v1713, %v1709
    %v1930 = vpack.c.b16 %v1714, %v1710
    %v1931 = vpack.c.b16 %v1719, %v1715
    %v1932 = vpack.c.b16 %v1720, %v1716
    %v1933 = vpack.c.b16 %v1721, %v1717
    %v1934 = vpack.c.b16 %v1722, %v1718
    %v1935 = vpack.c.b16 %v1727, %v1723
    %v1936 = vpack.c.b16 %v1728, %v1724
    %v1937 = vpack.c.b16 %v1729, %v1725
    %v1938 = vpack.c.b16 %v1730, %v1726
    %v1939 = vpack.c.b16 %v1735, %v1731
    %v1940 = vpack.c.b16 %v1736, %v1732
    %v1941 = vpack.c.b16 %v1737, %v1733
    %v1942 = vpack.c.b16 %v1738, %v1734
    %v1943 = vpack.c.b16 %v1743, %v1739
    %v1944 = vpack.c.b16 %v1744, %v1740
    %v1945 = vpack.c.b16 %v1745, %v1741
    %v1946 = vpack.c.b16 %v1746, %v1742
    %v1947 = vpack.c.b16 %v1751, %v1747
    %v1948 = vpack.c.b16 %v1752, %v1748
    %v1949 = vpack.c.b16 %v1753, %v1749
    %v1950 = vpack.c.b16 %v1754, %v1750
    %v1951 = vpack.c.b16 %v1759, %v1755
    %v1952 = vpack.c.b16 %v1760, %v1756
    %v1953 = vpack.c.b16 %v1761, %v1757
    %v1954 = vpack.c.b16 %v1762, %v1758
    %v1955 = vpack.c.b16 %v1767, %v1763
    %v1956 = vpack.c.b16 %v1768, %v1764
    %v1957 = vpack.c.b16 %v1769, %v1765
    %v1958 = vpack.c.b16 %v1770, %v1766
    %v1959 = vpack.c.b16 %v1775, %v1771
    %v1960 = vpack.c.b16 %v1776, %v1772
    %v1961 = vpack.c.b16 %v1777, %v1773
    %v1962 = vpack.c.b16 %v1778, %v1774
    %v1963 = vpack.c.b16 %v1783, %v1779
    %v1964 = vpack.c.b16 %v1784, %v1780
    %v1965 = vpack.c.b16 %v1785, %v1781
    %v1966 = vpack.c.b16 %v1786, %v1782
    %v1967 = vpack.c.b16 %v1791, %v1787
    %v1968 = vpack.c.b16 %v1792, %v1788
    %v1969 = vpack.c.b16 %v1793, %v1789
    %v1970 = vpack.c.b16 %v1794, %v1790
    %v1971 = vpack.c.b16 %v1799, %v1795
    %v1972 = vpack.c.b16 %v1800, %v1796
    %v1973 = vpack.c.b16 %v1801, %v1797
    %v1974 = vpack.c.b16 %v1802, %v1798
    %v1975 = vpack.c.b16 %v1807, %v1803
    %v1976 = vpack.c.b16 %v1808, %v1804
    %v1977 = vpack.c.b16 %v1809, %v1805
    %v1978 = vpack.c.b16 %v1810, %v1806
    %v1979 = vpack.c.b16 %v1815, %v1811
    %v1980 = vpack.c.b16 %v1816, %v1812
    %v1981 = vpack.c.b16 %v1817, %v1813
    %v1982 = vpack.c.b16 %v1818, %v1814
    %v1983 = vpack.c.b16 %v1823, %v1819
    %v1984 = vpack.c.b16 %v1824, %v1820
    %v1985 = vpack.c.b16 %v1825, %v1821
    %v1986 = vpack.c.b16 %v1826, %v1822
    %v1987 = vpack.c.b16 %v1831, %v1827
    %v1988 = vpack.c.b16 %v1832, %v1828
    %v1989 = vpack.c.b16 %v1833, %v1829
    %v1990 = vpack.c.b16 %v1834, %v1830
    %v1991 = vpack.c.b16 %v1839, %v1835
    %v1992 = vpack.c.b16 %v1840, %v1836
    %v1993 = vpack.c.b16 %v1841, %v1837
    %v1994 = vpack.c.b16 %v1842, %v1838
    %v1995 = vpack.c.b16 %v1847, %v1843
    %v1996 = vpack.c.b16 %v1848, %v1844
    %v1997 = vpack.c.b16 %v1849, %v1845
    %v1998 = vpack.c.b16 %v1850, %v1846
    %v1999 = vpack.c.b16 %v1855, %v1851
    %v2000 = vpack.c.b16 %v1856, %v1852
    %v2001 = vpack.c.b16 %v1857, %v1853
    %v2002 = vpack.c.b16 %v1858, %v1854
    %v2003 = vpack.c.b16 %v1863, %v1859
    %v2004 = vpack.c.b16 %v1864, %v1860
    %v2005 = vpack.c.b16 %v1865, %v1861
    %v2006 = vpack.c.b16 %v1866, %v1862
    %v2007 = vpack.c.b16 %v1871, %v1867
    %v2008 = vpack.c.b16 %v1872, %v1868
    %v2009 = vpack.c.b16 %v1873, %v1869
    %v2010 = vpack.c.b16 %v1874, %v1870
    %v2011 = vpack.c.b16 %v1879, %v1875
    %v2012 = vpack.c.b16 %v1880, %v1876
    %v2013 = vpack.c.b16 %v1881, %v1877
    %v2014 = vpack.c.b16 %v1882, %v1878
    %v2015 = vpack.c.b16 %v1887, %v1883
    %v2016 = vpack.c.b16 %v1888, %v1884
    %v2017 = vpack.c.b16 %v1889, %v1885
    %v2018 = vpack.c.b16 %v1890, %v1886
    %2147 = vmatpush.bf16.msra.mxu0 %v1919
    %2148 = vmatpush.bf16.msra.mxu0 %v1915
    %2149 = vmatpush.bf16.msra.mxu0 %v1911
    %2150 = vmatpush.bf16.msra.mxu0 %v1907
    %2151 = vmatpush.bf16.msra.mxu0 %v1903
    %2152 = vmatpush.bf16.msra.mxu0 %v1899
    %2153 = vmatpush.bf16.msra.mxu0 %v1895
    %2154 = vmatpush.bf16.msra.mxu0 %v1891
    %2155 = vmatmul.bf16.gmra.mxu0 %v1365
    %v2156 = vpop.f32.mrf.mxu0
    %v2157 = vadd.f32 %v1499, %v2156
    %v2158 = vpop.f32.mrf.mxu0
    %2159 = vdwg.mxu0
    %2160 = vmatpush.bf16.msra.mxu0 %v1951
    %2161 = vmatpush.bf16.msra.mxu0 %v1947
    %2162 = vmatpush.bf16.msra.mxu0 %v1943
    %2163 = vmatpush.bf16.msra.mxu0 %v1939
    %2164 = vmatpush.bf16.msra.mxu0 %v1935
    %2165 = vmatpush.bf16.msra.mxu0 %v1931
    %2166 = vmatpush.bf16.msra.mxu0 %v1927
    %2167 = vmatpush.bf16.msra.mxu0 %v1923
    %2168 = vmatmul.bf16.gmra.mxu0 %v1366
    %v2169 = vpop.f32.mrf.mxu0
    %v2170 = vadd.f32 %v2157, %v2169
    %v2171 = vpop.f32.mrf.mxu0
    %2172 = vdwg.mxu0
    %2173 = vmatpush.bf16.msra.mxu0 %v1983
    %2174 = vmatpush.bf16.msra.mxu0 %v1979
    %2175 = vmatpush.bf16.msra.mxu0 %v1975
    %2176 = vmatpush.bf16.msra.mxu0 %v1971
    %2177 = vmatpush.bf16.msra.mxu0 %v1967
    %2178 = vmatpush.bf16.msra.mxu0 %v1963
    %2179 = vmatpush.bf16.msra.mxu0 %v1959
    %2180 = vmatpush.bf16.msra.mxu0 %v1955
    %2181 = vmatmul.bf16.gmra.mxu0 %v1367
    %v2182 = vpop.f32.mrf.mxu0
    %v2183 = vadd.f32 %v2170, %v2182
    %v2184 = vpop.f32.mrf.mxu0
    %2185 = vdwg.mxu0
    %2186 = vmatpush.bf16.msra.mxu0 %v2015
    %2187 = vmatpush.bf16.msra.mxu0 %v2011
    %2188 = vmatpush.bf16.msra.mxu0 %v2007
    %2189 = vmatpush.bf16.msra.mxu0 %v2003
    %2190 = vmatpush.bf16.msra.mxu0 %v1999
    %2191 = vmatpush.bf16.msra.mxu0 %v1995
    %2192 = vmatpush.bf16.msra.mxu0 %v1991
    %2193 = vmatpush.bf16.msra.mxu0 %v1987
    %2194 = vmatmul.bf16.gmra.mxu0 %v1368
    %v2195 = vpop.f32.mrf.mxu0
    %v2196 = vadd.f32 %v2183, %v2195
    %v2197 = vpop.f32.mrf.mxu0
    %2198 = vdwg.mxu0
    %2199 = vmatpush.bf16.msra.mxu0 %v1920
    %2200 = vmatpush.bf16.msra.mxu0 %v1916
    %2201 = vmatpush.bf16.msra.mxu0 %v1912
    %2202 = vmatpush.bf16.msra.mxu0 %v1908
    %2203 = vmatpush.bf16.msra.mxu0 %v1904
    %2204 = vmatpush.bf16.msra.mxu0 %v1900
    %2205 = vmatpush.bf16.msra.mxu0 %v1896
    %2206 = vmatpush.bf16.msra.mxu0 %v1892
    %2207 = vmatmul.bf16.gmra.mxu0 %v1365
    %v2208 = vpop.f32.mrf.mxu0
    %v2209 = vadd.f32 %v1500, %v2208
    %v2210 = vpop.f32.mrf.mxu0
    %2211 = vdwg.mxu0
    %2212 = vmatpush.bf16.msra.mxu0 %v1952
    %2213 = vmatpush.bf16.msra.mxu0 %v1948
    %2214 = vmatpush.bf16.msra.mxu0 %v1944
    %2215 = vmatpush.bf16.msra.mxu0 %v1940
    %2216 = vmatpush.bf16.msra.mxu0 %v1936
    %2217 = vmatpush.bf16.msra.mxu0 %v1932
    %2218 = vmatpush.bf16.msra.mxu0 %v1928
    %2219 = vmatpush.bf16.msra.mxu0 %v1924
    %2220 = vmatmul.bf16.gmra.mxu0 %v1366
    %v2221 = vpop.f32.mrf.mxu0
    %v2222 = vadd.f32 %v2209, %v2221
    %v2223 = vpop.f32.mrf.mxu0
    %2224 = vdwg.mxu0
    %2225 = vmatpush.bf16.msra.mxu0 %v1984
    %2226 = vmatpush.bf16.msra.mxu0 %v1980
    %2227 = vmatpush.bf16.msra.mxu0 %v1976
    %2228 = vmatpush.bf16.msra.mxu0 %v1972
    %2229 = vmatpush.bf16.msra.mxu0 %v1968
    %2230 = vmatpush.bf16.msra.mxu0 %v1964
    %2231 = vmatpush.bf16.msra.mxu0 %v1960
    %2232 = vmatpush.bf16.msra.mxu0 %v1956
    %2233 = vmatmul.bf16.gmra.mxu0 %v1367
    %v2234 = vpop.f32.mrf.mxu0
    %v2235 = vadd.f32 %v2222, %v2234
    %v2236 = vpop.f32.mrf.mxu0
    %2237 = vdwg.mxu0
    %2238 = vmatpush.bf16.msra.mxu0 %v2016
    %2239 = vmatpush.bf16.msra.mxu0 %v2012
    %2240 = vmatpush.bf16.msra.mxu0 %v2008
    %2241 = vmatpush.bf16.msra.mxu0 %v2004
    %2242 = vmatpush.bf16.msra.mxu0 %v2000
    %2243 = vmatpush.bf16.msra.mxu0 %v1996
    %2244 = vmatpush.bf16.msra.mxu0 %v1992
    %2245 = vmatpush.bf16.msra.mxu0 %v1988
    %2246 = vmatmul.bf16.gmra.mxu0 %v1368
    %v2247 = vpop.f32.mrf.mxu0
    %v2248 = vadd.f32 %v2235, %v2247
    %v2249 = vpop.f32.mrf.mxu0
    %2250 = vdwg.mxu0
    %2251 = vmatpush.bf16.msra.mxu0 %v1921
    %2252 = vmatpush.bf16.msra.mxu0 %v1917
    %2253 = vmatpush.bf16.msra.mxu0 %v1913
    %2254 = vmatpush.bf16.msra.mxu0 %v1909
    %2255 = vmatpush.bf16.msra.mxu0 %v1905
    %2256 = vmatpush.bf16.msra.mxu0 %v1901
    %2257 = vmatpush.bf16.msra.mxu0 %v1897
    %2258 = vmatpush.bf16.msra.mxu0 %v1893
    %2259 = vmatmul.bf16.gmra.mxu0 %v1365
    %v2260 = vpop.f32.mrf.mxu0
    %v2261 = vadd.f32 %v1501, %v2260
    %v2262 = vpop.f32.mrf.mxu0
    %2263 = vdwg.mxu0
    %2264 = vmatpush.bf16.msra.mxu0 %v1953
    %2265 = vmatpush.bf16.msra.mxu0 %v1949
    %2266 = vmatpush.bf16.msra.mxu0 %v1945
    %2267 = vmatpush.bf16.msra.mxu0 %v1941
    %2268 = vmatpush.bf16.msra.mxu0 %v1937
    %2269 = vmatpush.bf16.msra.mxu0 %v1933
    %2270 = vmatpush.bf16.msra.mxu0 %v1929
    %2271 = vmatpush.bf16.msra.mxu0 %v1925
    %2272 = vmatmul.bf16.gmra.mxu0 %v1366
    %v2273 = vpop.f32.mrf.mxu0
    %v2274 = vadd.f32 %v2261, %v2273
    %v2275 = vpop.f32.mrf.mxu0
    %2276 = vdwg.mxu0
    %2277 = vmatpush.bf16.msra.mxu0 %v1985
    %2278 = vmatpush.bf16.msra.mxu0 %v1981
    %2279 = vmatpush.bf16.msra.mxu0 %v1977
    %2280 = vmatpush.bf16.msra.mxu0 %v1973
    %2281 = vmatpush.bf16.msra.mxu0 %v1969
    %2282 = vmatpush.bf16.msra.mxu0 %v1965
    %2283 = vmatpush.bf16.msra.mxu0 %v1961
    %2284 = vmatpush.bf16.msra.mxu0 %v1957
    %2285 = vmatmul.bf16.gmra.mxu0 %v1367
    %v2286 = vpop.f32.mrf.mxu0
    %v2287 = vadd.f32 %v2274, %v2286
    %v2288 = vpop.f32.mrf.mxu0
    %2289 = vdwg.mxu0
    %2290 = vmatpush.bf16.msra.mxu0 %v2017
    %2291 = vmatpush.bf16.msra.mxu0 %v2013
    %2292 = vmatpush.bf16.msra.mxu0 %v2009
    %2293 = vmatpush.bf16.msra.mxu0 %v2005
    %2294 = vmatpush.bf16.msra.mxu0 %v2001
    %2295 = vmatpush.bf16.msra.mxu0 %v1997
    %2296 = vmatpush.bf16.msra.mxu0 %v1993
    %2297 = vmatpush.bf16.msra.mxu0 %v1989
    %2298 = vmatmul.bf16.gmra.mxu0 %v1368
    %v2299 = vpop.f32.mrf.mxu0
    %v2300 = vadd.f32 %v2287, %v2299
    %v2301 = vpop.f32.mrf.mxu0
    %2302 = vdwg.mxu0
    %2303 = vmatpush.bf16.msra.mxu0 %v1922
    %2304 = vmatpush.bf16.msra.mxu0 %v1918
    %2305 = vmatpush.bf16.msra.mxu0 %v1914
    %2306 = vmatpush.bf16.msra.mxu0 %v1910
    %2307 = vmatpush.bf16.msra.mxu0 %v1906
    %2308 = vmatpush.bf16.msra.mxu0 %v1902
    %2309 = vmatpush.bf16.msra.mxu0 %v1898
    %2310 = vmatpush.bf16.msra.mxu0 %v1894
    %2311 = vmatmul.bf16.gmra.mxu0 %v1365
    %v2312 = vpop.f32.mrf.mxu0
    %v2313 = vadd.f32 %v1502, %v2312
    %v2314 = vpop.f32.mrf.mxu0
    %2315 = vdwg.mxu0
    %2316 = vmatpush.bf16.msra.mxu0 %v1954
    %2317 = vmatpush.bf16.msra.mxu0 %v1950
    %2318 = vmatpush.bf16.msra.mxu0 %v1946
    %2319 = vmatpush.bf16.msra.mxu0 %v1942
    %2320 = vmatpush.bf16.msra.mxu0 %v1938
    %2321 = vmatpush.bf16.msra.mxu0 %v1934
    %2322 = vmatpush.bf16.msra.mxu0 %v1930
    %2323 = vmatpush.bf16.msra.mxu0 %v1926
    %2324 = vmatmul.bf16.gmra.mxu0 %v1366
    %v2325 = vpop.f32.mrf.mxu0
    %v2326 = vadd.f32 %v2313, %v2325
    %v2327 = vpop.f32.mrf.mxu0
    %2328 = vdwg.mxu0
    %2329 = vmatpush.bf16.msra.mxu0 %v1986
    %2330 = vmatpush.bf16.msra.mxu0 %v1982
    %2331 = vmatpush.bf16.msra.mxu0 %v1978
    %2332 = vmatpush.bf16.msra.mxu0 %v1974
    %2333 = vmatpush.bf16.msra.mxu0 %v1970
    %2334 = vmatpush.bf16.msra.mxu0 %v1966
    %2335 = vmatpush.bf16.msra.mxu0 %v1962
    %2336 = vmatpush.bf16.msra.mxu0 %v1958
    %2337 = vmatmul.bf16.gmra.mxu0 %v1367
    %v2338 = vpop.f32.mrf.mxu0
    %v2339 = vadd.f32 %v2326, %v2338
    %v2340 = vpop.f32.mrf.mxu0
    %2341 = vdwg.mxu0
    %2342 = vmatpush.bf16.msra.mxu0 %v2018
    %2343 = vmatpush.bf16.msra.mxu0 %v2014
    %2344 = vmatpush.bf16.msra.mxu0 %v2010
    %2345 = vmatpush.bf16.msra.mxu0 %v2006
    %2346 = vmatpush.bf16.msra.mxu0 %v2002
    %2347 = vmatpush.bf16.msra.mxu0 %v1998
    %2348 = vmatpush.bf16.msra.mxu0 %v1994
    %2349 = vmatpush.bf16.msra.mxu0 %v1990
    %2350 = vmatmul.bf16.gmra.mxu0 %v1368
    %v2351 = vpop.f32.mrf.mxu0
    %v2352 = vadd.f32 %v2339, %v2351
    %v2353 = vpop.f32.mrf.mxu0
    %2354 = vdwg.mxu0
    %v2355 = vmax.f32 %v2196, 0.0
    %v2356 = vmax.f32 %v2248, 0.0
    %v2357 = vmax.f32 %v2300, 0.0
    %v2358 = vmax.f32 %v2352, 0.0
    %v2359 = vpack.c.bf16 %v2355, %v2355
    %v2360 = vpack.c.bf16 %v2356, %v2356
    %v2361 = vpack.c.bf16 %v2357, %v2357
    %v2362 = vpack.c.bf16 %v2358, %v2358
    %v2363 = vld [vmem:[#allocation11] sm:$0xff]
    %v2364 = vld [vmem:[#allocation11 + $0x8] sm:$0xff]
    %v2365 = vld [vmem:[#allocation11 + $0x10] sm:$0xff]
    %v2366 = vld [vmem:[#allocation11 + $0x18] sm:$0xff]
    %v2367 = vld [vmem:[#allocation11 + $0x20] sm:$0xff]
    %v2368 = vld [vmem:[#allocation11 + $0x28] sm:$0xff]
    %v2369 = vld [vmem:[#allocation11 + $0x30] sm:$0xff]
    %v2370 = vld [vmem:[#allocation11 + $0x38] sm:$0xff]
    %v2371 = vld [vmem:[#allocation11 + $0x40] sm:$0xff]
    %v2372 = vld [vmem:[#allocation11 + $0x48] sm:$0xff]
    %v2373 = vld [vmem:[#allocation11 + $0x50] sm:$0xff]
    %v2374 = vld [vmem:[#allocation11 + $0x58] sm:$0xff]
    %v2375 = vld [vmem:[#allocation11 + $0x60] sm:$0xff]
    %v2376 = vld [vmem:[#allocation11 + $0x68] sm:$0xff]
    %v2377 = vld [vmem:[#allocation11 + $0x70] sm:$0xff]
    %v2378 = vld [vmem:[#allocation11 + $0x78] sm:$0xff]
    %v2379 = vld [vmem:[#allocation11 + $0x80] sm:$0xff]
    %v2380 = vld [vmem:[#allocation11 + $0x88] sm:$0xff]
    %v2381 = vld [vmem:[#allocation11 + $0x90] sm:$0xff]
    %v2382 = vld [vmem:[#allocation11 + $0x98] sm:$0xff]
    %v2383 = vld [vmem:[#allocation11 + $0xa0] sm:$0xff]
    %v2384 = vld [vmem:[#allocation11 + $0xa8] sm:$0xff]
    %v2385 = vld [vmem:[#allocation11 + $0xb0] sm:$0xff]
    %v2386 = vld [vmem:[#allocation11 + $0xb8] sm:$0xff]
    %v2387 = vld [vmem:[#allocation11 + $0xc0] sm:$0xff]
    %v2388 = vld [vmem:[#allocation11 + $0xc8] sm:$0xff]
    %v2389 = vld [vmem:[#allocation11 + $0xd0] sm:$0xff]
    %v2390 = vld [vmem:[#allocation11 + $0xd8] sm:$0xff]
    %v2391 = vld [vmem:[#allocation11 + $0xe0] sm:$0xff]
    %v2392 = vld [vmem:[#allocation11 + $0xe8] sm:$0xff]
    %v2393 = vld [vmem:[#allocation11 + $0xf0] sm:$0xff]
    %v2394 = vld [vmem:[#allocation11 + $0xf8] sm:$0xff]
    %v2395 = vld [vmem:[#allocation11 + $0x100] sm:$0xff]
    %v2396 = vld [vmem:[#allocation11 + $0x108] sm:$0xff]
    %v2397 = vld [vmem:[#allocation11 + $0x110] sm:$0xff]
    %v2398 = vld [vmem:[#allocation11 + $0x118] sm:$0xff]
    %v2399 = vld [vmem:[#allocation11 + $0x120] sm:$0xff]
    %v2400 = vld [vmem:[#allocation11 + $0x128] sm:$0xff]
    %v2401 = vld [vmem:[#allocation11 + $0x130] sm:$0xff]
    %v2402 = vld [vmem:[#allocation11 + $0x138] sm:$0xff]
    %v2403 = vld [vmem:[#allocation11 + $0x140] sm:$0xff]
    %v2404 = vld [vmem:[#allocation11 + $0x148] sm:$0xff]
    %v2405 = vld [vmem:[#allocation11 + $0x150] sm:$0xff]
    %v2406 = vld [vmem:[#allocation11 + $0x158] sm:$0xff]
    %v2407 = vld [vmem:[#allocation11 + $0x160] sm:$0xff]
    %v2408 = vld [vmem:[#allocation11 + $0x168] sm:$0xff]
    %v2409 = vld [vmem:[#allocation11 + $0x170] sm:$0xff]
    %v2410 = vld [vmem:[#allocation11 + $0x178] sm:$0xff]
    %v2411 = vld [vmem:[#allocation11 + $0x180] sm:$0xff]
    %v2412 = vld [vmem:[#allocation11 + $0x188] sm:$0xff]
    %v2413 = vld [vmem:[#allocation11 + $0x190] sm:$0xff]
    %v2414 = vld [vmem:[#allocation11 + $0x198] sm:$0xff]
    %v2415 = vld [vmem:[#allocation11 + $0x1a0] sm:$0xff]
    %v2416 = vld [vmem:[#allocation11 + $0x1a8] sm:$0xff]
    %v2417 = vld [vmem:[#allocation11 + $0x1b0] sm:$0xff]
    %v2418 = vld [vmem:[#allocation11 + $0x1b8] sm:$0xff]
    %v2419 = vld [vmem:[#allocation11 + $0x1c0] sm:$0xff]
    %v2420 = vld [vmem:[#allocation11 + $0x1c8] sm:$0xff]
    %v2421 = vld [vmem:[#allocation11 + $0x1d0] sm:$0xff]
    %v2422 = vld [vmem:[#allocation11 + $0x1d8] sm:$0xff]
    %v2423 = vld [vmem:[#allocation11 + $0x1e0] sm:$0xff]
    %v2424 = vld [vmem:[#allocation11 + $0x1e8] sm:$0xff]
    %v2425 = vld [vmem:[#allocation11 + $0x1f0] sm:$0xff]
    %v2426 = vld [vmem:[#allocation11 + $0x1f8] sm:$0xff]
    %v2427 = vld [vmem:[#allocation11 + $0x200] sm:$0xff]
    %v2428 = vld [vmem:[#allocation11 + $0x208] sm:$0xff]
    %v2429 = vld [vmem:[#allocation11 + $0x210] sm:$0xff]
    %v2430 = vld [vmem:[#allocation11 + $0x218] sm:$0xff]
    %v2431 = vld [vmem:[#allocation11 + $0x220] sm:$0xff]
    %v2432 = vld [vmem:[#allocation11 + $0x228] sm:$0xff]
    %v2433 = vld [vmem:[#allocation11 + $0x230] sm:$0xff]
    %v2434 = vld [vmem:[#allocation11 + $0x238] sm:$0xff]
    %v2435 = vld [vmem:[#allocation11 + $0x240] sm:$0xff]
    %v2436 = vld [vmem:[#allocation11 + $0x248] sm:$0xff]
    %v2437 = vld [vmem:[#allocation11 + $0x250] sm:$0xff]
    %v2438 = vld [vmem:[#allocation11 + $0x258] sm:$0xff]
    %v2439 = vld [vmem:[#allocation11 + $0x260] sm:$0xff]
    %v2440 = vld [vmem:[#allocation11 + $0x268] sm:$0xff]
    %v2441 = vld [vmem:[#allocation11 + $0x270] sm:$0xff]
    %v2442 = vld [vmem:[#allocation11 + $0x278] sm:$0xff]
    %v2443 = vld [vmem:[#allocation11 + $0x280] sm:$0xff]
    %v2444 = vld [vmem:[#allocation11 + $0x288] sm:$0xff]
    %v2445 = vld [vmem:[#allocation11 + $0x290] sm:$0xff]
    %v2446 = vld [vmem:[#allocation11 + $0x298] sm:$0xff]
    %v2447 = vld [vmem:[#allocation11 + $0x2a0] sm:$0xff]
    %v2448 = vld [vmem:[#allocation11 + $0x2a8] sm:$0xff]
    %v2449 = vld [vmem:[#allocation11 + $0x2b0] sm:$0xff]
    %v2450 = vld [vmem:[#allocation11 + $0x2b8] sm:$0xff]
    %v2451 = vld [vmem:[#allocation11 + $0x2c0] sm:$0xff]
    %v2452 = vld [vmem:[#allocation11 + $0x2c8] sm:$0xff]
    %v2453 = vld [vmem:[#allocation11 + $0x2d0] sm:$0xff]
    %v2454 = vld [vmem:[#allocation11 + $0x2d8] sm:$0xff]
    %v2455 = vld [vmem:[#allocation11 + $0x2e0] sm:$0xff]
    %v2456 = vld [vmem:[#allocation11 + $0x2e8] sm:$0xff]
    %v2457 = vld [vmem:[#allocation11 + $0x2f0] sm:$0xff]
    %v2458 = vld [vmem:[#allocation11 + $0x2f8] sm:$0xff]
    %v2459 = vld [vmem:[#allocation11 + $0x300] sm:$0xff]
    %v2460 = vld [vmem:[#allocation11 + $0x308] sm:$0xff]
    %v2461 = vld [vmem:[#allocation11 + $0x310] sm:$0xff]
    %v2462 = vld [vmem:[#allocation11 + $0x318] sm:$0xff]
    %v2463 = vld [vmem:[#allocation11 + $0x320] sm:$0xff]
    %v2464 = vld [vmem:[#allocation11 + $0x328] sm:$0xff]
    %v2465 = vld [vmem:[#allocation11 + $0x330] sm:$0xff]
    %v2466 = vld [vmem:[#allocation11 + $0x338] sm:$0xff]
    %v2467 = vld [vmem:[#allocation11 + $0x340] sm:$0xff]
    %v2468 = vld [vmem:[#allocation11 + $0x348] sm:$0xff]
    %v2469 = vld [vmem:[#allocation11 + $0x350] sm:$0xff]
    %v2470 = vld [vmem:[#allocation11 + $0x358] sm:$0xff]
    %v2471 = vld [vmem:[#allocation11 + $0x360] sm:$0xff]
    %v2472 = vld [vmem:[#allocation11 + $0x368] sm:$0xff]
    %v2473 = vld [vmem:[#allocation11 + $0x370] sm:$0xff]
    %v2474 = vld [vmem:[#allocation11 + $0x378] sm:$0xff]
    %v2475 = vld [vmem:[#allocation11 + $0x380] sm:$0xff]
    %v2476 = vld [vmem:[#allocation11 + $0x388] sm:$0xff]
    %v2477 = vld [vmem:[#allocation11 + $0x390] sm:$0xff]
    %v2478 = vld [vmem:[#allocation11 + $0x398] sm:$0xff]
    %v2479 = vld [vmem:[#allocation11 + $0x3a0] sm:$0xff]
    %v2480 = vld [vmem:[#allocation11 + $0x3a8] sm:$0xff]
    %v2481 = vld [vmem:[#allocation11 + $0x3b0] sm:$0xff]
    %v2482 = vld [vmem:[#allocation11 + $0x3b8] sm:$0xff]
    %v2483 = vld [vmem:[#allocation11 + $0x3c0] sm:$0xff]
    %v2484 = vld [vmem:[#allocation11 + $0x3c8] sm:$0xff]
    %v2485 = vld [vmem:[#allocation11 + $0x3d0] sm:$0xff]
    %v2486 = vld [vmem:[#allocation11 + $0x3d8] sm:$0xff]
    %v2487 = vld [vmem:[#allocation11 + $0x3e0] sm:$0xff]
    %v2488 = vld [vmem:[#allocation11 + $0x3e8] sm:$0xff]
    %v2489 = vld [vmem:[#allocation11 + $0x3f0] sm:$0xff]
    %v2490 = vld [vmem:[#allocation11 + $0x3f8] sm:$0xff]
    %v2491 = vld [vmem:[#allocation13] sm:$0xf]
    %v2493 = vperm.slane %v2491, 0
    %v2494 = vperm.slane %v2491, 1
    %v2495 = vperm.slane %v2491, 2
    %v2496 = vperm.slane %v2491, 3
    %v2629 = vunpack.c.l.b16 %v2363
    %v2630 = vunpack.c.h.b16 %v2363
    %v2631 = vunpack.c.l.b16 %v2364
    %v2632 = vunpack.c.h.b16 %v2364
    %v2633 = vunpack.c.l.b16 %v2365
    %v2634 = vunpack.c.h.b16 %v2365
    %v2635 = vunpack.c.l.b16 %v2366
    %v2636 = vunpack.c.h.b16 %v2366
    %v2637 = vunpack.c.l.b16 %v2367
    %v2638 = vunpack.c.h.b16 %v2367
    %v2639 = vunpack.c.l.b16 %v2368
    %v2640 = vunpack.c.h.b16 %v2368
    %v2641 = vunpack.c.l.b16 %v2369
    %v2642 = vunpack.c.h.b16 %v2369
    %v2643 = vunpack.c.l.b16 %v2370
    %v2644 = vunpack.c.h.b16 %v2370
    %v2645 = vunpack.c.l.b16 %v2371
    %v2646 = vunpack.c.h.b16 %v2371
    %v2647 = vunpack.c.l.b16 %v2372
    %v2648 = vunpack.c.h.b16 %v2372
    %v2649 = vunpack.c.l.b16 %v2373
    %v2650 = vunpack.c.h.b16 %v2373
    %v2651 = vunpack.c.l.b16 %v2374
    %v2652 = vunpack.c.h.b16 %v2374
    %v2653 = vunpack.c.l.b16 %v2375
    %v2654 = vunpack.c.h.b16 %v2375
    %v2655 = vunpack.c.l.b16 %v2376
    %v2656 = vunpack.c.h.b16 %v2376
    %v2657 = vunpack.c.l.b16 %v2377
    %v2658 = vunpack.c.h.b16 %v2377
    %v2659 = vunpack.c.l.b16 %v2378
    %v2660 = vunpack.c.h.b16 %v2378
    %v2661 = vunpack.c.l.b16 %v2379
    %v2662 = vunpack.c.h.b16 %v2379
    %v2663 = vunpack.c.l.b16 %v2380
    %v2664 = vunpack.c.h.b16 %v2380
    %v2665 = vunpack.c.l.b16 %v2381
    %v2666 = vunpack.c.h.b16 %v2381
    %v2667 = vunpack.c.l.b16 %v2382
    %v2668 = vunpack.c.h.b16 %v2382
    %v2669 = vunpack.c.l.b16 %v2383
    %v2670 = vunpack.c.h.b16 %v2383
    %v2671 = vunpack.c.l.b16 %v2384
    %v2672 = vunpack.c.h.b16 %v2384
    %v2673 = vunpack.c.l.b16 %v2385
    %v2674 = vunpack.c.h.b16 %v2385
    %v2675 = vunpack.c.l.b16 %v2386
    %v2676 = vunpack.c.h.b16 %v2386
    %v2677 = vunpack.c.l.b16 %v2387
    %v2678 = vunpack.c.h.b16 %v2387
    %v2679 = vunpack.c.l.b16 %v2388
    %v2680 = vunpack.c.h.b16 %v2388
    %v2681 = vunpack.c.l.b16 %v2389
    %v2682 = vunpack.c.h.b16 %v2389
    %v2683 = vunpack.c.l.b16 %v2390
    %v2684 = vunpack.c.h.b16 %v2390
    %v2685 = vunpack.c.l.b16 %v2391
    %v2686 = vunpack.c.h.b16 %v2391
    %v2687 = vunpack.c.l.b16 %v2392
    %v2688 = vunpack.c.h.b16 %v2392
    %v2689 = vunpack.c.l.b16 %v2393
    %v2690 = vunpack.c.h.b16 %v2393
    %v2691 = vunpack.c.l.b16 %v2394
    %v2692 = vunpack.c.h.b16 %v2394
    %v2693 = vunpack.c.l.b16 %v2395
    %v2694 = vunpack.c.h.b16 %v2395
    %v2695 = vunpack.c.l.b16 %v2396
    %v2696 = vunpack.c.h.b16 %v2396
    %v2697 = vunpack.c.l.b16 %v2397
    %v2698 = vunpack.c.h.b16 %v2397
    %v2699 = vunpack.c.l.b16 %v2398
    %v2700 = vunpack.c.h.b16 %v2398
    %v2701 = vunpack.c.l.b16 %v2399
    %v2702 = vunpack.c.h.b16 %v2399
    %v2703 = vunpack.c.l.b16 %v2400
    %v2704 = vunpack.c.h.b16 %v2400
    %v2705 = vunpack.c.l.b16 %v2401
    %v2706 = vunpack.c.h.b16 %v2401
    %v2707 = vunpack.c.l.b16 %v2402
    %v2708 = vunpack.c.h.b16 %v2402
    %v2709 = vunpack.c.l.b16 %v2403
    %v2710 = vunpack.c.h.b16 %v2403
    %v2711 = vunpack.c.l.b16 %v2404
    %v2712 = vunpack.c.h.b16 %v2404
    %v2713 = vunpack.c.l.b16 %v2405
    %v2714 = vunpack.c.h.b16 %v2405
    %v2715 = vunpack.c.l.b16 %v2406
    %v2716 = vunpack.c.h.b16 %v2406
    %v2717 = vunpack.c.l.b16 %v2407
    %v2718 = vunpack.c.h.b16 %v2407
    %v2719 = vunpack.c.l.b16 %v2408
    %v2720 = vunpack.c.h.b16 %v2408
    %v2721 = vunpack.c.l.b16 %v2409
    %v2722 = vunpack.c.h.b16 %v2409
    %v2723 = vunpack.c.l.b16 %v2410
    %v2724 = vunpack.c.h.b16 %v2410
    %v2725 = vunpack.c.l.b16 %v2411
    %v2726 = vunpack.c.h.b16 %v2411
    %v2727 = vunpack.c.l.b16 %v2412
    %v2728 = vunpack.c.h.b16 %v2412
    %v2729 = vunpack.c.l.b16 %v2413
    %v2730 = vunpack.c.h.b16 %v2413
    %v2731 = vunpack.c.l.b16 %v2414
    %v2732 = vunpack.c.h.b16 %v2414
    %v2733 = vunpack.c.l.b16 %v2415
    %v2734 = vunpack.c.h.b16 %v2415
    %v2735 = vunpack.c.l.b16 %v2416
    %v2736 = vunpack.c.h.b16 %v2416
    %v2737 = vunpack.c.l.b16 %v2417
    %v2738 = vunpack.c.h.b16 %v2417
    %v2739 = vunpack.c.l.b16 %v2418
    %v2740 = vunpack.c.h.b16 %v2418
    %v2741 = vunpack.c.l.b16 %v2419
    %v2742 = vunpack.c.h.b16 %v2419
    %v2743 = vunpack.c.l.b16 %v2420
    %v2744 = vunpack.c.h.b16 %v2420
    %v2745 = vunpack.c.l.b16 %v2421
    %v2746 = vunpack.c.h.b16 %v2421
    %v2747 = vunpack.c.l.b16 %v2422
    %v2748 = vunpack.c.h.b16 %v2422
    %v2749 = vunpack.c.l.b16 %v2423
    %v2750 = vunpack.c.h.b16 %v2423
    %v2751 = vunpack.c.l.b16 %v2424
    %v2752 = vunpack.c.h.b16 %v2424
    %v2753 = vunpack.c.l.b16 %v2425
    %v2754 = vunpack.c.h.b16 %v2425
    %v2755 = vunpack.c.l.b16 %v2426
    %v2756 = vunpack.c.h.b16 %v2426
    %v2757 = vunpack.c.l.b16 %v2427
    %v2758 = vunpack.c.h.b16 %v2427
    %v2759 = vunpack.c.l.b16 %v2428
    %v2760 = vunpack.c.h.b16 %v2428
    %v2761 = vunpack.c.l.b16 %v2429
    %v2762 = vunpack.c.h.b16 %v2429
    %v2763 = vunpack.c.l.b16 %v2430
    %v2764 = vunpack.c.h.b16 %v2430
    %v2765 = vunpack.c.l.b16 %v2431
    %v2766 = vunpack.c.h.b16 %v2431
    %v2767 = vunpack.c.l.b16 %v2432
    %v2768 = vunpack.c.h.b16 %v2432
    %v2769 = vunpack.c.l.b16 %v2433
    %v2770 = vunpack.c.h.b16 %v2433
    %v2771 = vunpack.c.l.b16 %v2434
    %v2772 = vunpack.c.h.b16 %v2434
    %v2773 = vunpack.c.l.b16 %v2435
    %v2774 = vunpack.c.h.b16 %v2435
    %v2775 = vunpack.c.l.b16 %v2436
    %v2776 = vunpack.c.h.b16 %v2436
    %v2777 = vunpack.c.l.b16 %v2437
    %v2778 = vunpack.c.h.b16 %v2437
    %v2779 = vunpack.c.l.b16 %v2438
    %v2780 = vunpack.c.h.b16 %v2438
    %v2781 = vunpack.c.l.b16 %v2439
    %v2782 = vunpack.c.h.b16 %v2439
    %v2783 = vunpack.c.l.b16 %v2440
    %v2784 = vunpack.c.h.b16 %v2440
    %v2785 = vunpack.c.l.b16 %v2441
    %v2786 = vunpack.c.h.b16 %v2441
    %v2787 = vunpack.c.l.b16 %v2442
    %v2788 = vunpack.c.h.b16 %v2442
    %v2789 = vunpack.c.l.b16 %v2443
    %v2790 = vunpack.c.h.b16 %v2443
    %v2791 = vunpack.c.l.b16 %v2444
    %v2792 = vunpack.c.h.b16 %v2444
    %v2793 = vunpack.c.l.b16 %v2445
    %v2794 = vunpack.c.h.b16 %v2445
    %v2795 = vunpack.c.l.b16 %v2446
    %v2796 = vunpack.c.h.b16 %v2446
    %v2797 = vunpack.c.l.b16 %v2447
    %v2798 = vunpack.c.h.b16 %v2447
    %v2799 = vunpack.c.l.b16 %v2448
    %v2800 = vunpack.c.h.b16 %v2448
    %v2801 = vunpack.c.l.b16 %v2449
    %v2802 = vunpack.c.h.b16 %v2449
    %v2803 = vunpack.c.l.b16 %v2450
    %v2804 = vunpack.c.h.b16 %v2450
    %v2805 = vunpack.c.l.b16 %v2451
    %v2806 = vunpack.c.h.b16 %v2451
    %v2807 = vunpack.c.l.b16 %v2452
    %v2808 = vunpack.c.h.b16 %v2452
    %v2809 = vunpack.c.l.b16 %v2453
    %v2810 = vunpack.c.h.b16 %v2453
    %v2811 = vunpack.c.l.b16 %v2454
    %v2812 = vunpack.c.h.b16 %v2454
    %v2813 = vunpack.c.l.b16 %v2455
    %v2814 = vunpack.c.h.b16 %v2455
    %v2815 = vunpack.c.l.b16 %v2456
    %v2816 = vunpack.c.h.b16 %v2456
    %v2817 = vunpack.c.l.b16 %v2457
    %v2818 = vunpack.c.h.b16 %v2457
    %v2819 = vunpack.c.l.b16 %v2458
    %v2820 = vunpack.c.h.b16 %v2458
    %v2821 = vunpack.c.l.b16 %v2459
    %v2822 = vunpack.c.h.b16 %v2459
    %v2823 = vunpack.c.l.b16 %v2460
    %v2824 = vunpack.c.h.b16 %v2460
    %v2825 = vunpack.c.l.b16 %v2461
    %v2826 = vunpack.c.h.b16 %v2461
    %v2827 = vunpack.c.l.b16 %v2462
    %v2828 = vunpack.c.h.b16 %v2462
    %v2829 = vunpack.c.l.b16 %v2463
    %v2830 = vunpack.c.h.b16 %v2463
    %v2831 = vunpack.c.l.b16 %v2464
    %v2832 = vunpack.c.h.b16 %v2464
    %v2833 = vunpack.c.l.b16 %v2465
    %v2834 = vunpack.c.h.b16 %v2465
    %v2835 = vunpack.c.l.b16 %v2466
    %v2836 = vunpack.c.h.b16 %v2466
    %v2837 = vunpack.c.l.b16 %v2467
    %v2838 = vunpack.c.h.b16 %v2467
    %v2839 = vunpack.c.l.b16 %v2468
    %v2840 = vunpack.c.h.b16 %v2468
    %v2841 = vunpack.c.l.b16 %v2469
    %v2842 = vunpack.c.h.b16 %v2469
    %v2843 = vunpack.c.l.b16 %v2470
    %v2844 = vunpack.c.h.b16 %v2470
    %v2845 = vunpack.c.l.b16 %v2471
    %v2846 = vunpack.c.h.b16 %v2471
    %v2847 = vunpack.c.l.b16 %v2472
    %v2848 = vunpack.c.h.b16 %v2472
    %v2849 = vunpack.c.l.b16 %v2473
    %v2850 = vunpack.c.h.b16 %v2473
    %v2851 = vunpack.c.l.b16 %v2474
    %v2852 = vunpack.c.h.b16 %v2474
    %v2853 = vunpack.c.l.b16 %v2475
    %v2854 = vunpack.c.h.b16 %v2475
    %v2855 = vunpack.c.l.b16 %v2476
    %v2856 = vunpack.c.h.b16 %v2476
    %v2857 = vunpack.c.l.b16 %v2477
    %v2858 = vunpack.c.h.b16 %v2477
    %v2859 = vunpack.c.l.b16 %v2478
    %v2860 = vunpack.c.h.b16 %v2478
    %v2861 = vunpack.c.l.b16 %v2479
    %v2862 = vunpack.c.h.b16 %v2479
    %v2863 = vunpack.c.l.b16 %v2480
    %v2864 = vunpack.c.h.b16 %v2480
    %v2865 = vunpack.c.l.b16 %v2481
    %v2866 = vunpack.c.h.b16 %v2481
    %v2867 = vunpack.c.l.b16 %v2482
    %v2868 = vunpack.c.h.b16 %v2482
    %v2869 = vunpack.c.l.b16 %v2483
    %v2870 = vunpack.c.h.b16 %v2483
    %v2871 = vunpack.c.l.b16 %v2484
    %v2872 = vunpack.c.h.b16 %v2484
    %v2873 = vunpack.c.l.b16 %v2485
    %v2874 = vunpack.c.h.b16 %v2485
    %v2875 = vunpack.c.l.b16 %v2486
    %v2876 = vunpack.c.h.b16 %v2486
    %v2877 = vunpack.c.l.b16 %v2487
    %v2878 = vunpack.c.h.b16 %v2487
    %v2879 = vunpack.c.l.b16 %v2488
    %v2880 = vunpack.c.h.b16 %v2488
    %v2881 = vunpack.c.l.b16 %v2489
    %v2882 = vunpack.c.h.b16 %v2489
    %v2883 = vunpack.c.l.b16 %v2490
    %v2884 = vunpack.c.h.b16 %v2490
    %v2885 = vpack.c.b16 %v2633, %v2629
    %v2886 = vpack.c.b16 %v2634, %v2630
    %v2887 = vpack.c.b16 %v2635, %v2631
    %v2888 = vpack.c.b16 %v2636, %v2632
    %v2889 = vpack.c.b16 %v2641, %v2637
    %v2890 = vpack.c.b16 %v2642, %v2638
    %v2891 = vpack.c.b16 %v2643, %v2639
    %v2892 = vpack.c.b16 %v2644, %v2640
    %v2893 = vpack.c.b16 %v2649, %v2645
    %v2894 = vpack.c.b16 %v2650, %v2646
    %v2895 = vpack.c.b16 %v2651, %v2647
    %v2896 = vpack.c.b16 %v2652, %v2648
    %v2897 = vpack.c.b16 %v2657, %v2653
    %v2898 = vpack.c.b16 %v2658, %v2654
    %v2899 = vpack.c.b16 %v2659, %v2655
    %v2900 = vpack.c.b16 %v2660, %v2656
    %v2901 = vpack.c.b16 %v2665, %v2661
    %v2902 = vpack.c.b16 %v2666, %v2662
    %v2903 = vpack.c.b16 %v2667, %v2663
    %v2904 = vpack.c.b16 %v2668, %v2664
    %v2905 = vpack.c.b16 %v2673, %v2669
    %v2906 = vpack.c.b16 %v2674, %v2670
    %v2907 = vpack.c.b16 %v2675, %v2671
    %v2908 = vpack.c.b16 %v2676, %v2672
    %v2909 = vpack.c.b16 %v2681, %v2677
    %v2910 = vpack.c.b16 %v2682, %v2678
    %v2911 = vpack.c.b16 %v2683, %v2679
    %v2912 = vpack.c.b16 %v2684, %v2680
    %v2913 = vpack.c.b16 %v2689, %v2685
    %v2914 = vpack.c.b16 %v2690, %v2686
    %v2915 = vpack.c.b16 %v2691, %v2687
    %v2916 = vpack.c.b16 %v2692, %v2688
    %v2917 = vpack.c.b16 %v2697, %v2693
    %v2918 = vpack.c.b16 %v2698, %v2694
    %v2919 = vpack.c.b16 %v2699, %v2695
    %v2920 = vpack.c.b16 %v2700, %v2696
    %v2921 = vpack.c.b16 %v2705, %v2701
    %v2922 = vpack.c.b16 %v2706, %v2702
    %v2923 = vpack.c.b16 %v2707, %v2703
    %v2924 = vpack.c.b16 %v2708, %v2704
    %v2925 = vpack.c.b16 %v2713, %v2709
    %v2926 = vpack.c.b16 %v2714, %v2710
    %v2927 = vpack.c.b16 %v2715, %v2711
    %v2928 = vpack.c.b16 %v2716, %v2712
    %v2929 = vpack.c.b16 %v2721, %v2717
    %v2930 = vpack.c.b16 %v2722, %v2718
    %v2931 = vpack.c.b16 %v2723, %v2719
    %v2932 = vpack.c.b16 %v2724, %v2720
    %v2933 = vpack.c.b16 %v2729, %v2725
    %v2934 = vpack.c.b16 %v2730, %v2726
    %v2935 = vpack.c.b16 %v2731, %v2727
    %v2936 = vpack.c.b16 %v2732, %v2728
    %v2937 = vpack.c.b16 %v2737, %v2733
    %v2938 = vpack.c.b16 %v2738, %v2734
    %v2939 = vpack.c.b16 %v2739, %v2735
    %v2940 = vpack.c.b16 %v2740, %v2736
    %v2941 = vpack.c.b16 %v2745, %v2741
    %v2942 = vpack.c.b16 %v2746, %v2742
    %v2943 = vpack.c.b16 %v2747, %v2743
    %v2944 = vpack.c.b16 %v2748, %v2744
    %v2945 = vpack.c.b16 %v2753, %v2749
    %v2946 = vpack.c.b16 %v2754, %v2750
    %v2947 = vpack.c.b16 %v2755, %v2751
    %v2948 = vpack.c.b16 %v2756, %v2752
    %v2949 = vpack.c.b16 %v2761, %v2757
    %v2950 = vpack.c.b16 %v2762, %v2758
    %v2951 = vpack.c.b16 %v2763, %v2759
    %v2952 = vpack.c.b16 %v2764, %v2760
    %v2953 = vpack.c.b16 %v2769, %v2765
    %v2954 = vpack.c.b16 %v2770, %v2766
    %v2955 = vpack.c.b16 %v2771, %v2767
    %v2956 = vpack.c.b16 %v2772, %v2768
    %v2957 = vpack.c.b16 %v2777, %v2773
    %v2958 = vpack.c.b16 %v2778, %v2774
    %v2959 = vpack.c.b16 %v2779, %v2775
    %v2960 = vpack.c.b16 %v2780, %v2776
    %v2961 = vpack.c.b16 %v2785, %v2781
    %v2962 = vpack.c.b16 %v2786, %v2782
    %v2963 = vpack.c.b16 %v2787, %v2783
    %v2964 = vpack.c.b16 %v2788, %v2784
    %v2965 = vpack.c.b16 %v2793, %v2789
    %v2966 = vpack.c.b16 %v2794, %v2790
    %v2967 = vpack.c.b16 %v2795, %v2791
    %v2968 = vpack.c.b16 %v2796, %v2792
    %v2969 = vpack.c.b16 %v2801, %v2797
    %v2970 = vpack.c.b16 %v2802, %v2798
    %v2971 = vpack.c.b16 %v2803, %v2799
    %v2972 = vpack.c.b16 %v2804, %v2800
    %v2973 = vpack.c.b16 %v2809, %v2805
    %v2974 = vpack.c.b16 %v2810, %v2806
    %v2975 = vpack.c.b16 %v2811, %v2807
    %v2976 = vpack.c.b16 %v2812, %v2808
    %v2977 = vpack.c.b16 %v2817, %v2813
    %v2978 = vpack.c.b16 %v2818, %v2814
    %v2979 = vpack.c.b16 %v2819, %v2815
    %v2980 = vpack.c.b16 %v2820, %v2816
    %v2981 = vpack.c.b16 %v2825, %v2821
    %v2982 = vpack.c.b16 %v2826, %v2822
    %v2983 = vpack.c.b16 %v2827, %v2823
    %v2984 = vpack.c.b16 %v2828, %v2824
    %v2985 = vpack.c.b16 %v2833, %v2829
    %v2986 = vpack.c.b16 %v2834, %v2830
    %v2987 = vpack.c.b16 %v2835, %v2831
    %v2988 = vpack.c.b16 %v2836, %v2832
    %v2989 = vpack.c.b16 %v2841, %v2837
    %v2990 = vpack.c.b16 %v2842, %v2838
    %v2991 = vpack.c.b16 %v2843, %v2839
    %v2992 = vpack.c.b16 %v2844, %v2840
    %v2993 = vpack.c.b16 %v2849, %v2845
    %v2994 = vpack.c.b16 %v2850, %v2846
    %v2995 = vpack.c.b16 %v2851, %v2847
    %v2996 = vpack.c.b16 %v2852, %v2848
    %v2997 = vpack.c.b16 %v2857, %v2853
    %v2998 = vpack.c.b16 %v2858, %v2854
    %v2999 = vpack.c.b16 %v2859, %v2855
    %v3000 = vpack.c.b16 %v2860, %v2856
    %v3001 = vpack.c.b16 %v2865, %v2861
    %v3002 = vpack.c.b16 %v2866, %v2862
    %v3003 = vpack.c.b16 %v2867, %v2863
    %v3004 = vpack.c.b16 %v2868, %v2864
    %v3005 = vpack.c.b16 %v2873, %v2869
    %v3006 = vpack.c.b16 %v2874, %v2870
    %v3007 = vpack.c.b16 %v2875, %v2871
    %v3008 = vpack.c.b16 %v2876, %v2872
    %v3009 = vpack.c.b16 %v2881, %v2877
    %v3010 = vpack.c.b16 %v2882, %v2878
    %v3011 = vpack.c.b16 %v2883, %v2879
    %v3012 = vpack.c.b16 %v2884, %v2880
    %3141 = vmatpush.bf16.msra.mxu0 %v2913
    %3142 = vmatpush.bf16.msra.mxu0 %v2909
    %3143 = vmatpush.bf16.msra.mxu0 %v2905
    %3144 = vmatpush.bf16.msra.mxu0 %v2901
    %3145 = vmatpush.bf16.msra.mxu0 %v2897
    %3146 = vmatpush.bf16.msra.mxu0 %v2893
    %3147 = vmatpush.bf16.msra.mxu0 %v2889
    %3148 = vmatpush.bf16.msra.mxu0 %v2885
    %3149 = vmatmul.bf16.gmra.mxu0 %v2359
    %v3150 = vpop.f32.mrf.mxu0
    %v3151 = vadd.f32 %v2493, %v3150
    %v3152 = vpop.f32.mrf.mxu0
    %3153 = vdwg.mxu0
    %3154 = vmatpush.bf16.msra.mxu0 %v2945
    %3155 = vmatpush.bf16.msra.mxu0 %v2941
    %3156 = vmatpush.bf16.msra.mxu0 %v2937
    %3157 = vmatpush.bf16.msra.mxu0 %v2933
    %3158 = vmatpush.bf16.msra.mxu0 %v2929
    %3159 = vmatpush.bf16.msra.mxu0 %v2925
    %3160 = vmatpush.bf16.msra.mxu0 %v2921
    %3161 = vmatpush.bf16.msra.mxu0 %v2917
    %3162 = vmatmul.bf16.gmra.mxu0 %v2360
    %v3163 = vpop.f32.mrf.mxu0
    %v3164 = vadd.f32 %v3151, %v3163
    %v3165 = vpop.f32.mrf.mxu0
    %3166 = vdwg.mxu0
    %3167 = vmatpush.bf16.msra.mxu0 %v2977
    %3168 = vmatpush.bf16.msra.mxu0 %v2973
    %3169 = vmatpush.bf16.msra.mxu0 %v2969
    %3170 = vmatpush.bf16.msra.mxu0 %v2965
    %3171 = vmatpush.bf16.msra.mxu0 %v2961
    %3172 = vmatpush.bf16.msra.mxu0 %v2957
    %3173 = vmatpush.bf16.msra.mxu0 %v2953
    %3174 = vmatpush.bf16.msra.mxu0 %v2949
    %3175 = vmatmul.bf16.gmra.mxu0 %v2361
    %v3176 = vpop.f32.mrf.mxu0
    %v3177 = vadd.f32 %v3164, %v3176
    %v3178 = vpop.f32.mrf.mxu0
    %3179 = vdwg.mxu0
    %3180 = vmatpush.bf16.msra.mxu0 %v3009
    %3181 = vmatpush.bf16.msra.mxu0 %v3005
    %3182 = vmatpush.bf16.msra.mxu0 %v3001
    %3183 = vmatpush.bf16.msra.mxu0 %v2997
    %3184 = vmatpush.bf16.msra.mxu0 %v2993
    %3185 = vmatpush.bf16.msra.mxu0 %v2989
    %3186 = vmatpush.bf16.msra.mxu0 %v2985
    %3187 = vmatpush.bf16.msra.mxu0 %v2981
    %3188 = vmatmul.bf16.gmra.mxu0 %v2362
    %v3189 = vpop.f32.mrf.mxu0
    %v3190 = vadd.f32 %v3177, %v3189
    %v3191 = vpop.f32.mrf.mxu0
    %3192 = vdwg.mxu0
    %3193 = vmatpush.bf16.msra.mxu0 %v2914
    %3194 = vmatpush.bf16.msra.mxu0 %v2910
    %3195 = vmatpush.bf16.msra.mxu0 %v2906
    %3196 = vmatpush.bf16.msra.mxu0 %v2902
    %3197 = vmatpush.bf16.msra.mxu0 %v2898
    %3198 = vmatpush.bf16.msra.mxu0 %v2894
    %3199 = vmatpush.bf16.msra.mxu0 %v2890
    %3200 = vmatpush.bf16.msra.mxu0 %v2886
    %3201 = vmatmul.bf16.gmra.mxu0 %v2359
    %v3202 = vpop.f32.mrf.mxu0
    %v3203 = vadd.f32 %v2494, %v3202
    %v3204 = vpop.f32.mrf.mxu0
    %3205 = vdwg.mxu0
    %3206 = vmatpush.bf16.msra.mxu0 %v2946
    %3207 = vmatpush.bf16.msra.mxu0 %v2942
    %3208 = vmatpush.bf16.msra.mxu0 %v2938
    %3209 = vmatpush.bf16.msra.mxu0 %v2934
    %3210 = vmatpush.bf16.msra.mxu0 %v2930
    %3211 = vmatpush.bf16.msra.mxu0 %v2926
    %3212 = vmatpush.bf16.msra.mxu0 %v2922
    %3213 = vmatpush.bf16.msra.mxu0 %v2918
    %3214 = vmatmul.bf16.gmra.mxu0 %v2360
    %v3215 = vpop.f32.mrf.mxu0
    %v3216 = vadd.f32 %v3203, %v3215
    %v3217 = vpop.f32.mrf.mxu0
    %3218 = vdwg.mxu0
    %3219 = vmatpush.bf16.msra.mxu0 %v2978
    %3220 = vmatpush.bf16.msra.mxu0 %v2974
    %3221 = vmatpush.bf16.msra.mxu0 %v2970
    %3222 = vmatpush.bf16.msra.mxu0 %v2966
    %3223 = vmatpush.bf16.msra.mxu0 %v2962
    %3224 = vmatpush.bf16.msra.mxu0 %v2958
    %3225 = vmatpush.bf16.msra.mxu0 %v2954
    %3226 = vmatpush.bf16.msra.mxu0 %v2950
    %3227 = vmatmul.bf16.gmra.mxu0 %v2361
    %v3228 = vpop.f32.mrf.mxu0
    %v3229 = vadd.f32 %v3216, %v3228
    %v3230 = vpop.f32.mrf.mxu0
    %3231 = vdwg.mxu0
    %3232 = vmatpush.bf16.msra.mxu0 %v3010
    %3233 = vmatpush.bf16.msra.mxu0 %v3006
    %3234 = vmatpush.bf16.msra.mxu0 %v3002
    %3235 = vmatpush.bf16.msra.mxu0 %v2998
    %3236 = vmatpush.bf16.msra.mxu0 %v2994
    %3237 = vmatpush.bf16.msra.mxu0 %v2990
    %3238 = vmatpush.bf16.msra.mxu0 %v2986
    %3239 = vmatpush.bf16.msra.mxu0 %v2982
    %3240 = vmatmul.bf16.gmra.mxu0 %v2362
    %v3241 = vpop.f32.mrf.mxu0
    %v3242 = vadd.f32 %v3229, %v3241
    %v3243 = vpop.f32.mrf.mxu0
    %3244 = vdwg.mxu0
    %3245 = vmatpush.bf16.msra.mxu0 %v2915
    %3246 = vmatpush.bf16.msra.mxu0 %v2911
    %3247 = vmatpush.bf16.msra.mxu0 %v2907
    %3248 = vmatpush.bf16.msra.mxu0 %v2903
    %3249 = vmatpush.bf16.msra.mxu0 %v2899
    %3250 = vmatpush.bf16.msra.mxu0 %v2895
    %3251 = vmatpush.bf16.msra.mxu0 %v2891
    %3252 = vmatpush.bf16.msra.mxu0 %v2887
    %3253 = vmatmul.bf16.gmra.mxu0 %v2359
    %v3254 = vpop.f32.mrf.mxu0
    %v3255 = vadd.f32 %v2495, %v3254
    %v3256 = vpop.f32.mrf.mxu0
    %3257 = vdwg.mxu0
    %3258 = vmatpush.bf16.msra.mxu0 %v2947
    %3259 = vmatpush.bf16.msra.mxu0 %v2943
    %3260 = vmatpush.bf16.msra.mxu0 %v2939
    %3261 = vmatpush.bf16.msra.mxu0 %v2935
    %3262 = vmatpush.bf16.msra.mxu0 %v2931
    %3263 = vmatpush.bf16.msra.mxu0 %v2927
    %3264 = vmatpush.bf16.msra.mxu0 %v2923
    %3265 = vmatpush.bf16.msra.mxu0 %v2919
    %3266 = vmatmul.bf16.gmra.mxu0 %v2360
    %v3267 = vpop.f32.mrf.mxu0
    %v3268 = vadd.f32 %v3255, %v3267
    %v3269 = vpop.f32.mrf.mxu0
    %3270 = vdwg.mxu0
    %3271 = vmatpush.bf16.msra.mxu0 %v2979
    %3272 = vmatpush.bf16.msra.mxu0 %v2975
    %3273 = vmatpush.bf16.msra.mxu0 %v2971
    %3274 = vmatpush.bf16.msra.mxu0 %v2967
    %3275 = vmatpush.bf16.msra.mxu0 %v2963
    %3276 = vmatpush.bf16.msra.mxu0 %v2959
    %3277 = vmatpush.bf16.msra.mxu0 %v2955
    %3278 = vmatpush.bf16.msra.mxu0 %v2951
    %3279 = vmatmul.bf16.gmra.mxu0 %v2361
    %v3280 = vpop.f32.mrf.mxu0
    %v3281 = vadd.f32 %v3268, %v3280
    %v3282 = vpop.f32.mrf.mxu0
    %3283 = vdwg.mxu0
    %3284 = vmatpush.bf16.msra.mxu0 %v3011
    %3285 = vmatpush.bf16.msra.mxu0 %v3007
    %3286 = vmatpush.bf16.msra.mxu0 %v3003
    %3287 = vmatpush.bf16.msra.mxu0 %v2999
    %3288 = vmatpush.bf16.msra.mxu0 %v2995
    %3289 = vmatpush.bf16.msra.mxu0 %v2991
    %3290 = vmatpush.bf16.msra.mxu0 %v2987
    %3291 = vmatpush.bf16.msra.mxu0 %v2983
    %3292 = vmatmul.bf16.gmra.mxu0 %v2362
    %v3293 = vpop.f32.mrf.mxu0
    %v3294 = vadd.f32 %v3281, %v3293
    %v3295 = vpop.f32.mrf.mxu0
    %3296 = vdwg.mxu0
    %3297 = vmatpush.bf16.msra.mxu0 %v2916
    %3298 = vmatpush.bf16.msra.mxu0 %v2912
    %3299 = vmatpush.bf16.msra.mxu0 %v2908
    %3300 = vmatpush.bf16.msra.mxu0 %v2904
    %3301 = vmatpush.bf16.msra.mxu0 %v2900
    %3302 = vmatpush.bf16.msra.mxu0 %v2896
    %3303 = vmatpush.bf16.msra.mxu0 %v2892
    %3304 = vmatpush.bf16.msra.mxu0 %v2888
    %3305 = vmatmul.bf16.gmra.mxu0 %v2359
    %v3306 = vpop.f32.mrf.mxu0
    %v3307 = vadd.f32 %v2496, %v3306
    %v3308 = vpop.f32.mrf.mxu0
    %3309 = vdwg.mxu0
    %3310 = vmatpush.bf16.msra.mxu0 %v2948
    %3311 = vmatpush.bf16.msra.mxu0 %v2944
    %3312 = vmatpush.bf16.msra.mxu0 %v2940
    %3313 = vmatpush.bf16.msra.mxu0 %v2936
    %3314 = vmatpush.bf16.msra.mxu0 %v2932
    %3315 = vmatpush.bf16.msra.mxu0 %v2928
    %3316 = vmatpush.bf16.msra.mxu0 %v2924
    %3317 = vmatpush.bf16.msra.mxu0 %v2920
    %3318 = vmatmul.bf16.gmra.mxu0 %v2360
    %v3319 = vpop.f32.mrf.mxu0
    %v3320 = vadd.f32 %v3307, %v3319
    %v3321 = vpop.f32.mrf.mxu0
    %3322 = vdwg.mxu0
    %3323 = vmatpush.bf16.msra.mxu0 %v2980
    %3324 = vmatpush.bf16.msra.mxu0 %v2976
    %3325 = vmatpush.bf16.msra.mxu0 %v2972
    %3326 = vmatpush.bf16.msra.mxu0 %v2968
    %3327 = vmatpush.bf16.msra.mxu0 %v2964
    %3328 = vmatpush.bf16.msra.mxu0 %v2960
    %3329 = vmatpush.bf16.msra.mxu0 %v2956
    %3330 = vmatpush.bf16.msra.mxu0 %v2952
    %3331 = vmatmul.bf16.gmra.mxu0 %v2361
    %v3332 = vpop.f32.mrf.mxu0
    %v3333 = vadd.f32 %v3320, %v3332
    %v3334 = vpop.f32.mrf.mxu0
    %3335 = vdwg.mxu0
    %3336 = vmatpush.bf16.msra.mxu0 %v3012
    %3337 = vmatpush.bf16.msra.mxu0 %v3008
    %3338 = vmatpush.bf16.msra.mxu0 %v3004
    %3339 = vmatpush.bf16.msra.mxu0 %v3000
    %3340 = vmatpush.bf16.msra.mxu0 %v2996
    %3341 = vmatpush.bf16.msra.mxu0 %v2992
    %3342 = vmatpush.bf16.msra.mxu0 %v2988
    %3343 = vmatpush.bf16.msra.mxu0 %v2984
    %3344 = vmatmul.bf16.gmra.mxu0 %v2362
    %v3345 = vpop.f32.mrf.mxu0
    %v3346 = vadd.f32 %v3333, %v3345
    %v3347 = vpop.f32.mrf.mxu0
    %3348 = vdwg.mxu0
    %v3349 = vmax.f32 %v3190, 0.0
    %v3350 = vmax.f32 %v3242, 0.0
    %v3351 = vmax.f32 %v3294, 0.0
    %v3352 = vmax.f32 %v3346, 0.0
    %v3353 = vpack.c.bf16 %v3349, %v3349
    %v3354 = vpack.c.bf16 %v3350, %v3350
    %v3355 = vpack.c.bf16 %v3351, %v3351
    %v3356 = vpack.c.bf16 %v3352, %v3352
    %v3357 = vld [vmem:[#allocation14] sm:$0xff]
    %v3358 = vld [vmem:[#allocation14 + $0x8] sm:$0xff]
    %v3359 = vld [vmem:[#allocation14 + $0x10] sm:$0xff]
    %v3360 = vld [vmem:[#allocation14 + $0x18] sm:$0xff]
    %v3361 = vld [vmem:[#allocation14 + $0x20] sm:$0xff]
    %v3362 = vld [vmem:[#allocation14 + $0x28] sm:$0xff]
    %v3363 = vld [vmem:[#allocation14 + $0x30] sm:$0xff]
    %v3364 = vld [vmem:[#allocation14 + $0x38] sm:$0xff]
    %v3365 = vld [vmem:[#allocation14 + $0x40] sm:$0xff]
    %v3366 = vld [vmem:[#allocation14 + $0x48] sm:$0xff]
    %v3367 = vld [vmem:[#allocation14 + $0x50] sm:$0xff]
    %v3368 = vld [vmem:[#allocation14 + $0x58] sm:$0xff]
    %v3369 = vld [vmem:[#allocation14 + $0x60] sm:$0xff]
    %v3370 = vld [vmem:[#allocation14 + $0x68] sm:$0xff]
    %v3371 = vld [vmem:[#allocation14 + $0x70] sm:$0xff]
    %v3372 = vld [vmem:[#allocation14 + $0x78] sm:$0xff]
    %v3373 = vld [vmem:[#allocation14 + $0x80] sm:$0xff]
    %v3374 = vld [vmem:[#allocation14 + $0x88] sm:$0xff]
    %v3375 = vld [vmem:[#allocation14 + $0x90] sm:$0xff]
    %v3376 = vld [vmem:[#allocation14 + $0x98] sm:$0xff]
    %v3377 = vld [vmem:[#allocation14 + $0xa0] sm:$0xff]
    %v3378 = vld [vmem:[#allocation14 + $0xa8] sm:$0xff]
    %v3379 = vld [vmem:[#allocation14 + $0xb0] sm:$0xff]
    %v3380 = vld [vmem:[#allocation14 + $0xb8] sm:$0xff]
    %v3381 = vld [vmem:[#allocation14 + $0xc0] sm:$0xff]
    %v3382 = vld [vmem:[#allocation14 + $0xc8] sm:$0xff]
    %v3383 = vld [vmem:[#allocation14 + $0xd0] sm:$0xff]
    %v3384 = vld [vmem:[#allocation14 + $0xd8] sm:$0xff]
    %v3385 = vld [vmem:[#allocation14 + $0xe0] sm:$0xff]
    %v3386 = vld [vmem:[#allocation14 + $0xe8] sm:$0xff]
    %v3387 = vld [vmem:[#allocation14 + $0xf0] sm:$0xff]
    %v3388 = vld [vmem:[#allocation14 + $0xf8] sm:$0xff]
    %v3389 = vld [vmem:[#allocation14 + $0x100] sm:$0xff]
    %v3390 = vld [vmem:[#allocation14 + $0x108] sm:$0xff]
    %v3391 = vld [vmem:[#allocation14 + $0x110] sm:$0xff]
    %v3392 = vld [vmem:[#allocation14 + $0x118] sm:$0xff]
    %v3393 = vld [vmem:[#allocation14 + $0x120] sm:$0xff]
    %v3394 = vld [vmem:[#allocation14 + $0x128] sm:$0xff]
    %v3395 = vld [vmem:[#allocation14 + $0x130] sm:$0xff]
    %v3396 = vld [vmem:[#allocation14 + $0x138] sm:$0xff]
    %v3397 = vld [vmem:[#allocation14 + $0x140] sm:$0xff]
    %v3398 = vld [vmem:[#allocation14 + $0x148] sm:$0xff]
    %v3399 = vld [vmem:[#allocation14 + $0x150] sm:$0xff]
    %v3400 = vld [vmem:[#allocation14 + $0x158] sm:$0xff]
    %v3401 = vld [vmem:[#allocation14 + $0x160] sm:$0xff]
    %v3402 = vld [vmem:[#allocation14 + $0x168] sm:$0xff]
    %v3403 = vld [vmem:[#allocation14 + $0x170] sm:$0xff]
    %v3404 = vld [vmem:[#allocation14 + $0x178] sm:$0xff]
    %v3405 = vld [vmem:[#allocation14 + $0x180] sm:$0xff]
    %v3406 = vld [vmem:[#allocation14 + $0x188] sm:$0xff]
    %v3407 = vld [vmem:[#allocation14 + $0x190] sm:$0xff]
    %v3408 = vld [vmem:[#allocation14 + $0x198] sm:$0xff]
    %v3409 = vld [vmem:[#allocation14 + $0x1a0] sm:$0xff]
    %v3410 = vld [vmem:[#allocation14 + $0x1a8] sm:$0xff]
    %v3411 = vld [vmem:[#allocation14 + $0x1b0] sm:$0xff]
    %v3412 = vld [vmem:[#allocation14 + $0x1b8] sm:$0xff]
    %v3413 = vld [vmem:[#allocation14 + $0x1c0] sm:$0xff]
    %v3414 = vld [vmem:[#allocation14 + $0x1c8] sm:$0xff]
    %v3415 = vld [vmem:[#allocation14 + $0x1d0] sm:$0xff]
    %v3416 = vld [vmem:[#allocation14 + $0x1d8] sm:$0xff]
    %v3417 = vld [vmem:[#allocation14 + $0x1e0] sm:$0xff]
    %v3418 = vld [vmem:[#allocation14 + $0x1e8] sm:$0xff]
    %v3419 = vld [vmem:[#allocation14 + $0x1f0] sm:$0xff]
    %v3420 = vld [vmem:[#allocation14 + $0x1f8] sm:$0xff]
    %v3421 = vld [vmem:[#allocation14 + $0x200] sm:$0xff]
    %v3422 = vld [vmem:[#allocation14 + $0x208] sm:$0xff]
    %v3423 = vld [vmem:[#allocation14 + $0x210] sm:$0xff]
    %v3424 = vld [vmem:[#allocation14 + $0x218] sm:$0xff]
    %v3425 = vld [vmem:[#allocation14 + $0x220] sm:$0xff]
    %v3426 = vld [vmem:[#allocation14 + $0x228] sm:$0xff]
    %v3427 = vld [vmem:[#allocation14 + $0x230] sm:$0xff]
    %v3428 = vld [vmem:[#allocation14 + $0x238] sm:$0xff]
    %v3429 = vld [vmem:[#allocation14 + $0x240] sm:$0xff]
    %v3430 = vld [vmem:[#allocation14 + $0x248] sm:$0xff]
    %v3431 = vld [vmem:[#allocation14 + $0x250] sm:$0xff]
    %v3432 = vld [vmem:[#allocation14 + $0x258] sm:$0xff]
    %v3433 = vld [vmem:[#allocation14 + $0x260] sm:$0xff]
    %v3434 = vld [vmem:[#allocation14 + $0x268] sm:$0xff]
    %v3435 = vld [vmem:[#allocation14 + $0x270] sm:$0xff]
    %v3436 = vld [vmem:[#allocation14 + $0x278] sm:$0xff]
    %v3437 = vld [vmem:[#allocation14 + $0x280] sm:$0xff]
    %v3438 = vld [vmem:[#allocation14 + $0x288] sm:$0xff]
    %v3439 = vld [vmem:[#allocation14 + $0x290] sm:$0xff]
    %v3440 = vld [vmem:[#allocation14 + $0x298] sm:$0xff]
    %v3441 = vld [vmem:[#allocation14 + $0x2a0] sm:$0xff]
    %v3442 = vld [vmem:[#allocation14 + $0x2a8] sm:$0xff]
    %v3443 = vld [vmem:[#allocation14 + $0x2b0] sm:$0xff]
    %v3444 = vld [vmem:[#allocation14 + $0x2b8] sm:$0xff]
    %v3445 = vld [vmem:[#allocation14 + $0x2c0] sm:$0xff]
    %v3446 = vld [vmem:[#allocation14 + $0x2c8] sm:$0xff]
    %v3447 = vld [vmem:[#allocation14 + $0x2d0] sm:$0xff]
    %v3448 = vld [vmem:[#allocation14 + $0x2d8] sm:$0xff]
    %v3449 = vld [vmem:[#allocation14 + $0x2e0] sm:$0xff]
    %v3450 = vld [vmem:[#allocation14 + $0x2e8] sm:$0xff]
    %v3451 = vld [vmem:[#allocation14 + $0x2f0] sm:$0xff]
    %v3452 = vld [vmem:[#allocation14 + $0x2f8] sm:$0xff]
    %v3453 = vld [vmem:[#allocation14 + $0x300] sm:$0xff]
    %v3454 = vld [vmem:[#allocation14 + $0x308] sm:$0xff]
    %v3455 = vld [vmem:[#allocation14 + $0x310] sm:$0xff]
    %v3456 = vld [vmem:[#allocation14 + $0x318] sm:$0xff]
    %v3457 = vld [vmem:[#allocation14 + $0x320] sm:$0xff]
    %v3458 = vld [vmem:[#allocation14 + $0x328] sm:$0xff]
    %v3459 = vld [vmem:[#allocation14 + $0x330] sm:$0xff]
    %v3460 = vld [vmem:[#allocation14 + $0x338] sm:$0xff]
    %v3461 = vld [vmem:[#allocation14 + $0x340] sm:$0xff]
    %v3462 = vld [vmem:[#allocation14 + $0x348] sm:$0xff]
    %v3463 = vld [vmem:[#allocation14 + $0x350] sm:$0xff]
    %v3464 = vld [vmem:[#allocation14 + $0x358] sm:$0xff]
    %v3465 = vld [vmem:[#allocation14 + $0x360] sm:$0xff]
    %v3466 = vld [vmem:[#allocation14 + $0x368] sm:$0xff]
    %v3467 = vld [vmem:[#allocation14 + $0x370] sm:$0xff]
    %v3468 = vld [vmem:[#allocation14 + $0x378] sm:$0xff]
    %v3469 = vld [vmem:[#allocation14 + $0x380] sm:$0xff]
    %v3470 = vld [vmem:[#allocation14 + $0x388] sm:$0xff]
    %v3471 = vld [vmem:[#allocation14 + $0x390] sm:$0xff]
    %v3472 = vld [vmem:[#allocation14 + $0x398] sm:$0xff]
    %v3473 = vld [vmem:[#allocation14 + $0x3a0] sm:$0xff]
    %v3474 = vld [vmem:[#allocation14 + $0x3a8] sm:$0xff]
    %v3475 = vld [vmem:[#allocation14 + $0x3b0] sm:$0xff]
    %v3476 = vld [vmem:[#allocation14 + $0x3b8] sm:$0xff]
    %v3477 = vld [vmem:[#allocation14 + $0x3c0] sm:$0xff]
    %v3478 = vld [vmem:[#allocation14 + $0x3c8] sm:$0xff]
    %v3479 = vld [vmem:[#allocation14 + $0x3d0] sm:$0xff]
    %v3480 = vld [vmem:[#allocation14 + $0x3d8] sm:$0xff]
    %v3481 = vld [vmem:[#allocation14 + $0x3e0] sm:$0xff]
    %v3482 = vld [vmem:[#allocation14 + $0x3e8] sm:$0xff]
    %v3483 = vld [vmem:[#allocation14 + $0x3f0] sm:$0xff]
    %v3484 = vld [vmem:[#allocation14 + $0x3f8] sm:$0xff]
    %v3485 = vld [vmem:[#allocation16] sm:$0xf]
    %v3487 = vperm.slane %v3485, 0
    %v3488 = vperm.slane %v3485, 1
    %v3489 = vperm.slane %v3485, 2
    %v3490 = vperm.slane %v3485, 3
    %v3623 = vunpack.c.l.b16 %v3357
    %v3624 = vunpack.c.h.b16 %v3357
    %v3625 = vunpack.c.l.b16 %v3358
    %v3626 = vunpack.c.h.b16 %v3358
    %v3627 = vunpack.c.l.b16 %v3359
    %v3628 = vunpack.c.h.b16 %v3359
    %v3629 = vunpack.c.l.b16 %v3360
    %v3630 = vunpack.c.h.b16 %v3360
    %v3631 = vunpack.c.l.b16 %v3361
    %v3632 = vunpack.c.h.b16 %v3361
    %v3633 = vunpack.c.l.b16 %v3362
    %v3634 = vunpack.c.h.b16 %v3362
    %v3635 = vunpack.c.l.b16 %v3363
    %v3636 = vunpack.c.h.b16 %v3363
    %v3637 = vunpack.c.l.b16 %v3364
    %v3638 = vunpack.c.h.b16 %v3364
    %v3639 = vunpack.c.l.b16 %v3365
    %v3640 = vunpack.c.h.b16 %v3365
    %v3641 = vunpack.c.l.b16 %v3366
    %v3642 = vunpack.c.h.b16 %v3366
    %v3643 = vunpack.c.l.b16 %v3367
    %v3644 = vunpack.c.h.b16 %v3367
    %v3645 = vunpack.c.l.b16 %v3368
    %v3646 = vunpack.c.h.b16 %v3368
    %v3647 = vunpack.c.l.b16 %v3369
    %v3648 = vunpack.c.h.b16 %v3369
    %v3649 = vunpack.c.l.b16 %v3370
    %v3650 = vunpack.c.h.b16 %v3370
    %v3651 = vunpack.c.l.b16 %v3371
    %v3652 = vunpack.c.h.b16 %v3371
    %v3653 = vunpack.c.l.b16 %v3372
    %v3654 = vunpack.c.h.b16 %v3372
    %v3655 = vunpack.c.l.b16 %v3373
    %v3656 = vunpack.c.h.b16 %v3373
    %v3657 = vunpack.c.l.b16 %v3374
    %v3658 = vunpack.c.h.b16 %v3374
    %v3659 = vunpack.c.l.b16 %v3375
    %v3660 = vunpack.c.h.b16 %v3375
    %v3661 = vunpack.c.l.b16 %v3376
    %v3662 = vunpack.c.h.b16 %v3376
    %v3663 = vunpack.c.l.b16 %v3377
    %v3664 = vunpack.c.h.b16 %v3377
    %v3665 = vunpack.c.l.b16 %v3378
    %v3666 = vunpack.c.h.b16 %v3378
    %v3667 = vunpack.c.l.b16 %v3379
    %v3668 = vunpack.c.h.b16 %v3379
    %v3669 = vunpack.c.l.b16 %v3380
    %v3670 = vunpack.c.h.b16 %v3380
    %v3671 = vunpack.c.l.b16 %v3381
    %v3672 = vunpack.c.h.b16 %v3381
    %v3673 = vunpack.c.l.b16 %v3382
    %v3674 = vunpack.c.h.b16 %v3382
    %v3675 = vunpack.c.l.b16 %v3383
    %v3676 = vunpack.c.h.b16 %v3383
    %v3677 = vunpack.c.l.b16 %v3384
    %v3678 = vunpack.c.h.b16 %v3384
    %v3679 = vunpack.c.l.b16 %v3385
    %v3680 = vunpack.c.h.b16 %v3385
    %v3681 = vunpack.c.l.b16 %v3386
    %v3682 = vunpack.c.h.b16 %v3386
    %v3683 = vunpack.c.l.b16 %v3387
    %v3684 = vunpack.c.h.b16 %v3387
    %v3685 = vunpack.c.l.b16 %v3388
    %v3686 = vunpack.c.h.b16 %v3388
    %v3687 = vunpack.c.l.b16 %v3389
    %v3688 = vunpack.c.h.b16 %v3389
    %v3689 = vunpack.c.l.b16 %v3390
    %v3690 = vunpack.c.h.b16 %v3390
    %v3691 = vunpack.c.l.b16 %v3391
    %v3692 = vunpack.c.h.b16 %v3391
    %v3693 = vunpack.c.l.b16 %v3392
    %v3694 = vunpack.c.h.b16 %v3392
    %v3695 = vunpack.c.l.b16 %v3393
    %v3696 = vunpack.c.h.b16 %v3393
    %v3697 = vunpack.c.l.b16 %v3394
    %v3698 = vunpack.c.h.b16 %v3394
    %v3699 = vunpack.c.l.b16 %v3395
    %v3700 = vunpack.c.h.b16 %v3395
    %v3701 = vunpack.c.l.b16 %v3396
    %v3702 = vunpack.c.h.b16 %v3396
    %v3703 = vunpack.c.l.b16 %v3397
    %v3704 = vunpack.c.h.b16 %v3397
    %v3705 = vunpack.c.l.b16 %v3398
    %v3706 = vunpack.c.h.b16 %v3398
    %v3707 = vunpack.c.l.b16 %v3399
    %v3708 = vunpack.c.h.b16 %v3399
    %v3709 = vunpack.c.l.b16 %v3400
    %v3710 = vunpack.c.h.b16 %v3400
    %v3711 = vunpack.c.l.b16 %v3401
    %v3712 = vunpack.c.h.b16 %v3401
    %v3713 = vunpack.c.l.b16 %v3402
    %v3714 = vunpack.c.h.b16 %v3402
    %v3715 = vunpack.c.l.b16 %v3403
    %v3716 = vunpack.c.h.b16 %v3403
    %v3717 = vunpack.c.l.b16 %v3404
    %v3718 = vunpack.c.h.b16 %v3404
    %v3719 = vunpack.c.l.b16 %v3405
    %v3720 = vunpack.c.h.b16 %v3405
    %v3721 = vunpack.c.l.b16 %v3406
    %v3722 = vunpack.c.h.b16 %v3406
    %v3723 = vunpack.c.l.b16 %v3407
    %v3724 = vunpack.c.h.b16 %v3407
    %v3725 = vunpack.c.l.b16 %v3408
    %v3726 = vunpack.c.h.b16 %v3408
    %v3727 = vunpack.c.l.b16 %v3409
    %v3728 = vunpack.c.h.b16 %v3409
    %v3729 = vunpack.c.l.b16 %v3410
    %v3730 = vunpack.c.h.b16 %v3410
    %v3731 = vunpack.c.l.b16 %v3411
    %v3732 = vunpack.c.h.b16 %v3411
    %v3733 = vunpack.c.l.b16 %v3412
    %v3734 = vunpack.c.h.b16 %v3412
    %v3735 = vunpack.c.l.b16 %v3413
    %v3736 = vunpack.c.h.b16 %v3413
    %v3737 = vunpack.c.l.b16 %v3414
    %v3738 = vunpack.c.h.b16 %v3414
    %v3739 = vunpack.c.l.b16 %v3415
    %v3740 = vunpack.c.h.b16 %v3415
    %v3741 = vunpack.c.l.b16 %v3416
    %v3742 = vunpack.c.h.b16 %v3416
    %v3743 = vunpack.c.l.b16 %v3417
    %v3744 = vunpack.c.h.b16 %v3417
    %v3745 = vunpack.c.l.b16 %v3418
    %v3746 = vunpack.c.h.b16 %v3418
    %v3747 = vunpack.c.l.b16 %v3419
    %v3748 = vunpack.c.h.b16 %v3419
    %v3749 = vunpack.c.l.b16 %v3420
    %v3750 = vunpack.c.h.b16 %v3420
    %v3751 = vunpack.c.l.b16 %v3421
    %v3752 = vunpack.c.h.b16 %v3421
    %v3753 = vunpack.c.l.b16 %v3422
    %v3754 = vunpack.c.h.b16 %v3422
    %v3755 = vunpack.c.l.b16 %v3423
    %v3756 = vunpack.c.h.b16 %v3423
    %v3757 = vunpack.c.l.b16 %v3424
    %v3758 = vunpack.c.h.b16 %v3424
    %v3759 = vunpack.c.l.b16 %v3425
    %v3760 = vunpack.c.h.b16 %v3425
    %v3761 = vunpack.c.l.b16 %v3426
    %v3762 = vunpack.c.h.b16 %v3426
    %v3763 = vunpack.c.l.b16 %v3427
    %v3764 = vunpack.c.h.b16 %v3427
    %v3765 = vunpack.c.l.b16 %v3428
    %v3766 = vunpack.c.h.b16 %v3428
    %v3767 = vunpack.c.l.b16 %v3429
    %v3768 = vunpack.c.h.b16 %v3429
    %v3769 = vunpack.c.l.b16 %v3430
    %v3770 = vunpack.c.h.b16 %v3430
    %v3771 = vunpack.c.l.b16 %v3431
    %v3772 = vunpack.c.h.b16 %v3431
    %v3773 = vunpack.c.l.b16 %v3432
    %v3774 = vunpack.c.h.b16 %v3432
    %v3775 = vunpack.c.l.b16 %v3433
    %v3776 = vunpack.c.h.b16 %v3433
    %v3777 = vunpack.c.l.b16 %v3434
    %v3778 = vunpack.c.h.b16 %v3434
    %v3779 = vunpack.c.l.b16 %v3435
    %v3780 = vunpack.c.h.b16 %v3435
    %v3781 = vunpack.c.l.b16 %v3436
    %v3782 = vunpack.c.h.b16 %v3436
    %v3783 = vunpack.c.l.b16 %v3437
    %v3784 = vunpack.c.h.b16 %v3437
    %v3785 = vunpack.c.l.b16 %v3438
    %v3786 = vunpack.c.h.b16 %v3438
    %v3787 = vunpack.c.l.b16 %v3439
    %v3788 = vunpack.c.h.b16 %v3439
    %v3789 = vunpack.c.l.b16 %v3440
    %v3790 = vunpack.c.h.b16 %v3440
    %v3791 = vunpack.c.l.b16 %v3441
    %v3792 = vunpack.c.h.b16 %v3441
    %v3793 = vunpack.c.l.b16 %v3442
    %v3794 = vunpack.c.h.b16 %v3442
    %v3795 = vunpack.c.l.b16 %v3443
    %v3796 = vunpack.c.h.b16 %v3443
    %v3797 = vunpack.c.l.b16 %v3444
    %v3798 = vunpack.c.h.b16 %v3444
    %v3799 = vunpack.c.l.b16 %v3445
    %v3800 = vunpack.c.h.b16 %v3445
    %v3801 = vunpack.c.l.b16 %v3446
    %v3802 = vunpack.c.h.b16 %v3446
    %v3803 = vunpack.c.l.b16 %v3447
    %v3804 = vunpack.c.h.b16 %v3447
    %v3805 = vunpack.c.l.b16 %v3448
    %v3806 = vunpack.c.h.b16 %v3448
    %v3807 = vunpack.c.l.b16 %v3449
    %v3808 = vunpack.c.h.b16 %v3449
    %v3809 = vunpack.c.l.b16 %v3450
    %v3810 = vunpack.c.h.b16 %v3450
    %v3811 = vunpack.c.l.b16 %v3451
    %v3812 = vunpack.c.h.b16 %v3451
    %v3813 = vunpack.c.l.b16 %v3452
    %v3814 = vunpack.c.h.b16 %v3452
    %v3815 = vunpack.c.l.b16 %v3453
    %v3816 = vunpack.c.h.b16 %v3453
    %v3817 = vunpack.c.l.b16 %v3454
    %v3818 = vunpack.c.h.b16 %v3454
    %v3819 = vunpack.c.l.b16 %v3455
    %v3820 = vunpack.c.h.b16 %v3455
    %v3821 = vunpack.c.l.b16 %v3456
    %v3822 = vunpack.c.h.b16 %v3456
    %v3823 = vunpack.c.l.b16 %v3457
    %v3824 = vunpack.c.h.b16 %v3457
    %v3825 = vunpack.c.l.b16 %v3458
    %v3826 = vunpack.c.h.b16 %v3458
    %v3827 = vunpack.c.l.b16 %v3459
    %v3828 = vunpack.c.h.b16 %v3459
    %v3829 = vunpack.c.l.b16 %v3460
    %v3830 = vunpack.c.h.b16 %v3460
    %v3831 = vunpack.c.l.b16 %v3461
    %v3832 = vunpack.c.h.b16 %v3461
    %v3833 = vunpack.c.l.b16 %v3462
    %v3834 = vunpack.c.h.b16 %v3462
    %v3835 = vunpack.c.l.b16 %v3463
    %v3836 = vunpack.c.h.b16 %v3463
    %v3837 = vunpack.c.l.b16 %v3464
    %v3838 = vunpack.c.h.b16 %v3464
    %v3839 = vunpack.c.l.b16 %v3465
    %v3840 = vunpack.c.h.b16 %v3465
    %v3841 = vunpack.c.l.b16 %v3466
    %v3842 = vunpack.c.h.b16 %v3466
    %v3843 = vunpack.c.l.b16 %v3467
    %v3844 = vunpack.c.h.b16 %v3467
    %v3845 = vunpack.c.l.b16 %v3468
    %v3846 = vunpack.c.h.b16 %v3468
    %v3847 = vunpack.c.l.b16 %v3469
    %v3848 = vunpack.c.h.b16 %v3469
    %v3849 = vunpack.c.l.b16 %v3470
    %v3850 = vunpack.c.h.b16 %v3470
    %v3851 = vunpack.c.l.b16 %v3471
    %v3852 = vunpack.c.h.b16 %v3471
    %v3853 = vunpack.c.l.b16 %v3472
    %v3854 = vunpack.c.h.b16 %v3472
    %v3855 = vunpack.c.l.b16 %v3473
    %v3856 = vunpack.c.h.b16 %v3473
    %v3857 = vunpack.c.l.b16 %v3474
    %v3858 = vunpack.c.h.b16 %v3474
    %v3859 = vunpack.c.l.b16 %v3475
    %v3860 = vunpack.c.h.b16 %v3475
    %v3861 = vunpack.c.l.b16 %v3476
    %v3862 = vunpack.c.h.b16 %v3476
    %v3863 = vunpack.c.l.b16 %v3477
    %v3864 = vunpack.c.h.b16 %v3477
    %v3865 = vunpack.c.l.b16 %v3478
    %v3866 = vunpack.c.h.b16 %v3478
    %v3867 = vunpack.c.l.b16 %v3479
    %v3868 = vunpack.c.h.b16 %v3479
    %v3869 = vunpack.c.l.b16 %v3480
    %v3870 = vunpack.c.h.b16 %v3480
    %v3871 = vunpack.c.l.b16 %v3481
    %v3872 = vunpack.c.h.b16 %v3481
    %v3873 = vunpack.c.l.b16 %v3482
    %v3874 = vunpack.c.h.b16 %v3482
    %v3875 = vunpack.c.l.b16 %v3483
    %v3876 = vunpack.c.h.b16 %v3483
    %v3877 = vunpack.c.l.b16 %v3484
    %v3878 = vunpack.c.h.b16 %v3484
    %v3879 = vpack.c.b16 %v3627, %v3623
    %v3880 = vpack.c.b16 %v3628, %v3624
    %v3881 = vpack.c.b16 %v3629, %v3625
    %v3882 = vpack.c.b16 %v3630, %v3626
    %v3883 = vpack.c.b16 %v3635, %v3631
    %v3884 = vpack.c.b16 %v3636, %v3632
    %v3885 = vpack.c.b16 %v3637, %v3633
    %v3886 = vpack.c.b16 %v3638, %v3634
    %v3887 = vpack.c.b16 %v3643, %v3639
    %v3888 = vpack.c.b16 %v3644, %v3640
    %v3889 = vpack.c.b16 %v3645, %v3641
    %v3890 = vpack.c.b16 %v3646, %v3642
    %v3891 = vpack.c.b16 %v3651, %v3647
    %v3892 = vpack.c.b16 %v3652, %v3648
    %v3893 = vpack.c.b16 %v3653, %v3649
    %v3894 = vpack.c.b16 %v3654, %v3650
    %v3895 = vpack.c.b16 %v3659, %v3655
    %v3896 = vpack.c.b16 %v3660, %v3656
    %v3897 = vpack.c.b16 %v3661, %v3657
    %v3898 = vpack.c.b16 %v3662, %v3658
    %v3899 = vpack.c.b16 %v3667, %v3663
    %v3900 = vpack.c.b16 %v3668, %v3664
    %v3901 = vpack.c.b16 %v3669, %v3665
    %v3902 = vpack.c.b16 %v3670, %v3666
    %v3903 = vpack.c.b16 %v3675, %v3671
    %v3904 = vpack.c.b16 %v3676, %v3672
    %v3905 = vpack.c.b16 %v3677, %v3673
    %v3906 = vpack.c.b16 %v3678, %v3674
    %v3907 = vpack.c.b16 %v3683, %v3679
    %v3908 = vpack.c.b16 %v3684, %v3680
    %v3909 = vpack.c.b16 %v3685, %v3681
    %v3910 = vpack.c.b16 %v3686, %v3682
    %v3911 = vpack.c.b16 %v3691, %v3687
    %v3912 = vpack.c.b16 %v3692, %v3688
    %v3913 = vpack.c.b16 %v3693, %v3689
    %v3914 = vpack.c.b16 %v3694, %v3690
    %v3915 = vpack.c.b16 %v3699, %v3695
    %v3916 = vpack.c.b16 %v3700, %v3696
    %v3917 = vpack.c.b16 %v3701, %v3697
    %v3918 = vpack.c.b16 %v3702, %v3698
    %v3919 = vpack.c.b16 %v3707, %v3703
    %v3920 = vpack.c.b16 %v3708, %v3704
    %v3921 = vpack.c.b16 %v3709, %v3705
    %v3922 = vpack.c.b16 %v3710, %v3706
    %v3923 = vpack.c.b16 %v3715, %v3711
    %v3924 = vpack.c.b16 %v3716, %v3712
    %v3925 = vpack.c.b16 %v3717, %v3713
    %v3926 = vpack.c.b16 %v3718, %v3714
    %v3927 = vpack.c.b16 %v3723, %v3719
    %v3928 = vpack.c.b16 %v3724, %v3720
    %v3929 = vpack.c.b16 %v3725, %v3721
    %v3930 = vpack.c.b16 %v3726, %v3722
    %v3931 = vpack.c.b16 %v3731, %v3727
    %v3932 = vpack.c.b16 %v3732, %v3728
    %v3933 = vpack.c.b16 %v3733, %v3729
    %v3934 = vpack.c.b16 %v3734, %v3730
    %v3935 = vpack.c.b16 %v3739, %v3735
    %v3936 = vpack.c.b16 %v3740, %v3736
    %v3937 = vpack.c.b16 %v3741, %v3737
    %v3938 = vpack.c.b16 %v3742, %v3738
    %v3939 = vpack.c.b16 %v3747, %v3743
    %v3940 = vpack.c.b16 %v3748, %v3744
    %v3941 = vpack.c.b16 %v3749, %v3745
    %v3942 = vpack.c.b16 %v3750, %v3746
    %v3943 = vpack.c.b16 %v3755, %v3751
    %v3944 = vpack.c.b16 %v3756, %v3752
    %v3945 = vpack.c.b16 %v3757, %v3753
    %v3946 = vpack.c.b16 %v3758, %v3754
    %v3947 = vpack.c.b16 %v3763, %v3759
    %v3948 = vpack.c.b16 %v3764, %v3760
    %v3949 = vpack.c.b16 %v3765, %v3761
    %v3950 = vpack.c.b16 %v3766, %v3762
    %v3951 = vpack.c.b16 %v3771, %v3767
    %v3952 = vpack.c.b16 %v3772, %v3768
    %v3953 = vpack.c.b16 %v3773, %v3769
    %v3954 = vpack.c.b16 %v3774, %v3770
    %v3955 = vpack.c.b16 %v3779, %v3775
    %v3956 = vpack.c.b16 %v3780, %v3776
    %v3957 = vpack.c.b16 %v3781, %v3777
    %v3958 = vpack.c.b16 %v3782, %v3778
    %v3959 = vpack.c.b16 %v3787, %v3783
    %v3960 = vpack.c.b16 %v3788, %v3784
    %v3961 = vpack.c.b16 %v3789, %v3785
    %v3962 = vpack.c.b16 %v3790, %v3786
    %v3963 = vpack.c.b16 %v3795, %v3791
    %v3964 = vpack.c.b16 %v3796, %v3792
    %v3965 = vpack.c.b16 %v3797, %v3793
    %v3966 = vpack.c.b16 %v3798, %v3794
    %v3967 = vpack.c.b16 %v3803, %v3799
    %v3968 = vpack.c.b16 %v3804, %v3800
    %v3969 = vpack.c.b16 %v3805, %v3801
    %v3970 = vpack.c.b16 %v3806, %v3802
    %v3971 = vpack.c.b16 %v3811, %v3807
    %v3972 = vpack.c.b16 %v3812, %v3808
    %v3973 = vpack.c.b16 %v3813, %v3809
    %v3974 = vpack.c.b16 %v3814, %v3810
    %v3975 = vpack.c.b16 %v3819, %v3815
    %v3976 = vpack.c.b16 %v3820, %v3816
    %v3977 = vpack.c.b16 %v3821, %v3817
    %v3978 = vpack.c.b16 %v3822, %v3818
    %v3979 = vpack.c.b16 %v3827, %v3823
    %v3980 = vpack.c.b16 %v3828, %v3824
    %v3981 = vpack.c.b16 %v3829, %v3825
    %v3982 = vpack.c.b16 %v3830, %v3826
    %v3983 = vpack.c.b16 %v3835, %v3831
    %v3984 = vpack.c.b16 %v3836, %v3832
    %v3985 = vpack.c.b16 %v3837, %v3833
    %v3986 = vpack.c.b16 %v3838, %v3834
    %v3987 = vpack.c.b16 %v3843, %v3839
    %v3988 = vpack.c.b16 %v3844, %v3840
    %v3989 = vpack.c.b16 %v3845, %v3841
    %v3990 = vpack.c.b16 %v3846, %v3842
    %v3991 = vpack.c.b16 %v3851, %v3847
    %v3992 = vpack.c.b16 %v3852, %v3848
    %v3993 = vpack.c.b16 %v3853, %v3849
    %v3994 = vpack.c.b16 %v3854, %v3850
    %v3995 = vpack.c.b16 %v3859, %v3855
    %v3996 = vpack.c.b16 %v3860, %v3856
    %v3997 = vpack.c.b16 %v3861, %v3857
    %v3998 = vpack.c.b16 %v3862, %v3858
    %v3999 = vpack.c.b16 %v3867, %v3863
    %v4000 = vpack.c.b16 %v3868, %v3864
    %v4001 = vpack.c.b16 %v3869, %v3865
    %v4002 = vpack.c.b16 %v3870, %v3866
    %v4003 = vpack.c.b16 %v3875, %v3871
    %v4004 = vpack.c.b16 %v3876, %v3872
    %v4005 = vpack.c.b16 %v3877, %v3873
    %v4006 = vpack.c.b16 %v3878, %v3874
    %4135 = vmatpush.bf16.msra.mxu0 %v3907
    %4136 = vmatpush.bf16.msra.mxu0 %v3903
    %4137 = vmatpush.bf16.msra.mxu0 %v3899
    %4138 = vmatpush.bf16.msra.mxu0 %v3895
    %4139 = vmatpush.bf16.msra.mxu0 %v3891
    %4140 = vmatpush.bf16.msra.mxu0 %v3887
    %4141 = vmatpush.bf16.msra.mxu0 %v3883
    %4142 = vmatpush.bf16.msra.mxu0 %v3879
    %4143 = vmatmul.bf16.gmra.mxu0 %v3353
    %v4144 = vpop.f32.mrf.mxu0
    %v4145 = vadd.f32 %v3487, %v4144
    %v4146 = vpop.f32.mrf.mxu0
    %4147 = vdwg.mxu0
    %4148 = vmatpush.bf16.msra.mxu0 %v3939
    %4149 = vmatpush.bf16.msra.mxu0 %v3935
    %4150 = vmatpush.bf16.msra.mxu0 %v3931
    %4151 = vmatpush.bf16.msra.mxu0 %v3927
    %4152 = vmatpush.bf16.msra.mxu0 %v3923
    %4153 = vmatpush.bf16.msra.mxu0 %v3919
    %4154 = vmatpush.bf16.msra.mxu0 %v3915
    %4155 = vmatpush.bf16.msra.mxu0 %v3911
    %4156 = vmatmul.bf16.gmra.mxu0 %v3354
    %v4157 = vpop.f32.mrf.mxu0
    %v4158 = vadd.f32 %v4145, %v4157
    %v4159 = vpop.f32.mrf.mxu0
    %4160 = vdwg.mxu0
    %4161 = vmatpush.bf16.msra.mxu0 %v3971
    %4162 = vmatpush.bf16.msra.mxu0 %v3967
    %4163 = vmatpush.bf16.msra.mxu0 %v3963
    %4164 = vmatpush.bf16.msra.mxu0 %v3959
    %4165 = vmatpush.bf16.msra.mxu0 %v3955
    %4166 = vmatpush.bf16.msra.mxu0 %v3951
    %4167 = vmatpush.bf16.msra.mxu0 %v3947
    %4168 = vmatpush.bf16.msra.mxu0 %v3943
    %4169 = vmatmul.bf16.gmra.mxu0 %v3355
    %v4170 = vpop.f32.mrf.mxu0
    %v4171 = vadd.f32 %v4158, %v4170
    %v4172 = vpop.f32.mrf.mxu0
    %4173 = vdwg.mxu0
    %4174 = vmatpush.bf16.msra.mxu0 %v4003
    %4175 = vmatpush.bf16.msra.mxu0 %v3999
    %4176 = vmatpush.bf16.msra.mxu0 %v3995
    %4177 = vmatpush.bf16.msra.mxu0 %v3991
    %4178 = vmatpush.bf16.msra.mxu0 %v3987
    %4179 = vmatpush.bf16.msra.mxu0 %v3983
    %4180 = vmatpush.bf16.msra.mxu0 %v3979
    %4181 = vmatpush.bf16.msra.mxu0 %v3975
    %4182 = vmatmul.bf16.gmra.mxu0 %v3356
    %v4183 = vpop.f32.mrf.mxu0
    %v4184 = vadd.f32 %v4171, %v4183
    %v4185 = vpop.f32.mrf.mxu0
    %4186 = vdwg.mxu0
    %4187 = vmatpush.bf16.msra.mxu0 %v3908
    %4188 = vmatpush.bf16.msra.mxu0 %v3904
    %4189 = vmatpush.bf16.msra.mxu0 %v3900
    %4190 = vmatpush.bf16.msra.mxu0 %v3896
    %4191 = vmatpush.bf16.msra.mxu0 %v3892
    %4192 = vmatpush.bf16.msra.mxu0 %v3888
    %4193 = vmatpush.bf16.msra.mxu0 %v3884
    %4194 = vmatpush.bf16.msra.mxu0 %v3880
    %4195 = vmatmul.bf16.gmra.mxu0 %v3353
    %v4196 = vpop.f32.mrf.mxu0
    %v4197 = vadd.f32 %v3488, %v4196
    %v4198 = vpop.f32.mrf.mxu0
    %4199 = vdwg.mxu0
    %4200 = vmatpush.bf16.msra.mxu0 %v3940
    %4201 = vmatpush.bf16.msra.mxu0 %v3936
    %4202 = vmatpush.bf16.msra.mxu0 %v3932
    %4203 = vmatpush.bf16.msra.mxu0 %v3928
    %4204 = vmatpush.bf16.msra.mxu0 %v3924
    %4205 = vmatpush.bf16.msra.mxu0 %v3920
    %4206 = vmatpush.bf16.msra.mxu0 %v3916
    %4207 = vmatpush.bf16.msra.mxu0 %v3912
    %4208 = vmatmul.bf16.gmra.mxu0 %v3354
    %v4209 = vpop.f32.mrf.mxu0
    %v4210 = vadd.f32 %v4197, %v4209
    %v4211 = vpop.f32.mrf.mxu0
    %4212 = vdwg.mxu0
    %4213 = vmatpush.bf16.msra.mxu0 %v3972
    %4214 = vmatpush.bf16.msra.mxu0 %v3968
    %4215 = vmatpush.bf16.msra.mxu0 %v3964
    %4216 = vmatpush.bf16.msra.mxu0 %v3960
    %4217 = vmatpush.bf16.msra.mxu0 %v3956
    %4218 = vmatpush.bf16.msra.mxu0 %v3952
    %4219 = vmatpush.bf16.msra.mxu0 %v3948
    %4220 = vmatpush.bf16.msra.mxu0 %v3944
    %4221 = vmatmul.bf16.gmra.mxu0 %v3355
    %v4222 = vpop.f32.mrf.mxu0
    %v4223 = vadd.f32 %v4210, %v4222
    %v4224 = vpop.f32.mrf.mxu0
    %4225 = vdwg.mxu0
    %4226 = vmatpush.bf16.msra.mxu0 %v4004
    %4227 = vmatpush.bf16.msra.mxu0 %v4000
    %4228 = vmatpush.bf16.msra.mxu0 %v3996
    %4229 = vmatpush.bf16.msra.mxu0 %v3992
    %4230 = vmatpush.bf16.msra.mxu0 %v3988
    %4231 = vmatpush.bf16.msra.mxu0 %v3984
    %4232 = vmatpush.bf16.msra.mxu0 %v3980
    %4233 = vmatpush.bf16.msra.mxu0 %v3976
    %4234 = vmatmul.bf16.gmra.mxu0 %v3356
    %v4235 = vpop.f32.mrf.mxu0
    %v4236 = vadd.f32 %v4223, %v4235
    %v4237 = vpop.f32.mrf.mxu0
    %4238 = vdwg.mxu0
    %4239 = vmatpush.bf16.msra.mxu0 %v3909
    %4240 = vmatpush.bf16.msra.mxu0 %v3905
    %4241 = vmatpush.bf16.msra.mxu0 %v3901
    %4242 = vmatpush.bf16.msra.mxu0 %v3897
    %4243 = vmatpush.bf16.msra.mxu0 %v3893
    %4244 = vmatpush.bf16.msra.mxu0 %v3889
    %4245 = vmatpush.bf16.msra.mxu0 %v3885
    %4246 = vmatpush.bf16.msra.mxu0 %v3881
    %4247 = vmatmul.bf16.gmra.mxu0 %v3353
    %v4248 = vpop.f32.mrf.mxu0
    %v4249 = vadd.f32 %v3489, %v4248
    %v4250 = vpop.f32.mrf.mxu0
    %4251 = vdwg.mxu0
    %4252 = vmatpush.bf16.msra.mxu0 %v3941
    %4253 = vmatpush.bf16.msra.mxu0 %v3937
    %4254 = vmatpush.bf16.msra.mxu0 %v3933
    %4255 = vmatpush.bf16.msra.mxu0 %v3929
    %4256 = vmatpush.bf16.msra.mxu0 %v3925
    %4257 = vmatpush.bf16.msra.mxu0 %v3921
    %4258 = vmatpush.bf16.msra.mxu0 %v3917
    %4259 = vmatpush.bf16.msra.mxu0 %v3913
    %4260 = vmatmul.bf16.gmra.mxu0 %v3354
    %v4261 = vpop.f32.mrf.mxu0
    %v4262 = vadd.f32 %v4249, %v4261
    %v4263 = vpop.f32.mrf.mxu0
    %4264 = vdwg.mxu0
    %4265 = vmatpush.bf16.msra.mxu0 %v3973
    %4266 = vmatpush.bf16.msra.mxu0 %v3969
    %4267 = vmatpush.bf16.msra.mxu0 %v3965
    %4268 = vmatpush.bf16.msra.mxu0 %v3961
    %4269 = vmatpush.bf16.msra.mxu0 %v3957
    %4270 = vmatpush.bf16.msra.mxu0 %v3953
    %4271 = vmatpush.bf16.msra.mxu0 %v3949
    %4272 = vmatpush.bf16.msra.mxu0 %v3945
    %4273 = vmatmul.bf16.gmra.mxu0 %v3355
    %v4274 = vpop.f32.mrf.mxu0
    %v4275 = vadd.f32 %v4262, %v4274
    %v4276 = vpop.f32.mrf.mxu0
    %4277 = vdwg.mxu0
    %4278 = vmatpush.bf16.msra.mxu0 %v4005
    %4279 = vmatpush.bf16.msra.mxu0 %v4001
    %4280 = vmatpush.bf16.msra.mxu0 %v3997
    %4281 = vmatpush.bf16.msra.mxu0 %v3993
    %4282 = vmatpush.bf16.msra.mxu0 %v3989
    %4283 = vmatpush.bf16.msra.mxu0 %v3985
    %4284 = vmatpush.bf16.msra.mxu0 %v3981
    %4285 = vmatpush.bf16.msra.mxu0 %v3977
    %4286 = vmatmul.bf16.gmra.mxu0 %v3356
    %v4287 = vpop.f32.mrf.mxu0
    %v4288 = vadd.f32 %v4275, %v4287
    %v4289 = vpop.f32.mrf.mxu0
    %4290 = vdwg.mxu0
    %4291 = vmatpush.bf16.msra.mxu0 %v3910
    %4292 = vmatpush.bf16.msra.mxu0 %v3906
    %4293 = vmatpush.bf16.msra.mxu0 %v3902
    %4294 = vmatpush.bf16.msra.mxu0 %v3898
    %4295 = vmatpush.bf16.msra.mxu0 %v3894
    %4296 = vmatpush.bf16.msra.mxu0 %v3890
    %4297 = vmatpush.bf16.msra.mxu0 %v3886
    %4298 = vmatpush.bf16.msra.mxu0 %v3882
    %4299 = vmatmul.bf16.gmra.mxu0 %v3353
    %v4300 = vpop.f32.mrf.mxu0
    %v4301 = vadd.f32 %v3490, %v4300
    %v4302 = vpop.f32.mrf.mxu0
    %4303 = vdwg.mxu0
    %4304 = vmatpush.bf16.msra.mxu0 %v3942
    %4305 = vmatpush.bf16.msra.mxu0 %v3938
    %4306 = vmatpush.bf16.msra.mxu0 %v3934
    %4307 = vmatpush.bf16.msra.mxu0 %v3930
    %4308 = vmatpush.bf16.msra.mxu0 %v3926
    %4309 = vmatpush.bf16.msra.mxu0 %v3922
    %4310 = vmatpush.bf16.msra.mxu0 %v3918
    %4311 = vmatpush.bf16.msra.mxu0 %v3914
    %4312 = vmatmul.bf16.gmra.mxu0 %v3354
    %v4313 = vpop.f32.mrf.mxu0
    %v4314 = vadd.f32 %v4301, %v4313
    %v4315 = vpop.f32.mrf.mxu0
    %4316 = vdwg.mxu0
    %4317 = vmatpush.bf16.msra.mxu0 %v3974
    %4318 = vmatpush.bf16.msra.mxu0 %v3970
    %4319 = vmatpush.bf16.msra.mxu0 %v3966
    %4320 = vmatpush.bf16.msra.mxu0 %v3962
    %4321 = vmatpush.bf16.msra.mxu0 %v3958
    %4322 = vmatpush.bf16.msra.mxu0 %v3954
    %4323 = vmatpush.bf16.msra.mxu0 %v3950
    %4324 = vmatpush.bf16.msra.mxu0 %v3946
    %4325 = vmatmul.bf16.gmra.mxu0 %v3355
    %v4326 = vpop.f32.mrf.mxu0
    %v4327 = vadd.f32 %v4314, %v4326
    %v4328 = vpop.f32.mrf.mxu0
    %4329 = vdwg.mxu0
    %4330 = vmatpush.bf16.msra.mxu0 %v4006
    %4331 = vmatpush.bf16.msra.mxu0 %v4002
    %4332 = vmatpush.bf16.msra.mxu0 %v3998
    %4333 = vmatpush.bf16.msra.mxu0 %v3994
    %4334 = vmatpush.bf16.msra.mxu0 %v3990
    %4335 = vmatpush.bf16.msra.mxu0 %v3986
    %4336 = vmatpush.bf16.msra.mxu0 %v3982
    %4337 = vmatpush.bf16.msra.mxu0 %v3978
    %4338 = vmatmul.bf16.gmra.mxu0 %v3356
    %v4339 = vpop.f32.mrf.mxu0
    %v4340 = vadd.f32 %v4327, %v4339
    %v4341 = vpop.f32.mrf.mxu0
    %4342 = vdwg.mxu0
    %v4343 = vmax.f32 %v4184, 0.0
    %v4344 = vmax.f32 %v4236, 0.0
    %v4345 = vmax.f32 %v4288, 0.0
    %v4346 = vmax.f32 %v4340, 0.0
    %4347 = vst [vmem:[#allocation17] sm:$0xff] %v4343
    %4348 = vst [vmem:[#allocation17 + $0x8] sm:$0xff] %v4344
    %4349 = vst [vmem:[#allocation17 + $0x10] sm:$0xff] %v4345
    %4350 = vst [vmem:[#allocation17 + $0x18] sm:$0xff] %v4346
    // Predicated region
    $region74: #{language_module_forward.1} parent=1 // pred_check
      _
    $region75: #{language_module_forward.1} parent=1 // pred_check_branch
      %4352 = sbr.rel (0) target = $region77
    $region76: #{language_module_forward.1} parent=1 // pred_region
      %4354 = vsyncadd [#allocation4], 0
      %s4356 = sshll.u32 [#allocation17], 4
      %s4357 = int_to_ptr.vmem [resolvable:$true] %s4356
      %s4358 = sshll.u32 %s9, 4
      %s4359 = int_to_ptr.hbm [resolvable:$true] %s4358
      %4361 = dma.vmem_to_hbm [thread:$0]  %s4357, 512, %s4359, [#allocation4]
    $region77: #{language_module_forward.1} parent=1 // pred_fallthru
      _
    // Predicated region
    $region78: #{language_module_forward.1} parent=1 // pred_check
      _
    $region79: #{language_module_forward.1} parent=1 // pred_check_branch
      %4363 = sbr.rel (0) target = $region81
    $region80: #{language_module_forward.1} parent=1 // pred_region
      %4365 = dma.done [#allocation4], 512
    $region81: #{language_module_forward.1} parent=1 // pred_fallthru
      _
    %4366 = vsyncpa [#allocation3], 1
    %4367 = vsyncpa [#allocation6], 1
    %4368 = vsyncpa [#allocation9], 1
    %4369 = vsyncpa [#allocation12], 1
    %4370 = vsyncpa [#allocation15], 1
    %4371 = vsyncpa [#allocation4], 1

</llo_original>
